<compile_context>
chip_gen: v5e
topology: v5e:2x2
jax: 0.10.0
libtpu: 0.0.40
codegen_flags: <defaults>
</compile_context>

<pallas_src>
import jax
import jax.numpy as jnp
from jax.experimental import pallas as pl
from jax.experimental.pallas import tpu as pltpu

CHANNELS = 4
FEATURE_MAP_SIZE = 8
BN_EPS = 1e-5
LEAKY_SLOPE = 0.2
KH = KW = 4  # every conv in the module is 4x4


# ---------------------------------------------------------------------------
# In-kernel helpers
# ---------------------------------------------------------------------------
def _leaky(x):
    return jnp.where(x >= 0.0, x, LEAKY_SLOPE * x)


def _sigmoid(x):
    # Numerically stable sigmoid; exp + approximate reciprocal both use the EUP slot.
    ex = jnp.exp(-jnp.abs(x))
    return jnp.where(x >= 0.0, 1.0, ex) * pl.reciprocal(1.0 + ex, approx=True)


# ---------------------------------------------------------------------------
# Fused conv-as-matmul kernel:  out(C_out, TM) = W(C_out, K) @ cols(K, TM)
#   optional prologue: previous layer's hoisted BN (scale/shift per K row) + LeakyReLU
#   optional epilogue: LeakyReLU or Sigmoid
# ---------------------------------------------------------------------------
def _make_conv_kernel(with_prologue: bool, epilogue: str):
    def kernel(*refs):
        if with_prologue:
            w_ref, x_ref, sc_ref, sh_ref, o_ref = refs
            x = x_ref[...] * sc_ref[...] + sh_ref[...]   # lazy BN of previous layer
            x = _leaky(x)
        else:
            w_ref, x_ref, o_ref = refs
            x = x_ref[...]
        acc = jnp.dot(w_ref[...], x, preferred_element_type=jnp.float32)
        if epilogue == "leaky":
            acc = _leaky(acc)
        elif epilogue == "sigmoid":
            acc = _sigmoid(acc)
        o_ref[...] = acc.astype(o_ref.dtype)

    return kernel


def _pick_tm(m):
    # Largest lane-dense tile that divides M; tiny M falls back to one full block.
    for t in (1024, 512, 256, 128):
        if m % t == 0:
            return t
    return m


def conv_matmul(w_mat, cols, *, prologue=None, epilogue="none"):
    """Lane-dense fused conv matmul, tiled over M with auto double-buffering."""
    c_out, k = w_mat.shape
    k2, m = cols.shape
    assert k == k2
    tm = _pick_tm(m)

    in_specs = [pl.BlockSpec((c_out, k), lambda i: (0, 0)),
                pl.BlockSpec((k, tm), lambda i: (0, i))]
    args = [w_mat, cols]
    if prologue is not None:
        sc, sh = prologue
        in_specs += [pl.BlockSpec((k, 1), lambda i: (0, 0)),
                     pl.BlockSpec((k, 1), lambda i: (0, 0))]
        args += [sc, sh]

    return pl.pallas_call(
        _make_conv_kernel(prologue is not None, epilogue),
        out_shape=jax.ShapeDtypeStruct((c_out, m), jnp.float32),
        grid=(m // tm,),
        in_specs=in_specs,
        out_specs=pl.BlockSpec((c_out, tm), lambda i: (0, i)),
        compiler_params=pltpu.CompilerParams(
            dimension_semantics=("parallel",)),  # independent M tiles -> v7x megacore
    )(*args)


# ---------------------------------------------------------------------------
# Fully fused pretrain head: BN4+leaky prologue -> self.conv -> BN -> leaky -> fc -> sigmoid
# ---------------------------------------------------------------------------
def _pretrain_head_kernel(wc_ref, x_ref, sc_ref, sh_ref, g_ref, b_ref,
                          fw_ref, fb_ref, o_ref):
    # Prologue: BN4 (hoisted stats) + LeakyReLU applied to the im2col'ed raw conv4 map.
    x = _leaky(x_ref[...] * sc_ref[...] + sh_ref[...])
    # self.conv: Conv2d(fms*8, fms, 4, 1, 0)  ->  (fms, N)
    h = jnp.dot(wc_ref[...], x, preferred_element_type=jnp.float32)
    # BatchNorm2d(fms) on an (N, fms, 1, 1) map == stats over the batch axis.
    # The whole batch (M == N) lives in this single block, so batch stats are exact.
    mean = jnp.mean(h, axis=1, keepdims=True)
    var = jnp.mean((h - mean) ** 2, axis=1, keepdims=True)
    h = (h - mean) * jax.lax.rsqrt(var + BN_EPS) * g_ref[...] + b_ref[...]
    h = _leaky(h)
    # fc_class: Linear(fms, 4) + Sigmoid, computed transposed: (4, fms) @ (fms, N)
    logits = jnp.dot(fw_ref[...], h, preferred_element_type=jnp.float32) + fb_ref[...]
    o_ref[...] = _sigmoid(logits)


def _pretrain_head(wc_mat, cols, sc, sh, g, b, fc_w, fc_b):
    c_out, k = wc_mat.shape
    _, m = cols.shape
    return pl.pallas_call(
        _pretrain_head_kernel,
        out_shape=jax.ShapeDtypeStruct((4, m), jnp.float32),
        grid=(1,),
        in_specs=[
            pl.BlockSpec((c_out, k), lambda i: (0, 0)),
            pl.BlockSpec((k, m), lambda i: (0, 0)),
            pl.BlockSpec((k, 1), lambda i: (0, 0)),
            pl.BlockSpec((k, 1), lambda i: (0, 0)),
            pl.BlockSpec((c_out, 1), lambda i: (0, 0)),
            pl.BlockSpec((c_out, 1), lambda i: (0, 0)),
            pl.BlockSpec((4, c_out), lambda i: (0, 0)),
            pl.BlockSpec((4, 1), lambda i: (0, 0)),
        ],
        out_specs=pl.BlockSpec((4, m), lambda i: (0, 0)),
        compiler_params=pltpu.CompilerParams(dimension_semantics=("arbitrary",)),
    )(wc_mat, cols, sc, sh, g.reshape(-1, 1), b.reshape(-1, 1),
      fc_w, fc_b.reshape(-1, 1))


# ---------------------------------------------------------------------------
# Plain-JAX glue: channel-major im2col and hoisted BatchNorm statistics
# ---------------------------------------------------------------------------
def _im2col_cnhw(x, stride, pad, pad_value=None):
    """im2col on a channel-major (C, N, H, W) map for the 4x4 convs.

    Returns cols (K = C*16, M = N*Ho*Wo); the (C_out, M) matmul result reshapes
    straight back to channel-major (C_out, N, Ho, Wo) with no transpose.
    pad_value: optional per-channel (C,) fill, used when the map is still in the
    raw (pre-BN/activation) domain so that the *activated* border is exactly zero.
    # TODO(synk): cols is still materialized in HBM by XLA; extracting patches
    # in-kernel from a VMEM-resident input tile would further cut layer-1/2 traffic.
    """
    c, n, h, w = x.shape
    if pad > 0:
        hp, wp = h + 2 * pad, w + 2 * pad
        if pad_value is None:
            xp = jnp.pad(x, ((0, 0), (0, 0), (pad, pad), (pad, pad)))
        else:
            xp = jnp.broadcast_to(pad_value.reshape(c, 1, 1, 1), (c, n, hp, wp))
            xp = xp.at[:, :, pad:pad + h, pad:pad + w].set(x)
    else:
        xp = x
    ho = (h + 2 * pad - KH) // stride + 1
    wo = (w + 2 * pad - KW) // stride + 1
    patches = [xp[:, :, ky:ky + stride * ho:stride, kx:kx + stride * wo:stride]
               for ky in range(KH) for kx in range(KW)]
    cols = jnp.stack(patches, axis=1)                 # (C, KH*KW, N, Ho, Wo)
    return cols.reshape(c * KH * KW, n * ho * wo), ho, wo


def _bn_fold(y_raw, gamma, beta):
    """Hoisted training-mode BatchNorm stats on a raw (C_out, M=N*H*W) conv map.

    Returns per-channel (scale, shift) with BN(y) = y*scale + shift, plus the
    per-channel padding value that maps to exactly 0 after scale/shift + LeakyReLU
    (preserving zero-padding of the activated map when BN is applied lazily inside
    the next kernel's prologue).
    """
    mean = jnp.mean(y_raw, axis=1)
    var = jnp.mean(jnp.square(y_raw - mean[:, None]), axis=1)   # biased, as PyTorch
    scale = gamma * jax.lax.rsqrt(var + BN_EPS)
    shift = beta - mean * scale
    safe = jnp.where(jnp.abs(scale) < 1e-12, 1e-12, scale)
    pad_value = -shift / safe
    return scale, shift, pad_value


def _per_row(v):
    # Per-output-channel vector -> per-K-row (K = C*KH*KW) column vector.
    return jnp.repeat(v, KH * KW).reshape(-1, 1)


# ---------------------------------------------------------------------------
# Parameter init (deterministic, synthetic — shapes match the PyTorch __init__)
# ---------------------------------------------------------------------------
def init_params(key):
    fms, c = FEATURE_MAP_SIZE, CHANNELS
    ks = jax.random.split(key, 12)

    def conv_w(k, o, i):
        return (0.02 * jax.random.normal(k, (o, i, KH, KW))).astype(jnp.float32)

    def bn(k, o):
        kg, kb = jax.random.split(k)
        g = (1.0 + 0.1 * jax.random.normal(kg, (o,))).astype(jnp.float32)
        b = (0.1 * jax.random.normal(kb, (o,))).astype(jnp.float32)
        return g, b

    p = {}
    p["w1"] = conv_w(ks[0], fms, c)
    p["w2"] = conv_w(ks[1], fms * 2, fms)
    p["bn2_g"], p["bn2_b"] = bn(ks[2], fms * 2)
    p["w3"] = conv_w(ks[3], fms * 4, fms * 2)
    p["bn3_g"], p["bn3_b"] = bn(ks[4], fms * 4)
    p["w4"] = conv_w(ks[5], fms * 8, fms * 4)
    p["bn4_g"], p["bn4_b"] = bn(ks[6], fms * 8)
    p["w_rf"] = conv_w(ks[7], 1, fms * 8)            # real_fake head
    p["w_conv"] = conv_w(ks[8], fms, fms * 8)        # pretrain conv head
    p["bnc_g"], p["bnc_b"] = bn(ks[9], fms)
    p["fc_w"] = (0.1 * jax.random.normal(ks[10], (4, fms))).astype(jnp.float32)
    p["fc_b"] = (0.1 * jax.random.normal(ks[11], (4,))).astype(jnp.float32)
    return p


# ---------------------------------------------------------------------------
# Forward pass
# ---------------------------------------------------------------------------
def discriminator_forward(params, x_nchw, mode="train"):
    p = params
    fms = FEATURE_MAP_SIZE
    n = x_nchw.shape[0]

    # Single transpose at the boundary; everything after stays channel-major.
    x = jnp.transpose(x_nchw, (1, 0, 2, 3))                     # (C, N, H, W)

    # --- self.main ---
    # Conv1 (no BN): LeakyReLU fused as the kernel epilogue.
    # TODO(synk): nn.Dropout(0.2) randomness not reproduced (identity / eval semantics).
    cols, ho, wo = _im2col_cnhw(x, 2, 1)
    a1 = conv_matmul(p["w1"].reshape(fms, -1), cols, epilogue="leaky")
    a1 = a1.reshape(fms, n, ho, wo)

    # Conv2: kernel emits the raw conv map; BN batch stats are hoisted (tiny jnp
    # reduce) and BN+LeakyReLU is folded into the NEXT kernel's prologue.
    # TODO(synk): BatchNorm running statistics are not tracked (stateless forward).
    cols, ho, wo = _im2col_cnhw(a1, 2, 1)
    y2 = conv_matmul(p["w2"].reshape(fms * 2, -1), cols)
    sc2, sh2, pad2 = _bn_fold(y2, p["bn2_g"], p["bn2_b"])
    y2 = y2.reshape(fms * 2, n, ho, wo)

    # Conv3 (consumes BN2+LeakyReLU of y2, applied in-kernel).  Dropout = identity.
    cols, ho, wo = _im2col_cnhw(y2, 2, 1, pad_value=pad2)
    y3 = conv_matmul(p["w3"].reshape(fms * 4, -1), cols,
                     prologue=(_per_row(sc2), _per_row(sh2)))
    sc3, sh3, pad3 = _bn_fold(y3, p["bn3_g"], p["bn3_b"])
    y3 = y3.reshape(fms * 4, n, ho, wo)

    # Conv4.
    cols, ho, wo = _im2col_cnhw(y3, 2, 1, pad_value=pad3)
    y4 = conv_matmul(p["w4"].reshape(fms * 8, -1), cols,
                     prologue=(_per_row(sc3), _per_row(sh3)))
    sc4, sh4, _ = _bn_fold(y4, p["bn4_g"], p["bn4_b"])
    y4 = y4.reshape(fms * 8, n, ho, wo)

    # Heads: valid (pad=0) 4x4 conv on the 4x4 map -> cols (K=fms*8*16, M=N).
    cols, _, _ = _im2col_cnhw(y4, 1, 0)
    sc4r, sh4r = _per_row(sc4), _per_row(sh4)

    if mode == "train":
        # self.real_fake: Conv2d(fms*8, 1, 4, 1, 0) + Sigmoid, fused with the
        # BN4+LeakyReLU prologue into one kernel.
        out = conv_matmul(p["w_rf"].reshape(1, -1), cols,
                          prologue=(sc4r, sh4r), epilogue="sigmoid")   # (1, N)
        return out.T.reshape(n, 1, 1, 1)

    if mode == "pretrain":
        # self.conv + BN + LeakyReLU + flatten + fc_class + Sigmoid in ONE kernel.
        out = _pretrain_head(p["w_conv"].reshape(fms, -1), cols, sc4r, sh4r,
                             p["bnc_g"], p["bnc_b"], p["fc_w"], p["fc_b"])  # (4, N)
        return out.T

    raise ValueError(mode)


# ---------------------------------------------------------------------------
# Pure-JAX reference (lax.conv) for a correctness cross-check
# ---------------------------------------------------------------------------
def _reference_forward(params, x, mode):
    p = params

    def conv(v, w, stride, pad):
        return jax.lax.conv_general_dilated(
            v, w, window_strides=(stride, stride),
            padding=[(pad, pad), (pad, pad)],
            dimension_numbers=("NCHW", "OIHW", "NCHW"),
            precision=jax.lax.Precision.HIGHEST)

    def bn(v, g, b):
        mean = jnp.mean(v, axis=(0, 2, 3), keepdims=True)
        var = jnp.mean(jnp.square(v - mean), axis=(0, 2, 3), keepdims=True)
        vh = (v - mean) * jax.lax.rsqrt(var + BN_EPS)
        return vh * g.reshape(1, -1, 1, 1) + b.reshape(1, -1, 1, 1)

    def leaky(v):
        return jnp.where(v >= 0.0, v, LEAKY_SLOPE * v)

    h = leaky(conv(x, p["w1"], 2, 1))
    h = leaky(bn(conv(h, p["w2"], 2, 1), p["bn2_g"], p["bn2_b"]))
    h = leaky(bn(conv(h, p["w3"], 2, 1), p["bn3_g"], p["bn3_b"]))
    h = leaky(bn(conv(h, p["w4"], 2, 1), p["bn4_g"], p["bn4_b"]))
    if mode == "train":
        return jax.nn.sigmoid(conv(h, p["w_rf"], 1, 0))
    h = leaky(bn(conv(h, p["w_conv"], 1, 0), p["bnc_g"], p["bnc_b"]))
    h = h.reshape(h.shape[0], -1)
    return jax.nn.sigmoid(h @ p["fc_w"].T + p["fc_b"])


# ---------------------------------------------------------------------------
if __name__ == "__main__":
    key = jax.random.PRNGKey(0)
    k_x, k_p = jax.random.split(key)
    # DCGAN geometry: 64x64 input so the four stride-2 convs + final 4x4 valid
    # conv reach 1x1 (as the module requires).  Small batch / channel counts.
    x = jax.random.normal(k_x, (2, CHANNELS, 64, 64), dtype=jnp.float32)
    params = init_params(k_p)

    fwd = jax.jit(discriminator_forward, static_argnames=("mode",))
    out_train = fwd(params, x, mode="train")      # (2, 1, 1, 1)
    out_pre = fwd(params, x, mode="pretrain")     # (2, 4)
    jax.block_until_ready((out_train, out_pre))

    assert out_train.shape == (2, 1, 1, 1), out_train.shape
    assert out_pre.shape == (2, 4), out_pre.shape
    assert bool(jnp.all(jnp.isfinite(out_train)))
    assert bool(jnp.all(jnp.isfinite(out_pre)))

    # Cross-check against the plain-JAX reference.  Tolerance covers MXU
    # pass-precision differences and the approximate reciprocal in the sigmoid
    # epilogue; structural errors would be orders of magnitude larger.
    ref_train = _reference_forward(params, x, "train")
    ref_pre = _reference_forward(params, x, "pretrain")
    assert bool(jnp.allclose(out_train, ref_train, atol=2e-2, rtol=2e-2))
    assert bool(jnp.allclose(out_pre, ref_pre, atol=2e-2, rtol=2e-2))

    print("KERNEL_OK")
</pallas_src>

<mosaic_0001>
module attributes {stable_mosaic.version = 11 : i64} {
  func.func @kernel(%arg0: i32, %arg1: memref<8x64xf32, #tpu.memory_space<vmem>>, %arg2: memref<64x1024xf32, #tpu.memory_space<vmem>>, %arg3: memref<8x1024xf32, #tpu.memory_space<vmem>>) attributes {dimension_semantics = [#tpu.dimension_semantics<parallel>], iteration_bounds = array<i64: 2>, scalar_prefetch = 0 : i64, scratch_operands = 0 : i64, tpu.core_type = #tpu.core_type<tc>, window_params = [{pipeline_mode = #tpu.pipeline_mode<synchronous>, transform_indices = @transform_0, window_bounds = array<i64: 8, 64>}, {transform_indices = @transform_1, window_bounds = array<i64: 64, 1024>}, {transform_indices = @transform_2, window_bounds = array<i64: 8, 1024>}]} {
    %c0 = arith.constant 0 : index
    %c0_0 = arith.constant 0 : index
    %0 = vector.load %arg2[%c0, %c0_0] : memref<64x1024xf32, #tpu.memory_space<vmem>>, vector<64x1024xf32>
    %c0_1 = arith.constant 0 : index
    %c0_2 = arith.constant 0 : index
    %1 = vector.load %arg1[%c0_1, %c0_2] : memref<8x64xf32, #tpu.memory_space<vmem>>, vector<8x64xf32>
    %cst = arith.constant dense<0.000000e+00> : vector<8x1024xf32>
    %2 = tpu.matmul %1, %0, %cst {dimension_numbers = #tpu.dot_dimension_numbers<[1], [0], [0], [1], [0, 0, 1, 1], [], []>} : vector<8x64xf32>, vector<64x1024xf32>, vector<8x1024xf32> -> vector<8x1024xf32>
    %cst_3 = arith.constant 0.000000e+00 : f32
    %3 = vector.broadcast %cst_3 : f32 to vector<8x1024xf32>
    %4 = arith.cmpf oge, %2, %3 : vector<8x1024xf32>
    %cst_4 = arith.constant 2.000000e-01 : f32
    %5 = vector.broadcast %cst_4 : f32 to vector<8x1024xf32>
    %6 = arith.mulf %5, %2 : vector<8x1024xf32>
    %7 = arith.select %4, %2, %6 : vector<8x1024xi1>, vector<8x1024xf32>
    %c0_5 = arith.constant 0 : index
    %c0_6 = arith.constant 0 : index
    %8 = vector.load %arg3[%c0_5, %c0_6] : memref<8x1024xf32, #tpu.memory_space<vmem>>, vector<8x1024xf32>
    tpu.vector_store %arg3[%c0_5, %c0_6], %7 {strides = array<i32>} : memref<8x1024xf32, #tpu.memory_space<vmem>>, vector<8x1024xf32>,
    return
  }
  func.func @transform_0(%arg0: i32) -> (i32, i32) {
    %c0_i32 = arith.constant 0 : i32
    %c0_i32_0 = arith.constant 0 : i32
    %c0_i32_1 = arith.constant 0 : i32
    return %c0_i32, %c0_i32_0 : i32, i32
  }
  func.func @transform_1(%arg0: i32) -> (i32, i32) {
    %c0_i32 = arith.constant 0 : i32
    %c0_i32_0 = arith.constant 0 : i32
    return %c0_i32, %arg0 : i32, i32
  }
  func.func @transform_2(%arg0: i32) -> (i32, i32) {
    %c0_i32 = arith.constant 0 : i32
    %c0_i32_0 = arith.constant 0 : i32
    return %c0_i32, %arg0 : i32, i32
  }
}

module attributes {stable_mosaic.version = 11 : i64} {
  func.func @kernel(%arg0: i32, %arg1: memref<16x128xf32, #tpu.memory_space<vmem>>, %arg2: memref<128x512xf32, #tpu.memory_space<vmem>>, %arg3: memref<16x512xf32, #tpu.memory_space<vmem>>) attributes {dimension_semantics = [#tpu.dimension_semantics<parallel>], iteration_bounds = array<i64: 1>, scalar_prefetch = 0 : i64, scratch_operands = 0 : i64, tpu.core_type = #tpu.core_type<tc>, window_params = [{pipeline_mode = #tpu.pipeline_mode<synchronous>, transform_indices = @transform_0, window_bounds = array<i64: 16, 128>}, {transform_indices = @transform_1, window_bounds = array<i64: 128, 512>}, {transform_indices = @transform_2, window_bounds = array<i64: 16, 512>}]} {
    %c0 = arith.constant 0 : index
    %c0_0 = arith.constant 0 : index
    %0 = vector.load %arg2[%c0, %c0_0] : memref<128x512xf32, #tpu.memory_space<vmem>>, vector<128x512xf32>
    %c0_1 = arith.constant 0 : index
    %c0_2 = arith.constant 0 : index
    %1 = vector.load %arg1[%c0_1, %c0_2] : memref<16x128xf32, #tpu.memory_space<vmem>>, vector<16x128xf32>
    %cst = arith.constant dense<0.000000e+00> : vector<16x512xf32>
    %2 = tpu.matmul %1, %0, %cst {dimension_numbers = #tpu.dot_dimension_numbers<[1], [0], [0], [1], [0, 0, 1, 1], [], []>} : vector<16x128xf32>, vector<128x512xf32>, vector<16x512xf32> -> vector<16x512xf32>
    %c0_3 = arith.constant 0 : index
    %c0_4 = arith.constant 0 : index
    %3 = vector.load %arg3[%c0_3, %c0_4] : memref<16x512xf32, #tpu.memory_space<vmem>>, vector<16x512xf32>
    tpu.vector_store %arg3[%c0_3, %c0_4], %2 {strides = array<i32>} : memref<16x512xf32, #tpu.memory_space<vmem>>, vector<16x512xf32>,
    return
  }
  func.func @transform_0(%arg0: i32) -> (i32, i32) {
    %c0_i32 = arith.constant 0 : i32
    %c0_i32_0 = arith.constant 0 : i32
    %c0_i32_1 = arith.constant 0 : i32
    return %c0_i32, %c0_i32_0 : i32, i32
  }
  func.func @transform_1(%arg0: i32) -> (i32, i32) {
    %c0_i32 = arith.constant 0 : i32
    %c0_i32_0 = arith.constant 0 : i32
    return %c0_i32, %arg0 : i32, i32
  }
  func.func @transform_2(%arg0: i32) -> (i32, i32) {
    %c0_i32 = arith.constant 0 : i32
    %c0_i32_0 = arith.constant 0 : i32
    return %c0_i32, %arg0 : i32, i32
  }
}

module attributes {stable_mosaic.version = 11 : i64} {
  func.func @kernel(%arg0: i32, %arg1: memref<32x256xf32, #tpu.memory_space<vmem>>, %arg2: memref<256x128xf32, #tpu.memory_space<vmem>>, %arg3: memref<256x1xf32, #tpu.memory_space<vmem>>, %arg4: memref<256x1xf32, #tpu.memory_space<vmem>>, %arg5: memref<32x128xf32, #tpu.memory_space<vmem>>) attributes {dimension_semantics = [#tpu.dimension_semantics<parallel>], iteration_bounds = array<i64: 1>, scalar_prefetch = 0 : i64, scratch_operands = 0 : i64, tpu.core_type = #tpu.core_type<tc>, window_params = [{pipeline_mode = #tpu.pipeline_mode<synchronous>, transform_indices = @transform_0, window_bounds = array<i64: 32, 256>}, {transform_indices = @transform_1, window_bounds = array<i64: 256, 128>}, {pipeline_mode = #tpu.pipeline_mode<synchronous>, transform_indices = @transform_2, window_bounds = array<i64: 256, 1>}, {pipeline_mode = #tpu.pipeline_mode<synchronous>, transform_indices = @transform_3, window_bounds = array<i64: 256, 1>}, {transform_indices = @transform_4, window_bounds = array<i64: 32, 128>}]} {
    %c0 = arith.constant 0 : index
    %c0_0 = arith.constant 0 : index
    %0 = vector.load %arg2[%c0, %c0_0] : memref<256x128xf32, #tpu.memory_space<vmem>>, vector<256x128xf32>
    %c0_1 = arith.constant 0 : index
    %c0_2 = arith.constant 0 : index
    %1 = vector.load %arg3[%c0_1, %c0_2] : memref<256x1xf32, #tpu.memory_space<vmem>>, vector<256x1xf32>
    %2 = vector.broadcast %1 : vector<256x1xf32> to vector<256x128xf32>
    %3 = arith.mulf %0, %2 : vector<256x128xf32>
    %c0_3 = arith.constant 0 : index
    %c0_4 = arith.constant 0 : index
    %4 = vector.load %arg4[%c0_3, %c0_4] : memref<256x1xf32, #tpu.memory_space<vmem>>, vector<256x1xf32>
    %5 = vector.broadcast %4 : vector<256x1xf32> to vector<256x128xf32>
    %6 = arith.addf %3, %5 : vector<256x128xf32>
    %cst = arith.constant 0.000000e+00 : f32
    %7 = vector.broadcast %cst : f32 to vector<256x128xf32>
    %8 = arith.cmpf oge, %6, %7 : vector<256x128xf32>
    %cst_5 = arith.constant 2.000000e-01 : f32
    %9 = vector.broadcast %cst_5 : f32 to vector<256x128xf32>
    %10 = arith.mulf %9, %6 : vector<256x128xf32>
    %11 = arith.select %8, %6, %10 : vector<256x128xi1>, vector<256x128xf32>
    %c0_6 = arith.constant 0 : index
    %c0_7 = arith.constant 0 : index
    %12 = vector.load %arg1[%c0_6, %c0_7] : memref<32x256xf32, #tpu.memory_space<vmem>>, vector<32x256xf32>
    %cst_8 = arith.constant dense<0.000000e+00> : vector<32x128xf32>
    %13 = tpu.matmul %12, %11, %cst_8 {dimension_numbers = #tpu.dot_dimension_numbers<[1], [0], [0], [1], [0, 0, 1, 1], [], []>} : vector<32x256xf32>, vector<256x128xf32>, vector<32x128xf32> -> vector<32x128xf32>
    %c0_9 = arith.constant 0 : index
    %c0_10 = arith.constant 0 : index
    %14 = vector.load %arg5[%c0_9, %c0_10] : memref<32x128xf32, #tpu.memory_space<vmem>>, vector<32x128xf32>
    tpu.vector_store %arg5[%c0_9, %c0_10], %13 {strides = array<i32>} : memref<32x128xf32, #tpu.memory_space<vmem>>, vector<32x128xf32>,
    return
  }
  func.func @transform_0(%arg0: i32) -> (i32, i32) {
    %c0_i32 = arith.constant 0 : i32
    %c0_i32_0 = arith.constant 0 : i32
    %c0_i32_1 = arith.constant 0 : i32
    return %c0_i32, %c0_i32_0 : i32, i32
  }
  func.func @transform_1(%arg0: i32) -> (i32, i32) {
    %c0_i32 = arith.constant 0 : i32
    %c0_i32_0 = arith.constant 0 : i32
    return %c0_i32, %arg0 : i32, i32
  }
  func.func @transform_2(%arg0: i32) -> (i32, i32) {
    %c0_i32 = arith.constant 0 : i32
    %c0_i32_0 = arith.constant 0 : i32
    %c0_i32_1 = arith.constant 0 : i32
    return %c0_i32, %c0_i32_0 : i32, i32
  }
  func.func @transform_3(%arg0: i32) -> (i32, i32) {
    %c0_i32 = arith.constant 0 : i32
    %c0_i32_0 = arith.constant 0 : i32
    %c0_i32_1 = arith.constant 0 : i32
    return %c0_i32, %c0_i32_0 : i32, i32
  }
  func.func @transform_4(%arg0: i32) -> (i32, i32) {
    %c0_i32 = arith.constant 0 : i32
    %c0_i32_0 = arith.constant 0 : i32
    return %c0_i32, %arg0 : i32, i32
  }
}

module attributes {stable_mosaic.version = 11 : i64} {
  func.func @kernel(%arg0: i32, %arg1: memref<64x512xf32, #tpu.memory_space<vmem>>, %arg2: memref<512x32xf32, #tpu.memory_space<vmem>>, %arg3: memref<512x1xf32, #tpu.memory_space<vmem>>, %arg4: memref<512x1xf32, #tpu.memory_space<vmem>>, %arg5: memref<64x32xf32, #tpu.memory_space<vmem>>) attributes {dimension_semantics = [#tpu.dimension_semantics<parallel>], iteration_bounds = array<i64: 1>, scalar_prefetch = 0 : i64, scratch_operands = 0 : i64, tpu.core_type = #tpu.core_type<tc>, window_params = [{pipeline_mode = #tpu.pipeline_mode<synchronous>, transform_indices = @transform_0, window_bounds = array<i64: 64, 512>}, {transform_indices = @transform_1, window_bounds = array<i64: 512, 32>}, {pipeline_mode = #tpu.pipeline_mode<synchronous>, transform_indices = @transform_2, window_bounds = array<i64: 512, 1>}, {pipeline_mode = #tpu.pipeline_mode<synchronous>, transform_indices = @transform_3, window_bounds = array<i64: 512, 1>}, {transform_indices = @transform_4, window_bounds = array<i64: 64, 32>}]} {
    %c0 = arith.constant 0 : index
    %c0_0 = arith.constant 0 : index
    %0 = vector.load %arg2[%c0, %c0_0] : memref<512x32xf32, #tpu.memory_space<vmem>>, vector<512x32xf32>
    %c0_1 = arith.constant 0 : index
    %c0_2 = arith.constant 0 : index
    %1 = vector.load %arg3[%c0_1, %c0_2] : memref<512x1xf32, #tpu.memory_space<vmem>>, vector<512x1xf32>
    %2 = vector.broadcast %1 : vector<512x1xf32> to vector<512x32xf32>
    %3 = arith.mulf %0, %2 : vector<512x32xf32>
    %c0_3 = arith.constant 0 : index
    %c0_4 = arith.constant 0 : index
    %4 = vector.load %arg4[%c0_3, %c0_4] : memref<512x1xf32, #tpu.memory_space<vmem>>, vector<512x1xf32>
    %5 = vector.broadcast %4 : vector<512x1xf32> to vector<512x32xf32>
    %6 = arith.addf %3, %5 : vector<512x32xf32>
    %cst = arith.constant 0.000000e+00 : f32
    %7 = vector.broadcast %cst : f32 to vector<512x32xf32>
    %8 = arith.cmpf oge, %6, %7 : vector<512x32xf32>
    %cst_5 = arith.constant 2.000000e-01 : f32
    %9 = vector.broadcast %cst_5 : f32 to vector<512x32xf32>
    %10 = arith.mulf %9, %6 : vector<512x32xf32>
    %11 = arith.select %8, %6, %10 : vector<512x32xi1>, vector<512x32xf32>
    %c0_6 = arith.constant 0 : index
    %c0_7 = arith.constant 0 : index
    %12 = vector.load %arg1[%c0_6, %c0_7] : memref<64x512xf32, #tpu.memory_space<vmem>>, vector<64x512xf32>
    %cst_8 = arith.constant dense<0.000000e+00> : vector<64x32xf32>
    %13 = tpu.matmul %12, %11, %cst_8 {dimension_numbers = #tpu.dot_dimension_numbers<[1], [0], [0], [1], [0, 0, 1, 1], [], []>} : vector<64x512xf32>, vector<512x32xf32>, vector<64x32xf32> -> vector<64x32xf32>
    %c0_9 = arith.constant 0 : index
    %c0_10 = arith.constant 0 : index
    %14 = vector.load %arg5[%c0_9, %c0_10] : memref<64x32xf32, #tpu.memory_space<vmem>>, vector<64x32xf32>
    tpu.vector_store %arg5[%c0_9, %c0_10], %13 {strides = array<i32>} : memref<64x32xf32, #tpu.memory_space<vmem>>, vector<64x32xf32>,
    return
  }
  func.func @transform_0(%arg0: i32) -> (i32, i32) {
    %c0_i32 = arith.constant 0 : i32
    %c0_i32_0 = arith.constant 0 : i32
    %c0_i32_1 = arith.constant 0 : i32
    return %c0_i32, %c0_i32_0 : i32, i32
  }
  func.func @transform_1(%arg0: i32) -> (i32, i32) {
    %c0_i32 = arith.constant 0 : i32
    %c0_i32_0 = arith.constant 0 : i32
    return %c0_i32, %arg0 : i32, i32
  }
  func.func @transform_2(%arg0: i32) -> (i32, i32) {
    %c0_i32 = arith.constant 0 : i32
    %c0_i32_0 = arith.constant 0 : i32
    %c0_i32_1 = arith.constant 0 : i32
    return %c0_i32, %c0_i32_0 : i32, i32
  }
  func.func @transform_3(%arg0: i32) -> (i32, i32) {
    %c0_i32 = arith.constant 0 : i32
    %c0_i32_0 = arith.constant 0 : i32
    %c0_i32_1 = arith.constant 0 : i32
    return %c0_i32, %c0_i32_0 : i32, i32
  }
  func.func @transform_4(%arg0: i32) -> (i32, i32) {
    %c0_i32 = arith.constant 0 : i32
    %c0_i32_0 = arith.constant 0 : i32
    return %c0_i32, %arg0 : i32, i32
  }
}

module attributes {stable_mosaic.version = 11 : i64} {
  func.func @kernel(%arg0: i32, %arg1: memref<1x1024xf32, #tpu.memory_space<vmem>>, %arg2: memref<1024x2xf32, #tpu.memory_space<vmem>>, %arg3: memref<1024x1xf32, #tpu.memory_space<vmem>>, %arg4: memref<1024x1xf32, #tpu.memory_space<vmem>>, %arg5: memref<1x2xf32, #tpu.memory_space<vmem>>) attributes {dimension_semantics = [#tpu.dimension_semantics<parallel>], iteration_bounds = array<i64: 1>, scalar_prefetch = 0 : i64, scratch_operands = 0 : i64, tpu.core_type = #tpu.core_type<tc>, window_params = [{pipeline_mode = #tpu.pipeline_mode<synchronous>, transform_indices = @transform_0, window_bounds = array<i64: 1, 1024>}, {transform_indices = @transform_1, window_bounds = array<i64: 1024, 2>}, {pipeline_mode = #tpu.pipeline_mode<synchronous>, transform_indices = @transform_2, window_bounds = array<i64: 1024, 1>}, {pipeline_mode = #tpu.pipeline_mode<synchronous>, transform_indices = @transform_3, window_bounds = array<i64: 1024, 1>}, {transform_indices = @transform_4, window_bounds = array<i64: 1, 2>}]} {
    %c0 = arith.constant 0 : index
    %c0_0 = arith.constant 0 : index
    %0 = vector.load %arg2[%c0, %c0_0] : memref<1024x2xf32, #tpu.memory_space<vmem>>, vector<1024x2xf32>
    %c0_1 = arith.constant 0 : index
    %c0_2 = arith.constant 0 : index
    %1 = vector.load %arg3[%c0_1, %c0_2] : memref<1024x1xf32, #tpu.memory_space<vmem>>, vector<1024x1xf32>
    %2 = vector.broadcast %1 : vector<1024x1xf32> to vector<1024x2xf32>
    %3 = arith.mulf %0, %2 : vector<1024x2xf32>
    %c0_3 = arith.constant 0 : index
    %c0_4 = arith.constant 0 : index
    %4 = vector.load %arg4[%c0_3, %c0_4] : memref<1024x1xf32, #tpu.memory_space<vmem>>, vector<1024x1xf32>
    %5 = vector.broadcast %4 : vector<1024x1xf32> to vector<1024x2xf32>
    %6 = arith.addf %3, %5 : vector<1024x2xf32>
    %cst = arith.constant 0.000000e+00 : f32
    %7 = vector.broadcast %cst : f32 to vector<1024x2xf32>
    %8 = arith.cmpf oge, %6, %7 : vector<1024x2xf32>
    %cst_5 = arith.constant 2.000000e-01 : f32
    %9 = vector.broadcast %cst_5 : f32 to vector<1024x2xf32>
    %10 = arith.mulf %9, %6 : vector<1024x2xf32>
    %11 = arith.select %8, %6, %10 : vector<1024x2xi1>, vector<1024x2xf32>
    %c0_6 = arith.constant 0 : index
    %c0_7 = arith.constant 0 : index
    %12 = vector.load %arg1[%c0_6, %c0_7] : memref<1x1024xf32, #tpu.memory_space<vmem>>, vector<1x1024xf32>
    %cst_8 = arith.constant dense<0.000000e+00> : vector<1x2xf32>
    %13 = tpu.matmul %12, %11, %cst_8 {dimension_numbers = #tpu.dot_dimension_numbers<[1], [0], [0], [1], [0, 0, 1, 1], [], []>} : vector<1x1024xf32>, vector<1024x2xf32>, vector<1x2xf32> -> vector<1x2xf32>
    %14 = math.absf %13 : vector<1x2xf32>
    %cst_9 = arith.constant 0.000000e+00 : f32
    %15 = vector.broadcast %cst_9 : f32 to vector<1x2xf32>
    %16 = arith.subf %15, %14 : vector<1x2xf32>
    %17 = math.exp %16 : vector<1x2xf32>
    %cst_10 = arith.constant 0.000000e+00 : f32
    %18 = vector.broadcast %cst_10 : f32 to vector<1x2xf32>
    %19 = arith.cmpf oge, %13, %18 : vector<1x2xf32>
    %cst_11 = arith.constant 1.000000e+00 : f32
    %20 = vector.broadcast %cst_11 : f32 to vector<1x2xf32>
    %21 = arith.select %19, %20, %17 : vector<1x2xi1>, vector<1x2xf32>
    %cst_12 = arith.constant 1.000000e+00 : f32
    %22 = vector.broadcast %cst_12 : f32 to vector<1x2xf32>
    %23 = arith.addf %22, %17 : vector<1x2xf32>
    %24 = tpu.reciprocal %23 {approx = true} : vector<1x2xf32> -> vector<1x2xf32>
    %25 = arith.mulf %21, %24 : vector<1x2xf32>
    %c0_13 = arith.constant 0 : index
    %c0_14 = arith.constant 0 : index
    %26 = vector.load %arg5[%c0_13, %c0_14] : memref<1x2xf32, #tpu.memory_space<vmem>>, vector<1x2xf32>
    tpu.vector_store %arg5[%c0_13, %c0_14], %25 {strides = array<i32>} : memref<1x2xf32, #tpu.memory_space<vmem>>, vector<1x2xf32>,
    return
  }
  func.func @transform_0(%arg0: i32) -> (i32, i32) {
    %c0_i32 = arith.constant 0 : i32
    %c0_i32_0 = arith.constant 0 : i32
    %c0_i32_1 = arith.constant 0 : i32
    return %c0_i32, %c0_i32_0 : i32, i32
  }
  func.func @transform_1(%arg0: i32) -> (i32, i32) {
    %c0_i32 = arith.constant 0 : i32
    %c0_i32_0 = arith.constant 0 : i32
    return %c0_i32, %arg0 : i32, i32
  }
  func.func @transform_2(%arg0: i32) -> (i32, i32) {
    %c0_i32 = arith.constant 0 : i32
    %c0_i32_0 = arith.constant 0 : i32
    %c0_i32_1 = arith.constant 0 : i32
    return %c0_i32, %c0_i32_0 : i32, i32
  }
  func.func @transform_3(%arg0: i32) -> (i32, i32) {
    %c0_i32 = arith.constant 0 : i32
    %c0_i32_0 = arith.constant 0 : i32
    %c0_i32_1 = arith.constant 0 : i32
    return %c0_i32, %c0_i32_0 : i32, i32
  }
  func.func @transform_4(%arg0: i32) -> (i32, i32) {
    %c0_i32 = arith.constant 0 : i32
    %c0_i32_0 = arith.constant 0 : i32
    return %c0_i32, %arg0 : i32, i32
  }
}

</mosaic_0001>

<llo_original>
// kernel: discriminator_forward.5
$region0: #{discriminator_forward.5}
  #allocation0 [shape = 'u32[]', space=smem, size = 0x4, offset = 0x4, fixed_abs, tag = 'smem constant byte address 0x4 - core index']
  #allocation1 [shape = 'u32[72,128]{1,0:T(1,128)}', space=vmem, size = 0x9000, scoped, tag = 'internal scratch']
  %s0 = inlined_call_operand.vmem [shape: f32[8,64], index: 0, kind: input, shape index: {}]
  %s1 = inlined_call_operand.vmem [shape: f32[64,2048], index: 1, kind: input, shape index: {}]
  %s2 = inlined_call_operand.vmem [shape: f32[8,2048], index: 2, kind: output, shape index: {}]
  %s3 = sld [smem:[#allocation0]]
  $region64: #{discriminator_forward.5} parent=0
    _
  %s5 = ssub.s32 1, %s3
  %s6 = scalar_select 0, %s5, %s3
  $region1: #{discriminator_forward.5} parent=0
    #allocation2 [shape = 'u8[524288]{0}', space=vmem, size = 0x80000, scoped, tag = 'input window, operand 1']
    loop: start=0, step=1, limit=4
    $region2: #{discriminator_forward.5} parent=1 // loop_pre_header
      _
    $region3: #{discriminator_forward.5} parent=1 // loop_header
      %s8 = sphi 0, %s12
      %p9 = scmp.ge.s32.totalorder %s8, 4
      %s16 = sphi 0, %s16
      %s18 = sphi 0, %s16
      %s19 = sphi 0, %s18
      %s33 = sphi 0, %s19
      %s39 = sphi 0, %s41
      %s42 = sphi 0, %s39
      %s43 = sphi 0, %s42
      %s59 = sphi 0, %s43
      %s65 = sphi 0, %s67
      %s68 = sphi 0, %s65
      %s69 = sphi 0, %s68
      %s85 = sphi 0, %s69
    $region4: #{discriminator_forward.5} parent=1 // loop_header_branch
      %11 = sbr.rel (%p9) target = $region8
    $region5: #{discriminator_forward.5} parent=1 // loop_body
      %s13 = ssub.s32 %s8, 1
      %s14 = ssub.s32 %s8, 2
      %s15 = sadd.s32 %s8, 1
      %s17 = sadd.s32 %s16, 1
      %p20 = scmp.eq.s32.totalorder %s8, 1
      %p21 = scmp.ne.s32.totalorder %s16, %s18
      %p22 = scmp.eq.s32.totalorder %s8, 0
      %p23 = por %p21, %p22
      %p24 = scmp.ne.s32.totalorder %s16, %s18
      %p25 = scmp.eq.s32.totalorder %s13, 1
      %p26 = por %p24, %p25
      %p27 = scmp.ne.s32.totalorder %s18, %s19
      %p28 = scmp.eq.s32.totalorder %s13, 0
      %p29 = por %p27, %p28
      %p30 = scmp.ne.s32.totalorder %s18, %s19
      %p31 = scmp.eq.s32.totalorder %s14, 1
      %p32 = por %p30, %p31
      %p34 = scmp.ne.s32.totalorder %s19, %s33
      %p35 = scmp.eq.s32.totalorder %s14, 0
      %p36 = por %p34, %p35
      %s37 = ssub.s32 %s8, %s15
      %p38 = scmp.eq.s32.totalorder %s37, 0
      %s40 = sadd.s32 %s39, 1
      %s41 = scalar_select %p38, %s39, %s40
      %p44 = pneg %p38
      %p45 = scmp.eq.s32.totalorder %s8, 1
      %p46 = por %p44, %p45
      %p47 = scmp.ne.s32.totalorder %s39, %s42
      %p48 = scmp.eq.s32.totalorder %s8, 0
      %p49 = por %p47, %p48
      %p50 = scmp.ne.s32.totalorder %s39, %s42
      %p51 = scmp.eq.s32.totalorder %s13, 1
      %p52 = por %p50, %p51
      %p53 = scmp.ne.s32.totalorder %s42, %s43
      %p54 = scmp.eq.s32.totalorder %s13, 0
      %p55 = por %p53, %p54
      %p56 = scmp.ne.s32.totalorder %s42, %s43
      %p57 = scmp.eq.s32.totalorder %s14, 1
      %p58 = por %p56, %p57
      %p60 = scmp.ne.s32.totalorder %s43, %s59
      %p61 = scmp.eq.s32.totalorder %s14, 0
      %p62 = por %p60, %p61
      %s63 = ssub.s32 %s8, %s15
      %p64 = scmp.eq.s32.totalorder %s63, 0
      %s66 = sadd.s32 %s65, 1
      %s67 = scalar_select %p64, %s65, %s66
      %p70 = pneg %p64
      %p71 = scmp.eq.s32.totalorder %s8, 1
      %p72 = por %p70, %p71
      %p73 = scmp.ne.s32.totalorder %s65, %s68
      %p74 = scmp.eq.s32.totalorder %s8, 0
      %p75 = por %p73, %p74
      %p76 = scmp.ne.s32.totalorder %s65, %s68
      %p77 = scmp.eq.s32.totalorder %s13, 1
      %p78 = por %p76, %p77
      %p79 = scmp.ne.s32.totalorder %s68, %s69
      %p80 = scmp.eq.s32.totalorder %s13, 0
      %p81 = por %p79, %p80
      %p82 = scmp.ne.s32.totalorder %s68, %s69
      %p83 = scmp.eq.s32.totalorder %s14, 1
      %p84 = por %p82, %p83
      %p86 = scmp.ne.s32.totalorder %s69, %s85
      %p87 = scmp.eq.s32.totalorder %s14, 0
      %p88 = por %p86, %p87
      %p89 = scmp.le.s32.totalorder 1, %s8
      %p90 = scmp.lt.s32.totalorder %s8, 3
      %p91 = pnand %p89, %p90
      %p92 = pneg %p91
      // Predicated region
      $region9: #{discriminator_forward.5} parent=5 // pred_check
        _
      $region10: #{discriminator_forward.5} parent=5 // pred_check_branch
        %94 = sbr.rel (%p91) target = $region12
      $region11: #{discriminator_forward.5} parent=5 // pred_region
        %s95 = ssub.s32 %s8, 1
        // Predicated region
        $region13: #{discriminator_forward.5} parent=11 // pred_check
          %p96 = pneg %p29
        $region14: #{discriminator_forward.5} parent=11 // pred_check_branch
          %98 = sbr.rel (%p96) target = $region16
        $region15: #{discriminator_forward.5} parent=11 // pred_region
          _
        $region16: #{discriminator_forward.5} parent=11 // pred_fallthru
          _
      $region12: #{discriminator_forward.5} parent=5 // pred_fallthru
        _
      %p99 = scmp.lt.s32.totalorder %s8, 2
      // Predicated region
      $region17: #{discriminator_forward.5} parent=5 // pred_check
        %p100 = pneg %p99
      $region18: #{discriminator_forward.5} parent=5 // pred_check_branch
        %102 = sbr.rel (%p100) target = $region20
      $region19: #{discriminator_forward.5} parent=5 // pred_region
        // Predicated region
        $region21: #{discriminator_forward.5} parent=19 // pred_check
          %p103 = pneg %p49
        $region22: #{discriminator_forward.5} parent=19 // pred_check_branch
          %105 = sbr.rel (%p103) target = $region24
        $region23: #{discriminator_forward.5} parent=19 // pred_region
          %s106 = sand.u32 %s39, 1
          %s107 = sand.u32 %s39, 1
          %s108 = smul.addr %s107, 512
          %s109 = scalar_lea.vmem [#allocation2], %s108
          %s110 = smul.u32 8, %s8
          %s111 = smul.addr %s110, 8
          %s112 = scalar_lea.vmem %s1, %s111
          // Predicated region
          $region25: #{discriminator_forward.5} parent=23 // pred_check
            _
          $region26: #{discriminator_forward.5} parent=23 // pred_check_branch
            %114 = sbr.rel (0) target = $region28
          $region27: #{discriminator_forward.5} parent=23 // pred_region
            // Predicated region
            $region29: #{discriminator_forward.5} parent=27 // pred_check
              _
            $region30: #{discriminator_forward.5} parent=27 // pred_check_branch
              %116 = sbr.rel (0) target = $region32
            $region31: #{discriminator_forward.5} parent=27 // pred_region
              loop: start=0, step=1, limit=1
              $region33: #{discriminator_forward.5} parent=31 // loop_pre_header
                _
              $region34: #{discriminator_forward.5} parent=31 // loop_header
                %s118 = sphi 0, %s122
                %p119 = scmp.ge.s32.totalorder %s118, 1
                %s123 = sphi %s112, %s112
                %s124 = sphi %s109, %s109
              $region35: #{discriminator_forward.5} parent=31 // loop_header_branch
                %121 = sbr.rel (%p119) target = $region39
              $region36: #{discriminator_forward.5} parent=31 // loop_body
                %v125 = vld [vmem:[%s123] sm:$0xff]
                %126 = vst [vmem:[%s124] sm:$0xff] %v125
                %v127 = vld [vmem:[%s123 + $0x8] sm:$0xff]
                %128 = vst [vmem:[%s124 + $0x8] sm:$0xff] %v127
                %v129 = vld [vmem:[%s123 + $0x10] sm:$0xff]
                %130 = vst [vmem:[%s124 + $0x10] sm:$0xff] %v129
                %v131 = vld [vmem:[%s123 + $0x18] sm:$0xff]
                %132 = vst [vmem:[%s124 + $0x18] sm:$0xff] %v131
                %v133 = vld [vmem:[%s123 + $0x20] sm:$0xff]
                %134 = vst [vmem:[%s124 + $0x20] sm:$0xff] %v133
                %v135 = vld [vmem:[%s123 + $0x28] sm:$0xff]
                %136 = vst [vmem:[%s124 + $0x28] sm:$0xff] %v135
                %v137 = vld [vmem:[%s123 + $0x30] sm:$0xff]
                %138 = vst [vmem:[%s124 + $0x30] sm:$0xff] %v137
                %v139 = vld [vmem:[%s123 + $0x38] sm:$0xff]
                %140 = vst [vmem:[%s124 + $0x38] sm:$0xff] %v139
                %v141 = vld [vmem:[%s123 + $0x80] sm:$0xff]
                %142 = vst [vmem:[%s124 + $0x40] sm:$0xff] %v141
                %v143 = vld [vmem:[%s123 + $0x88] sm:$0xff]
                %144 = vst [vmem:[%s124 + $0x48] sm:$0xff] %v143
                %v145 = vld [vmem:[%s123 + $0x90] sm:$0xff]
                %146 = vst [vmem:[%s124 + $0x50] sm:$0xff] %v145
                %v147 = vld [vmem:[%s123 + $0x98] sm:$0xff]
                %148 = vst [vmem:[%s124 + $0x58] sm:$0xff] %v147
                %v149 = vld [vmem:[%s123 + $0xa0] sm:$0xff]
                %150 = vst [vmem:[%s124 + $0x60] sm:$0xff] %v149
                %v151 = vld [vmem:[%s123 + $0xa8] sm:$0xff]
                %152 = vst [vmem:[%s124 + $0x68] sm:$0xff] %v151
                %v153 = vld [vmem:[%s123 + $0xb0] sm:$0xff]
                %154 = vst [vmem:[%s124 + $0x70] sm:$0xff] %v153
                %v155 = vld [vmem:[%s123 + $0xb8] sm:$0xff]
                %156 = vst [vmem:[%s124 + $0x78] sm:$0xff] %v155
                %v157 = vld [vmem:[%s123 + $0x100] sm:$0xff]
                %158 = vst [vmem:[%s124 + $0x80] sm:$0xff] %v157
                %v159 = vld [vmem:[%s123 + $0x108] sm:$0xff]
                %160 = vst [vmem:[%s124 + $0x88] sm:$0xff] %v159
                %v161 = vld [vmem:[%s123 + $0x110] sm:$0xff]
                %162 = vst [vmem:[%s124 + $0x90] sm:$0xff] %v161
                %v163 = vld [vmem:[%s123 + $0x118] sm:$0xff]
                %164 = vst [vmem:[%s124 + $0x98] sm:$0xff] %v163
                %v165 = vld [vmem:[%s123 + $0x120] sm:$0xff]
                %166 = vst [vmem:[%s124 + $0xa0] sm:$0xff] %v165
                %v167 = vld [vmem:[%s123 + $0x128] sm:$0xff]
                %168 = vst [vmem:[%s124 + $0xa8] sm:$0xff] %v167
                %v169 = vld [vmem:[%s123 + $0x130] sm:$0xff]
                %170 = vst [vmem:[%s124 + $0xb0] sm:$0xff] %v169
                %v171 = vld [vmem:[%s123 + $0x138] sm:$0xff]
                %172 = vst [vmem:[%s124 + $0xb8] sm:$0xff] %v171
                %v173 = vld [vmem:[%s123 + $0x180] sm:$0xff]
                %174 = vst [vmem:[%s124 + $0xc0] sm:$0xff] %v173
                %v175 = vld [vmem:[%s123 + $0x188] sm:$0xff]
                %176 = vst [vmem:[%s124 + $0xc8] sm:$0xff] %v175
                %v177 = vld [vmem:[%s123 + $0x190] sm:$0xff]
                %178 = vst [vmem:[%s124 + $0xd0] sm:$0xff] %v177
                %v179 = vld [vmem:[%s123 + $0x198] sm:$0xff]
                %180 = vst [vmem:[%s124 + $0xd8] sm:$0xff] %v179
                %v181 = vld [vmem:[%s123 + $0x1a0] sm:$0xff]
                %182 = vst [vmem:[%s124 + $0xe0] sm:$0xff] %v181
                %v183 = vld [vmem:[%s123 + $0x1a8] sm:$0xff]
                %184 = vst [vmem:[%s124 + $0xe8] sm:$0xff] %v183
                %v185 = vld [vmem:[%s123 + $0x1b0] sm:$0xff]
                %186 = vst [vmem:[%s124 + $0xf0] sm:$0xff] %v185
                %v187 = vld [vmem:[%s123 + $0x1b8] sm:$0xff]
                %188 = vst [vmem:[%s124 + $0xf8] sm:$0xff] %v187
                %v189 = vld [vmem:[%s123 + $0x200] sm:$0xff]
                %190 = vst [vmem:[%s124 + $0x100] sm:$0xff] %v189
                %v191 = vld [vmem:[%s123 + $0x208] sm:$0xff]
                %192 = vst [vmem:[%s124 + $0x108] sm:$0xff] %v191
                %v193 = vld [vmem:[%s123 + $0x210] sm:$0xff]
                %194 = vst [vmem:[%s124 + $0x110] sm:$0xff] %v193
                %v195 = vld [vmem:[%s123 + $0x218] sm:$0xff]
                %196 = vst [vmem:[%s124 + $0x118] sm:$0xff] %v195
                %v197 = vld [vmem:[%s123 + $0x220] sm:$0xff]
                %198 = vst [vmem:[%s124 + $0x120] sm:$0xff] %v197
                %v199 = vld [vmem:[%s123 + $0x228] sm:$0xff]
                %200 = vst [vmem:[%s124 + $0x128] sm:$0xff] %v199
                %v201 = vld [vmem:[%s123 + $0x230] sm:$0xff]
                %202 = vst [vmem:[%s124 + $0x130] sm:$0xff] %v201
                %v203 = vld [vmem:[%s123 + $0x238] sm:$0xff]
                %204 = vst [vmem:[%s124 + $0x138] sm:$0xff] %v203
                %v205 = vld [vmem:[%s123 + $0x280] sm:$0xff]
                %206 = vst [vmem:[%s124 + $0x140] sm:$0xff] %v205
                %v207 = vld [vmem:[%s123 + $0x288] sm:$0xff]
                %208 = vst [vmem:[%s124 + $0x148] sm:$0xff] %v207
                %v209 = vld [vmem:[%s123 + $0x290] sm:$0xff]
                %210 = vst [vmem:[%s124 + $0x150] sm:$0xff] %v209
                %v211 = vld [vmem:[%s123 + $0x298] sm:$0xff]
                %212 = vst [vmem:[%s124 + $0x158] sm:$0xff] %v211
                %v213 = vld [vmem:[%s123 + $0x2a0] sm:$0xff]
                %214 = vst [vmem:[%s124 + $0x160] sm:$0xff] %v213
                %v215 = vld [vmem:[%s123 + $0x2a8] sm:$0xff]
                %216 = vst [vmem:[%s124 + $0x168] sm:$0xff] %v215
                %v217 = vld [vmem:[%s123 + $0x2b0] sm:$0xff]
                %218 = vst [vmem:[%s124 + $0x170] sm:$0xff] %v217
                %v219 = vld [vmem:[%s123 + $0x2b8] sm:$0xff]
                %220 = vst [vmem:[%s124 + $0x178] sm:$0xff] %v219
                %v221 = vld [vmem:[%s123 + $0x300] sm:$0xff]
                %222 = vst [vmem:[%s124 + $0x180] sm:$0xff] %v221
                %v223 = vld [vmem:[%s123 + $0x308] sm:$0xff]
                %224 = vst [vmem:[%s124 + $0x188] sm:$0xff] %v223
                %v225 = vld [vmem:[%s123 + $0x310] sm:$0xff]
                %226 = vst [vmem:[%s124 + $0x190] sm:$0xff] %v225
                %v227 = vld [vmem:[%s123 + $0x318] sm:$0xff]
                %228 = vst [vmem:[%s124 + $0x198] sm:$0xff] %v227
                %v229 = vld [vmem:[%s123 + $0x320] sm:$0xff]
                %230 = vst [vmem:[%s124 + $0x1a0] sm:$0xff] %v229
                %v231 = vld [vmem:[%s123 + $0x328] sm:$0xff]
                %232 = vst [vmem:[%s124 + $0x1a8] sm:$0xff] %v231
                %v233 = vld [vmem:[%s123 + $0x330] sm:$0xff]
                %234 = vst [vmem:[%s124 + $0x1b0] sm:$0xff] %v233
                %v235 = vld [vmem:[%s123 + $0x338] sm:$0xff]
                %236 = vst [vmem:[%s124 + $0x1b8] sm:$0xff] %v235
                %v237 = vld [vmem:[%s123 + $0x380] sm:$0xff]
                %238 = vst [vmem:[%s124 + $0x1c0] sm:$0xff] %v237
                %v239 = vld [vmem:[%s123 + $0x388] sm:$0xff]
                %240 = vst [vmem:[%s124 + $0x1c8] sm:$0xff] %v239
                %v241 = vld [vmem:[%s123 + $0x390] sm:$0xff]
                %242 = vst [vmem:[%s124 + $0x1d0] sm:$0xff] %v241
                %v243 = vld [vmem:[%s123 + $0x398] sm:$0xff]
                %244 = vst [vmem:[%s124 + $0x1d8] sm:$0xff] %v243
                %v245 = vld [vmem:[%s123 + $0x3a0] sm:$0xff]
                %246 = vst [vmem:[%s124 + $0x1e0] sm:$0xff] %v245
                %v247 = vld [vmem:[%s123 + $0x3a8] sm:$0xff]
                %248 = vst [vmem:[%s124 + $0x1e8] sm:$0xff] %v247
                %v249 = vld [vmem:[%s123 + $0x3b0] sm:$0xff]
                %250 = vst [vmem:[%s124 + $0x1f0] sm:$0xff] %v249
                %v251 = vld [vmem:[%s123 + $0x3b8] sm:$0xff]
                %252 = vst [vmem:[%s124 + $0x1f8] sm:$0xff] %v251
              $region37: #{discriminator_forward.5} parent=31 // loop_footer
                %s122 = sadd.s32 1, %s118
              $region38: #{discriminator_forward.5} parent=31 // loop_footer_branch
                %117 = sbr.rel target = $region34
              $region39: #{discriminator_forward.5} parent=31 // loop_exit
                _
            $region32: #{discriminator_forward.5} parent=27 // pred_fallthru
              _
            // Predicated region
            $region40: #{discriminator_forward.5} parent=27 // pred_check
              _
            $region41: #{discriminator_forward.5} parent=27 // pred_check_branch
              %254 = sbr.rel target = $region43
            $region42: #{discriminator_forward.5} parent=27 // pred_region
              _
            $region43: #{discriminator_forward.5} parent=27 // pred_fallthru
              _
          $region28: #{discriminator_forward.5} parent=23 // pred_fallthru
            _
          %255 = vnop
        $region24: #{discriminator_forward.5} parent=19 // pred_fallthru
          _
      $region20: #{discriminator_forward.5} parent=5 // pred_fallthru
        _
      %p256 = scmp.le.s32.totalorder 1, %s8
      %p257 = scmp.lt.s32.totalorder %s8, 3
      %p258 = pnand %p256, %p257
      %p259 = pneg %p258
      // Predicated region
      $region44: #{discriminator_forward.5} parent=5 // pred_check
        _
      $region45: #{discriminator_forward.5} parent=5 // pred_check_branch
        %261 = sbr.rel (%p258) target = $region47
      $region46: #{discriminator_forward.5} parent=5 // pred_region
        %s262 = ssub.s32 %s8, 1
        %s263 = sand.u32 %s42, 1
        %s264 = sand.u32 %s42, 1
        %s265 = smul.addr %s264, 512
        %s266 = scalar_lea.vmem [#allocation2], %s265
        // Predicated region
        $region48: #{discriminator_forward.5} parent=46 // pred_check
          %p267 = pneg %p55
        $region49: #{discriminator_forward.5} parent=46 // pred_check_branch
          %269 = sbr.rel (%p267) target = $region51
        $region50: #{discriminator_forward.5} parent=46 // pred_region
          _
        $region51: #{discriminator_forward.5} parent=46 // pred_fallthru
          _
        %p270 = pneg %p29
        %p271 = pneg %p26
        %s272 = sand.u32 %s42, 1
        %s273 = sand.u32 %s42, 1
        %s274 = smul.addr %s273, 512
        %s275 = scalar_lea.vmem [#allocation2], %s274
        %p276 = pneg %p55
        %p277 = pneg %p52
        %p278 = pneg %p81
        %p279 = pneg %p78
        %s280 = smul.u32 8, %s13
        %p281 = scmp.lt.s32.totalorder %s280, 15
        %s282 = scalar_select %p281, %s280, 15
        %s283 = smul.addr %s282, 8
        %s284 = scalar_lea.vmem %s2, %s283
        %s285 = smul.u32 8, %s13
        %s286 = smul.u32 8, %s13
        %p287 = scmp.lt.s32.totalorder %s286, 15
        %s288 = scalar_select %p287, %s286, 15
        %s289 = smul.addr %s288, 8
        %s290 = scalar_lea.vmem %s2, %s289
        %s291 = smul.u32 8, %s13
        %v292 = vld [vmem:[%s266] sm:$0xff]
        %v293 = vld [vmem:[%s266 + $0x8] sm:$0xff]
        %v294 = vld [vmem:[%s266 + $0x10] sm:$0xff]
        %v295 = vld [vmem:[%s266 + $0x18] sm:$0xff]
        %v296 = vld [vmem:[%s266 + $0x20] sm:$0xff]
        %v297 = vld [vmem:[%s266 + $0x28] sm:$0xff]
        %v298 = vld [vmem:[%s266 + $0x30] sm:$0xff]
        %v299 = vld [vmem:[%s266 + $0x38] sm:$0xff]
        %v300 = vld [vmem:[%s266 + $0x40] sm:$0xff]
        %v301 = vld [vmem:[%s266 + $0x48] sm:$0xff]
        %v302 = vld [vmem:[%s266 + $0x50] sm:$0xff]
        %v303 = vld [vmem:[%s266 + $0x58] sm:$0xff]
        %v304 = vld [vmem:[%s266 + $0x60] sm:$0xff]
        %v305 = vld [vmem:[%s266 + $0x68] sm:$0xff]
        %v306 = vld [vmem:[%s266 + $0x70] sm:$0xff]
        %v307 = vld [vmem:[%s266 + $0x78] sm:$0xff]
        %v308 = vld [vmem:[%s266 + $0x80] sm:$0xff]
        %v309 = vld [vmem:[%s266 + $0x88] sm:$0xff]
        %v310 = vld [vmem:[%s266 + $0x90] sm:$0xff]
        %v311 = vld [vmem:[%s266 + $0x98] sm:$0xff]
        %v312 = vld [vmem:[%s266 + $0xa0] sm:$0xff]
        %v313 = vld [vmem:[%s266 + $0xa8] sm:$0xff]
        %v314 = vld [vmem:[%s266 + $0xb0] sm:$0xff]
        %v315 = vld [vmem:[%s266 + $0xb8] sm:$0xff]
        %v316 = vld [vmem:[%s266 + $0xc0] sm:$0xff]
        %v317 = vld [vmem:[%s266 + $0xc8] sm:$0xff]
        %v318 = vld [vmem:[%s266 + $0xd0] sm:$0xff]
        %v319 = vld [vmem:[%s266 + $0xd8] sm:$0xff]
        %v320 = vld [vmem:[%s266 + $0xe0] sm:$0xff]
        %v321 = vld [vmem:[%s266 + $0xe8] sm:$0xff]
        %v322 = vld [vmem:[%s266 + $0xf0] sm:$0xff]
        %v323 = vld [vmem:[%s266 + $0xf8] sm:$0xff]
        %v324 = vld [vmem:[%s266 + $0x100] sm:$0xff]
        %v325 = vld [vmem:[%s266 + $0x108] sm:$0xff]
        %v326 = vld [vmem:[%s266 + $0x110] sm:$0xff]
        %v327 = vld [vmem:[%s266 + $0x118] sm:$0xff]
        %v328 = vld [vmem:[%s266 + $0x120] sm:$0xff]
        %v329 = vld [vmem:[%s266 + $0x128] sm:$0xff]
        %v330 = vld [vmem:[%s266 + $0x130] sm:$0xff]
        %v331 = vld [vmem:[%s266 + $0x138] sm:$0xff]
        %v332 = vld [vmem:[%s266 + $0x140] sm:$0xff]
        %v333 = vld [vmem:[%s266 + $0x148] sm:$0xff]
        %v334 = vld [vmem:[%s266 + $0x150] sm:$0xff]
        %v335 = vld [vmem:[%s266 + $0x158] sm:$0xff]
        %v336 = vld [vmem:[%s266 + $0x160] sm:$0xff]
        %v337 = vld [vmem:[%s266 + $0x168] sm:$0xff]
        %v338 = vld [vmem:[%s266 + $0x170] sm:$0xff]
        %v339 = vld [vmem:[%s266 + $0x178] sm:$0xff]
        %v340 = vld [vmem:[%s266 + $0x180] sm:$0xff]
        %v341 = vld [vmem:[%s266 + $0x188] sm:$0xff]
        %v342 = vld [vmem:[%s266 + $0x190] sm:$0xff]
        %v343 = vld [vmem:[%s266 + $0x198] sm:$0xff]
        %v344 = vld [vmem:[%s266 + $0x1a0] sm:$0xff]
        %v345 = vld [vmem:[%s266 + $0x1a8] sm:$0xff]
        %v346 = vld [vmem:[%s266 + $0x1b0] sm:$0xff]
        %v347 = vld [vmem:[%s266 + $0x1b8] sm:$0xff]
        %v348 = vld [vmem:[%s266 + $0x1c0] sm:$0xff]
        %v349 = vld [vmem:[%s266 + $0x1c8] sm:$0xff]
        %v350 = vld [vmem:[%s266 + $0x1d0] sm:$0xff]
        %v351 = vld [vmem:[%s266 + $0x1d8] sm:$0xff]
        %v352 = vld [vmem:[%s266 + $0x1e0] sm:$0xff]
        %v353 = vld [vmem:[%s266 + $0x1e8] sm:$0xff]
        %v354 = vld [vmem:[%s266 + $0x1f0] sm:$0xff]
        %v355 = vld [vmem:[%s266 + $0x1f8] sm:$0xff]
        %v356 = vld [vmem:[%s0] sm:$0xff]
        %vm357 = vcmask 523264
        %v359 = vsel %vm357, %v356, 0
        %361 = vmatpush.msra.mxu0 0.0
        %362 = vmatpush.msra.mxu0 0.0
        %363 = vmatpush.msra.mxu0 0.0
        %364 = vmatpush.msra.mxu0 0.0
        %365 = vmatpush.msra.mxu0 0.0
        %366 = vmatpush.msra.mxu0 0.0
        %367 = vmatpush.msra.mxu0 0.0
        %368 = vmatpush.msra.mxu0 0.0
        %369 = vmatpush.msra.mxu0 %v348
        %370 = vmatpush.msra.mxu0 %v340
        %371 = vmatpush.msra.mxu0 %v332
        %372 = vmatpush.msra.mxu0 %v324
        %373 = vmatpush.msra.mxu0 %v316
        %374 = vmatpush.msra.mxu0 %v308
        %375 = vmatpush.msra.mxu0 %v300
        %376 = vmatpush.msra.mxu0 %v292
        %377 = vmatmul.f32.gmra.mxu0 %v359
        %v378 = vpop.f32.mrf.mxu0
        %v379 = vadd.f32 0.0, %v378
        %380 = vdwg.mxu0
        %381 = vmatpush.msra.mxu0 0.0
        %382 = vmatpush.msra.mxu0 0.0
        %383 = vmatpush.msra.mxu0 0.0
        %384 = vmatpush.msra.mxu0 0.0
        %385 = vmatpush.msra.mxu0 0.0
        %386 = vmatpush.msra.mxu0 0.0
        %387 = vmatpush.msra.mxu0 0.0
        %388 = vmatpush.msra.mxu0 0.0
        %389 = vmatpush.msra.mxu0 %v349
        %390 = vmatpush.msra.mxu0 %v341
        %391 = vmatpush.msra.mxu0 %v333
        %392 = vmatpush.msra.mxu0 %v325
        %393 = vmatpush.msra.mxu0 %v317
        %394 = vmatpush.msra.mxu0 %v309
        %395 = vmatpush.msra.mxu0 %v301
        %396 = vmatpush.msra.mxu0 %v293
        %397 = vmatmul.f32.gmra.mxu0 %v359
        %v398 = vpop.f32.mrf.mxu0
        %v399 = vadd.f32 0.0, %v398
        %400 = vdwg.mxu0
        %401 = vmatpush.msra.mxu0 0.0
        %402 = vmatpush.msra.mxu0 0.0
        %403 = vmatpush.msra.mxu0 0.0
        %404 = vmatpush.msra.mxu0 0.0
        %405 = vmatpush.msra.mxu0 0.0
        %406 = vmatpush.msra.mxu0 0.0
        %407 = vmatpush.msra.mxu0 0.0
        %408 = vmatpush.msra.mxu0 0.0
        %409 = vmatpush.msra.mxu0 %v350
        %410 = vmatpush.msra.mxu0 %v342
        %411 = vmatpush.msra.mxu0 %v334
        %412 = vmatpush.msra.mxu0 %v326
        %413 = vmatpush.msra.mxu0 %v318
        %414 = vmatpush.msra.mxu0 %v310
        %415 = vmatpush.msra.mxu0 %v302
        %416 = vmatpush.msra.mxu0 %v294
        %417 = vmatmul.f32.gmra.mxu0 %v359
        %v418 = vpop.f32.mrf.mxu0
        %v419 = vadd.f32 0.0, %v418
        %420 = vdwg.mxu0
        %421 = vmatpush.msra.mxu0 0.0
        %422 = vmatpush.msra.mxu0 0.0
        %423 = vmatpush.msra.mxu0 0.0
        %424 = vmatpush.msra.mxu0 0.0
        %425 = vmatpush.msra.mxu0 0.0
        %426 = vmatpush.msra.mxu0 0.0
        %427 = vmatpush.msra.mxu0 0.0
        %428 = vmatpush.msra.mxu0 0.0
        %429 = vmatpush.msra.mxu0 %v351
        %430 = vmatpush.msra.mxu0 %v343
        %431 = vmatpush.msra.mxu0 %v335
        %432 = vmatpush.msra.mxu0 %v327
        %433 = vmatpush.msra.mxu0 %v319
        %434 = vmatpush.msra.mxu0 %v311
        %435 = vmatpush.msra.mxu0 %v303
        %436 = vmatpush.msra.mxu0 %v295
        %437 = vmatmul.f32.gmra.mxu0 %v359
        %v438 = vpop.f32.mrf.mxu0
        %v439 = vadd.f32 0.0, %v438
        %440 = vdwg.mxu0
        %441 = vmatpush.msra.mxu0 0.0
        %442 = vmatpush.msra.mxu0 0.0
        %443 = vmatpush.msra.mxu0 0.0
        %444 = vmatpush.msra.mxu0 0.0
        %445 = vmatpush.msra.mxu0 0.0
        %446 = vmatpush.msra.mxu0 0.0
        %447 = vmatpush.msra.mxu0 0.0
        %448 = vmatpush.msra.mxu0 0.0
        %449 = vmatpush.msra.mxu0 %v352
        %450 = vmatpush.msra.mxu0 %v344
        %451 = vmatpush.msra.mxu0 %v336
        %452 = vmatpush.msra.mxu0 %v328
        %453 = vmatpush.msra.mxu0 %v320
        %454 = vmatpush.msra.mxu0 %v312
        %455 = vmatpush.msra.mxu0 %v304
        %456 = vmatpush.msra.mxu0 %v296
        %457 = vmatmul.f32.gmra.mxu0 %v359
        %v458 = vpop.f32.mrf.mxu0
        %v459 = vadd.f32 0.0, %v458
        %460 = vdwg.mxu0
        %461 = vmatpush.msra.mxu0 0.0
        %462 = vmatpush.msra.mxu0 0.0
        %463 = vmatpush.msra.mxu0 0.0
        %464 = vmatpush.msra.mxu0 0.0
        %465 = vmatpush.msra.mxu0 0.0
        %466 = vmatpush.msra.mxu0 0.0
        %467 = vmatpush.msra.mxu0 0.0
        %468 = vmatpush.msra.mxu0 0.0
        %469 = vmatpush.msra.mxu0 %v353
        %470 = vmatpush.msra.mxu0 %v345
        %471 = vmatpush.msra.mxu0 %v337
        %472 = vmatpush.msra.mxu0 %v329
        %473 = vmatpush.msra.mxu0 %v321
        %474 = vmatpush.msra.mxu0 %v313
        %475 = vmatpush.msra.mxu0 %v305
        %476 = vmatpush.msra.mxu0 %v297
        %477 = vmatmul.f32.gmra.mxu0 %v359
        %v478 = vpop.f32.mrf.mxu0
        %v479 = vadd.f32 0.0, %v478
        %480 = vdwg.mxu0
        %481 = vmatpush.msra.mxu0 0.0
        %482 = vmatpush.msra.mxu0 0.0
        %483 = vmatpush.msra.mxu0 0.0
        %484 = vmatpush.msra.mxu0 0.0
        %485 = vmatpush.msra.mxu0 0.0
        %486 = vmatpush.msra.mxu0 0.0
        %487 = vmatpush.msra.mxu0 0.0
        %488 = vmatpush.msra.mxu0 0.0
        %489 = vmatpush.msra.mxu0 %v354
        %490 = vmatpush.msra.mxu0 %v346
        %491 = vmatpush.msra.mxu0 %v338
        %492 = vmatpush.msra.mxu0 %v330
        %493 = vmatpush.msra.mxu0 %v322
        %494 = vmatpush.msra.mxu0 %v314
        %495 = vmatpush.msra.mxu0 %v306
        %496 = vmatpush.msra.mxu0 %v298
        %497 = vmatmul.f32.gmra.mxu0 %v359
        %v498 = vpop.f32.mrf.mxu0
        %v499 = vadd.f32 0.0, %v498
        %500 = vdwg.mxu0
        %501 = vmatpush.msra.mxu0 0.0
        %502 = vmatpush.msra.mxu0 0.0
        %503 = vmatpush.msra.mxu0 0.0
        %504 = vmatpush.msra.mxu0 0.0
        %505 = vmatpush.msra.mxu0 0.0
        %506 = vmatpush.msra.mxu0 0.0
        %507 = vmatpush.msra.mxu0 0.0
        %508 = vmatpush.msra.mxu0 0.0
        %509 = vmatpush.msra.mxu0 %v355
        %510 = vmatpush.msra.mxu0 %v347
        %511 = vmatpush.msra.mxu0 %v339
        %512 = vmatpush.msra.mxu0 %v331
        %513 = vmatpush.msra.mxu0 %v323
        %514 = vmatpush.msra.mxu0 %v315
        %515 = vmatpush.msra.mxu0 %v307
        %516 = vmatpush.msra.mxu0 %v299
        %517 = vmatmul.f32.gmra.mxu0 %v359
        %v518 = vpop.f32.mrf.mxu0
        %v519 = vadd.f32 0.0, %v518
        %520 = vdwg.mxu0
        %vm521 = vcmp.ge.f32.partialorder %v379, 0.0
        %vm522 = vcmp.ge.f32.partialorder %v399, 0.0
        %vm523 = vcmp.ge.f32.partialorder %v419, 0.0
        %vm524 = vcmp.ge.f32.partialorder %v439, 0.0
        %vm525 = vcmp.ge.f32.partialorder %v459, 0.0
        %vm526 = vcmp.ge.f32.partialorder %v479, 0.0
        %vm527 = vcmp.ge.f32.partialorder %v499, 0.0
        %vm528 = vcmp.ge.f32.partialorder %v519, 0.0
        %v529 = vmul.f32 %v379, 0.2
        %v530 = vmul.f32 %v399, 0.2
        %v531 = vmul.f32 %v419, 0.2
        %v532 = vmul.f32 %v439, 0.2
        %v533 = vmul.f32 %v459, 0.2
        %v534 = vmul.f32 %v479, 0.2
        %v535 = vmul.f32 %v499, 0.2
        %v536 = vmul.f32 %v519, 0.2
        %v537 = vsel %vm521, %v379, %v529
        %v538 = vsel %vm522, %v399, %v530
        %v539 = vsel %vm523, %v419, %v531
        %v540 = vsel %vm524, %v439, %v532
        %v541 = vsel %vm525, %v459, %v533
        %v542 = vsel %vm526, %v479, %v534
        %v543 = vsel %vm527, %v499, %v535
        %v544 = vsel %vm528, %v519, %v536
        %545 = vst [vmem:[%s290] sm:$0xff] %v537
        %546 = vst [vmem:[%s290 + $0x8] sm:$0xff] %v538
        %547 = vst [vmem:[%s290 + $0x10] sm:$0xff] %v539
        %548 = vst [vmem:[%s290 + $0x18] sm:$0xff] %v540
        %549 = vst [vmem:[%s290 + $0x20] sm:$0xff] %v541
        %550 = vst [vmem:[%s290 + $0x28] sm:$0xff] %v542
        %551 = vst [vmem:[%s290 + $0x30] sm:$0xff] %v543
        %552 = vst [vmem:[%s290 + $0x38] sm:$0xff] %v544
        %s553 = smul.u32 8, %s13
        %p554 = scmp.lt.s32.totalorder %s553, 15
        %s555 = scalar_select %p554, %s553, 15
        %s556 = smul.addr %s555, 8
        %s557 = scalar_lea.vmem %s2, %s556
        // Predicated region
        $region52: #{discriminator_forward.5} parent=46 // pred_check
          %p558 = pneg %p78
        $region53: #{discriminator_forward.5} parent=46 // pred_check_branch
          %560 = sbr.rel (%p558) target = $region55
        $region54: #{discriminator_forward.5} parent=46 // pred_region
          %s561 = smul.u32 8, %s13
        $region55: #{discriminator_forward.5} parent=46 // pred_fallthru
          _
      $region47: #{discriminator_forward.5} parent=5 // pred_fallthru
        _
      %p562 = scmp.le.s32.totalorder 2, %s8
      // Predicated region
      $region56: #{discriminator_forward.5} parent=5 // pred_check
        %p563 = pneg %p562
      $region57: #{discriminator_forward.5} parent=5 // pred_check_branch
        %565 = sbr.rel (%p563) target = $region59
      $region58: #{discriminator_forward.5} parent=5 // pred_region
        %s566 = ssub.s32 %s8, 2
        // Predicated region
        $region60: #{discriminator_forward.5} parent=58 // pred_check
          %p567 = pneg %p84
        $region61: #{discriminator_forward.5} parent=58 // pred_check_branch
          %569 = sbr.rel (%p567) target = $region63
        $region62: #{discriminator_forward.5} parent=58 // pred_region
          %s570 = smul.u32 8, %s14
          %p571 = scmp.lt.s32.totalorder %s570, 15
          %s572 = scalar_select %p571, %s570, 15
          %s573 = smul.addr %s572, 8
          %s574 = scalar_lea.vmem %s2, %s573
        $region63: #{discriminator_forward.5} parent=58 // pred_fallthru
          _
      $region59: #{discriminator_forward.5} parent=5 // pred_fallthru
        _
    $region6: #{discriminator_forward.5} parent=1 // loop_footer
      %s12 = sadd.s32 1, %s8
    $region7: #{discriminator_forward.5} parent=1 // loop_footer_branch
      %7 = sbr.rel target = $region3
    $region8: #{discriminator_forward.5} parent=1 // loop_exit
      _

// kernel: discriminator_forward.6
$region0: #{discriminator_forward.6}
  #allocation0 [shape = 'u32[]', space=smem, size = 0x4, offset = 0x4, fixed_abs, tag = 'smem constant byte address 0x4 - core index']
  #allocation1 [shape = 'u32[72,128]{1,0:T(1,128)}', space=vmem, size = 0x9000, scoped, tag = 'internal scratch']
  %s0 = inlined_call_operand.vmem [shape: f32[16,128], index: 0, kind: input, shape index: {}]
  %s1 = inlined_call_operand.vmem [shape: f32[128,512], index: 1, kind: input, shape index: {}]
  %s2 = inlined_call_operand.vmem [shape: f32[16,512], index: 2, kind: output, shape index: {}]
  %s3 = sld [smem:[#allocation0]]
  $region18: #{discriminator_forward.6} parent=0
    _
  %s5 = ssub.s32 1, %s3
  %s6 = scalar_select 0, %s5, %s3
  // Predicated region
  $region2: #{discriminator_forward.6} parent=0 // pred_check
    _
  $region3: #{discriminator_forward.6} parent=0 // pred_check_branch
    %8 = sbr.rel (0) target = $region5
  $region4: #{discriminator_forward.6} parent=0 // pred_region
    _
  $region5: #{discriminator_forward.6} parent=0 // pred_fallthru
    _
  // Predicated region
  $region6: #{discriminator_forward.6} parent=0 // pred_check
    _
  $region7: #{discriminator_forward.6} parent=0 // pred_check_branch
    %10 = sbr.rel (0) target = $region9
  $region8: #{discriminator_forward.6} parent=0 // pred_region
    _
  $region9: #{discriminator_forward.6} parent=0 // pred_fallthru
    _
  %v11 = vld [vmem:[%s1] sm:$0xff]
  %v12 = vld [vmem:[%s1 + $0x8] sm:$0xff]
  %v13 = vld [vmem:[%s1 + $0x10] sm:$0xff]
  %v14 = vld [vmem:[%s1 + $0x18] sm:$0xff]
  %v15 = vld [vmem:[%s1 + $0x20] sm:$0xff]
  %v16 = vld [vmem:[%s1 + $0x28] sm:$0xff]
  %v17 = vld [vmem:[%s1 + $0x30] sm:$0xff]
  %v18 = vld [vmem:[%s1 + $0x38] sm:$0xff]
  %v19 = vld [vmem:[%s1 + $0x40] sm:$0xff]
  %v20 = vld [vmem:[%s1 + $0x48] sm:$0xff]
  %v21 = vld [vmem:[%s1 + $0x50] sm:$0xff]
  %v22 = vld [vmem:[%s1 + $0x58] sm:$0xff]
  %v23 = vld [vmem:[%s1 + $0x60] sm:$0xff]
  %v24 = vld [vmem:[%s1 + $0x68] sm:$0xff]
  %v25 = vld [vmem:[%s1 + $0x70] sm:$0xff]
  %v26 = vld [vmem:[%s1 + $0x78] sm:$0xff]
  %v27 = vld [vmem:[%s1 + $0x80] sm:$0xff]
  %v28 = vld [vmem:[%s1 + $0x88] sm:$0xff]
  %v29 = vld [vmem:[%s1 + $0x90] sm:$0xff]
  %v30 = vld [vmem:[%s1 + $0x98] sm:$0xff]
  %v31 = vld [vmem:[%s1 + $0xa0] sm:$0xff]
  %v32 = vld [vmem:[%s1 + $0xa8] sm:$0xff]
  %v33 = vld [vmem:[%s1 + $0xb0] sm:$0xff]
  %v34 = vld [vmem:[%s1 + $0xb8] sm:$0xff]
  %v35 = vld [vmem:[%s1 + $0xc0] sm:$0xff]
  %v36 = vld [vmem:[%s1 + $0xc8] sm:$0xff]
  %v37 = vld [vmem:[%s1 + $0xd0] sm:$0xff]
  %v38 = vld [vmem:[%s1 + $0xd8] sm:$0xff]
  %v39 = vld [vmem:[%s1 + $0xe0] sm:$0xff]
  %v40 = vld [vmem:[%s1 + $0xe8] sm:$0xff]
  %v41 = vld [vmem:[%s1 + $0xf0] sm:$0xff]
  %v42 = vld [vmem:[%s1 + $0xf8] sm:$0xff]
  %v43 = vld [vmem:[%s1 + $0x100] sm:$0xff]
  %v44 = vld [vmem:[%s1 + $0x108] sm:$0xff]
  %v45 = vld [vmem:[%s1 + $0x110] sm:$0xff]
  %v46 = vld [vmem:[%s1 + $0x118] sm:$0xff]
  %v47 = vld [vmem:[%s1 + $0x120] sm:$0xff]
  %v48 = vld [vmem:[%s1 + $0x128] sm:$0xff]
  %v49 = vld [vmem:[%s1 + $0x130] sm:$0xff]
  %v50 = vld [vmem:[%s1 + $0x138] sm:$0xff]
  %v51 = vld [vmem:[%s1 + $0x140] sm:$0xff]
  %v52 = vld [vmem:[%s1 + $0x148] sm:$0xff]
  %v53 = vld [vmem:[%s1 + $0x150] sm:$0xff]
  %v54 = vld [vmem:[%s1 + $0x158] sm:$0xff]
  %v55 = vld [vmem:[%s1 + $0x160] sm:$0xff]
  %v56 = vld [vmem:[%s1 + $0x168] sm:$0xff]
  %v57 = vld [vmem:[%s1 + $0x170] sm:$0xff]
  %v58 = vld [vmem:[%s1 + $0x178] sm:$0xff]
  %v59 = vld [vmem:[%s1 + $0x180] sm:$0xff]
  %v60 = vld [vmem:[%s1 + $0x188] sm:$0xff]
  %v61 = vld [vmem:[%s1 + $0x190] sm:$0xff]
  %v62 = vld [vmem:[%s1 + $0x198] sm:$0xff]
  %v63 = vld [vmem:[%s1 + $0x1a0] sm:$0xff]
  %v64 = vld [vmem:[%s1 + $0x1a8] sm:$0xff]
  %v65 = vld [vmem:[%s1 + $0x1b0] sm:$0xff]
  %v66 = vld [vmem:[%s1 + $0x1b8] sm:$0xff]
  %v67 = vld [vmem:[%s1 + $0x1c0] sm:$0xff]
  %v68 = vld [vmem:[%s1 + $0x1c8] sm:$0xff]
  %v69 = vld [vmem:[%s1 + $0x1d0] sm:$0xff]
  %v70 = vld [vmem:[%s1 + $0x1d8] sm:$0xff]
  %v71 = vld [vmem:[%s1 + $0x1e0] sm:$0xff]
  %v72 = vld [vmem:[%s1 + $0x1e8] sm:$0xff]
  %v73 = vld [vmem:[%s1 + $0x1f0] sm:$0xff]
  %v74 = vld [vmem:[%s1 + $0x1f8] sm:$0xff]
  %v75 = vld [vmem:[%s0] sm:$0xff]
  %v76 = vld [vmem:[%s0 + $0x8] sm:$0xff]
  %77 = vmatpush.msra.mxu0 %v71
  %78 = vmatpush.msra.mxu0 %v67
  %79 = vmatpush.msra.mxu0 %v63
  %80 = vmatpush.msra.mxu0 %v59
  %81 = vmatpush.msra.mxu0 %v55
  %82 = vmatpush.msra.mxu0 %v51
  %83 = vmatpush.msra.mxu0 %v47
  %84 = vmatpush.msra.mxu0 %v43
  %85 = vmatpush.msra.mxu0 %v39
  %86 = vmatpush.msra.mxu0 %v35
  %87 = vmatpush.msra.mxu0 %v31
  %88 = vmatpush.msra.mxu0 %v27
  %89 = vmatpush.msra.mxu0 %v23
  %90 = vmatpush.msra.mxu0 %v19
  %91 = vmatpush.msra.mxu0 %v15
  %92 = vmatpush.msra.mxu0 %v11
  %93 = vmatmul.f32.gmra.mxu0 %v75
  %v94 = vpop.f32.mrf.mxu0
  %v95 = vadd.f32 0.0, %v94
  %96 = vmatmul.f32.gmra.mxu0 %v76
  %v97 = vpop.f32.mrf.mxu0
  %v98 = vadd.f32 0.0, %v97
  %99 = vdwg.mxu0
  %100 = vmatpush.msra.mxu0 %v72
  %101 = vmatpush.msra.mxu0 %v68
  %102 = vmatpush.msra.mxu0 %v64
  %103 = vmatpush.msra.mxu0 %v60
  %104 = vmatpush.msra.mxu0 %v56
  %105 = vmatpush.msra.mxu0 %v52
  %106 = vmatpush.msra.mxu0 %v48
  %107 = vmatpush.msra.mxu0 %v44
  %108 = vmatpush.msra.mxu0 %v40
  %109 = vmatpush.msra.mxu0 %v36
  %110 = vmatpush.msra.mxu0 %v32
  %111 = vmatpush.msra.mxu0 %v28
  %112 = vmatpush.msra.mxu0 %v24
  %113 = vmatpush.msra.mxu0 %v20
  %114 = vmatpush.msra.mxu0 %v16
  %115 = vmatpush.msra.mxu0 %v12
  %116 = vmatmul.f32.gmra.mxu0 %v75
  %v117 = vpop.f32.mrf.mxu0
  %v118 = vadd.f32 0.0, %v117
  %119 = vmatmul.f32.gmra.mxu0 %v76
  %v120 = vpop.f32.mrf.mxu0
  %v121 = vadd.f32 0.0, %v120
  %122 = vdwg.mxu0
  %123 = vmatpush.msra.mxu0 %v73
  %124 = vmatpush.msra.mxu0 %v69
  %125 = vmatpush.msra.mxu0 %v65
  %126 = vmatpush.msra.mxu0 %v61
  %127 = vmatpush.msra.mxu0 %v57
  %128 = vmatpush.msra.mxu0 %v53
  %129 = vmatpush.msra.mxu0 %v49
  %130 = vmatpush.msra.mxu0 %v45
  %131 = vmatpush.msra.mxu0 %v41
  %132 = vmatpush.msra.mxu0 %v37
  %133 = vmatpush.msra.mxu0 %v33
  %134 = vmatpush.msra.mxu0 %v29
  %135 = vmatpush.msra.mxu0 %v25
  %136 = vmatpush.msra.mxu0 %v21
  %137 = vmatpush.msra.mxu0 %v17
  %138 = vmatpush.msra.mxu0 %v13
  %139 = vmatmul.f32.gmra.mxu0 %v75
  %v140 = vpop.f32.mrf.mxu0
  %v141 = vadd.f32 0.0, %v140
  %142 = vmatmul.f32.gmra.mxu0 %v76
  %v143 = vpop.f32.mrf.mxu0
  %v144 = vadd.f32 0.0, %v143
  %145 = vdwg.mxu0
  %146 = vmatpush.msra.mxu0 %v74
  %147 = vmatpush.msra.mxu0 %v70
  %148 = vmatpush.msra.mxu0 %v66
  %149 = vmatpush.msra.mxu0 %v62
  %150 = vmatpush.msra.mxu0 %v58
  %151 = vmatpush.msra.mxu0 %v54
  %152 = vmatpush.msra.mxu0 %v50
  %153 = vmatpush.msra.mxu0 %v46
  %154 = vmatpush.msra.mxu0 %v42
  %155 = vmatpush.msra.mxu0 %v38
  %156 = vmatpush.msra.mxu0 %v34
  %157 = vmatpush.msra.mxu0 %v30
  %158 = vmatpush.msra.mxu0 %v26
  %159 = vmatpush.msra.mxu0 %v22
  %160 = vmatpush.msra.mxu0 %v18
  %161 = vmatpush.msra.mxu0 %v14
  %162 = vmatmul.f32.gmra.mxu0 %v75
  %v163 = vpop.f32.mrf.mxu0
  %v164 = vadd.f32 0.0, %v163
  %165 = vmatmul.f32.gmra.mxu0 %v76
  %v166 = vpop.f32.mrf.mxu0
  %v167 = vadd.f32 0.0, %v166
  %168 = vdwg.mxu0
  %169 = vst [vmem:[%s2] sm:$0xff] %v95
  %170 = vst [vmem:[%s2 + $0x8] sm:$0xff] %v118
  %171 = vst [vmem:[%s2 + $0x10] sm:$0xff] %v141
  %172 = vst [vmem:[%s2 + $0x18] sm:$0xff] %v164
  %173 = vst [vmem:[%s2 + $0x20] sm:$0xff] %v98
  %174 = vst [vmem:[%s2 + $0x28] sm:$0xff] %v121
  %175 = vst [vmem:[%s2 + $0x30] sm:$0xff] %v144
  %176 = vst [vmem:[%s2 + $0x38] sm:$0xff] %v167
  // Predicated region
  $region10: #{discriminator_forward.6} parent=0 // pred_check
    _
  $region11: #{discriminator_forward.6} parent=0 // pred_check_branch
    %178 = sbr.rel (0) target = $region13
  $region12: #{discriminator_forward.6} parent=0 // pred_region
    _
  $region13: #{discriminator_forward.6} parent=0 // pred_fallthru
    _
  // Predicated region
  $region14: #{discriminator_forward.6} parent=0 // pred_check
    _
  $region15: #{discriminator_forward.6} parent=0 // pred_check_branch
    %180 = sbr.rel (0) target = $region17
  $region16: #{discriminator_forward.6} parent=0 // pred_region
    _
  $region17: #{discriminator_forward.6} parent=0 // pred_fallthru
    _

// kernel: discriminator_forward.7
$region0: #{discriminator_forward.7}
  #allocation0 [shape = 'u32[]', space=smem, size = 0x4, offset = 0x4, fixed_abs, tag = 'smem constant byte address 0x4 - core index']
  #allocation1 [shape = 'u32[72,128]{1,0:T(1,128)}', space=vmem, size = 0x9000, scoped, tag = 'internal scratch']
  %s0 = inlined_call_operand.vmem [shape: f32[32,256], index: 0, kind: input, shape index: {}]
  %s1 = inlined_call_operand.vmem [shape: f32[256,128], index: 1, kind: input, shape index: {}]
  %s2 = inlined_call_operand.vmem [shape: f32[256,1], index: 2, kind: input, shape index: {}]
  %s3 = inlined_call_operand.vmem [shape: f32[256,1], index: 3, kind: input, shape index: {}]
  %s4 = inlined_call_operand.vmem [shape: f32[32,128], index: 4, kind: output, shape index: {}]
  %s5 = sld [smem:[#allocation0]]
  $region26: #{discriminator_forward.7} parent=0
    _
  %s7 = ssub.s32 1, %s5
  %s8 = scalar_select 0, %s7, %s5
  // Predicated region
  $region2: #{discriminator_forward.7} parent=0 // pred_check
    _
  $region3: #{discriminator_forward.7} parent=0 // pred_check_branch
    %10 = sbr.rel (0) target = $region5
  $region4: #{discriminator_forward.7} parent=0 // pred_region
    _
  $region5: #{discriminator_forward.7} parent=0 // pred_fallthru
    _
  // Predicated region
  $region6: #{discriminator_forward.7} parent=0 // pred_check
    _
  $region7: #{discriminator_forward.7} parent=0 // pred_check_branch
    %12 = sbr.rel (0) target = $region9
  $region8: #{discriminator_forward.7} parent=0 // pred_region
    _
  $region9: #{discriminator_forward.7} parent=0 // pred_fallthru
    _
  // Predicated region
  $region10: #{discriminator_forward.7} parent=0 // pred_check
    _
  $region11: #{discriminator_forward.7} parent=0 // pred_check_branch
    %14 = sbr.rel (0) target = $region13
  $region12: #{discriminator_forward.7} parent=0 // pred_region
    _
  $region13: #{discriminator_forward.7} parent=0 // pred_fallthru
    _
  // Predicated region
  $region14: #{discriminator_forward.7} parent=0 // pred_check
    _
  $region15: #{discriminator_forward.7} parent=0 // pred_check_branch
    %16 = sbr.rel (0) target = $region17
  $region16: #{discriminator_forward.7} parent=0 // pred_region
    _
  $region17: #{discriminator_forward.7} parent=0 // pred_fallthru
    _
  %v17 = vld [vmem:[%s1] sm:$0xff]
  %v18 = vld [vmem:[%s1 + $0x8] sm:$0xff]
  %v19 = vld [vmem:[%s1 + $0x10] sm:$0xff]
  %v20 = vld [vmem:[%s1 + $0x18] sm:$0xff]
  %v21 = vld [vmem:[%s1 + $0x20] sm:$0xff]
  %v22 = vld [vmem:[%s1 + $0x28] sm:$0xff]
  %v23 = vld [vmem:[%s1 + $0x30] sm:$0xff]
  %v24 = vld [vmem:[%s1 + $0x38] sm:$0xff]
  %v25 = vld [vmem:[%s1 + $0x40] sm:$0xff]
  %v26 = vld [vmem:[%s1 + $0x48] sm:$0xff]
  %v27 = vld [vmem:[%s1 + $0x50] sm:$0xff]
  %v28 = vld [vmem:[%s1 + $0x58] sm:$0xff]
  %v29 = vld [vmem:[%s1 + $0x60] sm:$0xff]
  %v30 = vld [vmem:[%s1 + $0x68] sm:$0xff]
  %v31 = vld [vmem:[%s1 + $0x70] sm:$0xff]
  %v32 = vld [vmem:[%s1 + $0x78] sm:$0xff]
  %v33 = vld [vmem:[%s1 + $0x80] sm:$0xff]
  %v34 = vld [vmem:[%s1 + $0x88] sm:$0xff]
  %v35 = vld [vmem:[%s1 + $0x90] sm:$0xff]
  %v36 = vld [vmem:[%s1 + $0x98] sm:$0xff]
  %v37 = vld [vmem:[%s1 + $0xa0] sm:$0xff]
  %v38 = vld [vmem:[%s1 + $0xa8] sm:$0xff]
  %v39 = vld [vmem:[%s1 + $0xb0] sm:$0xff]
  %v40 = vld [vmem:[%s1 + $0xb8] sm:$0xff]
  %v41 = vld [vmem:[%s1 + $0xc0] sm:$0xff]
  %v42 = vld [vmem:[%s1 + $0xc8] sm:$0xff]
  %v43 = vld [vmem:[%s1 + $0xd0] sm:$0xff]
  %v44 = vld [vmem:[%s1 + $0xd8] sm:$0xff]
  %v45 = vld [vmem:[%s1 + $0xe0] sm:$0xff]
  %v46 = vld [vmem:[%s1 + $0xe8] sm:$0xff]
  %v47 = vld [vmem:[%s1 + $0xf0] sm:$0xff]
  %v48 = vld [vmem:[%s1 + $0xf8] sm:$0xff]
  %v49 = vld [vmem:[%s2] sm:$0xff]
  %v50 = vld [vmem:[%s2 + $0x8] sm:$0xff]
  %v51 = vld [vmem:[%s2 + $0x10] sm:$0xff]
  %v52 = vld [vmem:[%s2 + $0x18] sm:$0xff]
  %v53 = vld [vmem:[%s2 + $0x20] sm:$0xff]
  %v54 = vld [vmem:[%s2 + $0x28] sm:$0xff]
  %v55 = vld [vmem:[%s2 + $0x30] sm:$0xff]
  %v56 = vld [vmem:[%s2 + $0x38] sm:$0xff]
  %v57 = vld [vmem:[%s2 + $0x40] sm:$0xff]
  %v58 = vld [vmem:[%s2 + $0x48] sm:$0xff]
  %v59 = vld [vmem:[%s2 + $0x50] sm:$0xff]
  %v60 = vld [vmem:[%s2 + $0x58] sm:$0xff]
  %v61 = vld [vmem:[%s2 + $0x60] sm:$0xff]
  %v62 = vld [vmem:[%s2 + $0x68] sm:$0xff]
  %v63 = vld [vmem:[%s2 + $0x70] sm:$0xff]
  %v64 = vld [vmem:[%s2 + $0x78] sm:$0xff]
  %v65 = vld [vmem:[%s2 + $0x80] sm:$0xff]
  %v66 = vld [vmem:[%s2 + $0x88] sm:$0xff]
  %v67 = vld [vmem:[%s2 + $0x90] sm:$0xff]
  %v68 = vld [vmem:[%s2 + $0x98] sm:$0xff]
  %v69 = vld [vmem:[%s2 + $0xa0] sm:$0xff]
  %v70 = vld [vmem:[%s2 + $0xa8] sm:$0xff]
  %v71 = vld [vmem:[%s2 + $0xb0] sm:$0xff]
  %v72 = vld [vmem:[%s2 + $0xb8] sm:$0xff]
  %v73 = vld [vmem:[%s2 + $0xc0] sm:$0xff]
  %v74 = vld [vmem:[%s2 + $0xc8] sm:$0xff]
  %v75 = vld [vmem:[%s2 + $0xd0] sm:$0xff]
  %v76 = vld [vmem:[%s2 + $0xd8] sm:$0xff]
  %v77 = vld [vmem:[%s2 + $0xe0] sm:$0xff]
  %v78 = vld [vmem:[%s2 + $0xe8] sm:$0xff]
  %v79 = vld [vmem:[%s2 + $0xf0] sm:$0xff]
  %v80 = vld [vmem:[%s2 + $0xf8] sm:$0xff]
  %82 = vset.pattern.permute.xlu0 0
  %83 = vperm.xlu0 %82, %v49
  %v84 = vpop.permute.xlu0 %83
  %87 = vset.pattern.permute.xlu0 0
  %88 = vperm.xlu0 %87, %v50
  %v89 = vpop.permute.xlu0 %88
  %92 = vset.pattern.permute.xlu0 0
  %93 = vperm.xlu0 %92, %v51
  %v94 = vpop.permute.xlu0 %93
  %97 = vset.pattern.permute.xlu0 0
  %98 = vperm.xlu0 %97, %v52
  %v99 = vpop.permute.xlu0 %98
  %102 = vset.pattern.permute.xlu0 0
  %103 = vperm.xlu0 %102, %v53
  %v104 = vpop.permute.xlu0 %103
  %107 = vset.pattern.permute.xlu0 0
  %108 = vperm.xlu0 %107, %v54
  %v109 = vpop.permute.xlu0 %108
  %112 = vset.pattern.permute.xlu0 0
  %113 = vperm.xlu0 %112, %v55
  %v114 = vpop.permute.xlu0 %113
  %117 = vset.pattern.permute.xlu0 0
  %118 = vperm.xlu0 %117, %v56
  %v119 = vpop.permute.xlu0 %118
  %122 = vset.pattern.permute.xlu0 0
  %123 = vperm.xlu0 %122, %v57
  %v124 = vpop.permute.xlu0 %123
  %127 = vset.pattern.permute.xlu0 0
  %128 = vperm.xlu0 %127, %v58
  %v129 = vpop.permute.xlu0 %128
  %132 = vset.pattern.permute.xlu0 0
  %133 = vperm.xlu0 %132, %v59
  %v134 = vpop.permute.xlu0 %133
  %137 = vset.pattern.permute.xlu0 0
  %138 = vperm.xlu0 %137, %v60
  %v139 = vpop.permute.xlu0 %138
  %142 = vset.pattern.permute.xlu0 0
  %143 = vperm.xlu0 %142, %v61
  %v144 = vpop.permute.xlu0 %143
  %147 = vset.pattern.permute.xlu0 0
  %148 = vperm.xlu0 %147, %v62
  %v149 = vpop.permute.xlu0 %148
  %152 = vset.pattern.permute.xlu0 0
  %153 = vperm.xlu0 %152, %v63
  %v154 = vpop.permute.xlu0 %153
  %157 = vset.pattern.permute.xlu0 0
  %158 = vperm.xlu0 %157, %v64
  %v159 = vpop.permute.xlu0 %158
  %162 = vset.pattern.permute.xlu0 0
  %163 = vperm.xlu0 %162, %v65
  %v164 = vpop.permute.xlu0 %163
  %167 = vset.pattern.permute.xlu0 0
  %168 = vperm.xlu0 %167, %v66
  %v169 = vpop.permute.xlu0 %168
  %172 = vset.pattern.permute.xlu0 0
  %173 = vperm.xlu0 %172, %v67
  %v174 = vpop.permute.xlu0 %173
  %177 = vset.pattern.permute.xlu0 0
  %178 = vperm.xlu0 %177, %v68
  %v179 = vpop.permute.xlu0 %178
  %182 = vset.pattern.permute.xlu0 0
  %183 = vperm.xlu0 %182, %v69
  %v184 = vpop.permute.xlu0 %183
  %187 = vset.pattern.permute.xlu0 0
  %188 = vperm.xlu0 %187, %v70
  %v189 = vpop.permute.xlu0 %188
  %192 = vset.pattern.permute.xlu0 0
  %193 = vperm.xlu0 %192, %v71
  %v194 = vpop.permute.xlu0 %193
  %197 = vset.pattern.permute.xlu0 0
  %198 = vperm.xlu0 %197, %v72
  %v199 = vpop.permute.xlu0 %198
  %202 = vset.pattern.permute.xlu0 0
  %203 = vperm.xlu0 %202, %v73
  %v204 = vpop.permute.xlu0 %203
  %207 = vset.pattern.permute.xlu0 0
  %208 = vperm.xlu0 %207, %v74
  %v209 = vpop.permute.xlu0 %208
  %212 = vset.pattern.permute.xlu0 0
  %213 = vperm.xlu0 %212, %v75
  %v214 = vpop.permute.xlu0 %213
  %217 = vset.pattern.permute.xlu0 0
  %218 = vperm.xlu0 %217, %v76
  %v219 = vpop.permute.xlu0 %218
  %222 = vset.pattern.permute.xlu0 0
  %223 = vperm.xlu0 %222, %v77
  %v224 = vpop.permute.xlu0 %223
  %227 = vset.pattern.permute.xlu0 0
  %228 = vperm.xlu0 %227, %v78
  %v229 = vpop.permute.xlu0 %228
  %232 = vset.pattern.permute.xlu0 0
  %233 = vperm.xlu0 %232, %v79
  %v234 = vpop.permute.xlu0 %233
  %237 = vset.pattern.permute.xlu0 0
  %238 = vperm.xlu0 %237, %v80
  %v239 = vpop.permute.xlu0 %238
  %v241 = vmul.f32 %v17, %v84
  %v242 = vmul.f32 %v18, %v89
  %v243 = vmul.f32 %v19, %v94
  %v244 = vmul.f32 %v20, %v99
  %v245 = vmul.f32 %v21, %v104
  %v246 = vmul.f32 %v22, %v109
  %v247 = vmul.f32 %v23, %v114
  %v248 = vmul.f32 %v24, %v119
  %v249 = vmul.f32 %v25, %v124
  %v250 = vmul.f32 %v26, %v129
  %v251 = vmul.f32 %v27, %v134
  %v252 = vmul.f32 %v28, %v139
  %v253 = vmul.f32 %v29, %v144
  %v254 = vmul.f32 %v30, %v149
  %v255 = vmul.f32 %v31, %v154
  %v256 = vmul.f32 %v32, %v159
  %v257 = vmul.f32 %v33, %v164
  %v258 = vmul.f32 %v34, %v169
  %v259 = vmul.f32 %v35, %v174
  %v260 = vmul.f32 %v36, %v179
  %v261 = vmul.f32 %v37, %v184
  %v262 = vmul.f32 %v38, %v189
  %v263 = vmul.f32 %v39, %v194
  %v264 = vmul.f32 %v40, %v199
  %v265 = vmul.f32 %v41, %v204
  %v266 = vmul.f32 %v42, %v209
  %v267 = vmul.f32 %v43, %v214
  %v268 = vmul.f32 %v44, %v219
  %v269 = vmul.f32 %v45, %v224
  %v270 = vmul.f32 %v46, %v229
  %v271 = vmul.f32 %v47, %v234
  %v272 = vmul.f32 %v48, %v239
  %v273 = vld [vmem:[%s3] sm:$0xff]
  %v274 = vld [vmem:[%s3 + $0x8] sm:$0xff]
  %v275 = vld [vmem:[%s3 + $0x10] sm:$0xff]
  %v276 = vld [vmem:[%s3 + $0x18] sm:$0xff]
  %v277 = vld [vmem:[%s3 + $0x20] sm:$0xff]
  %v278 = vld [vmem:[%s3 + $0x28] sm:$0xff]
  %v279 = vld [vmem:[%s3 + $0x30] sm:$0xff]
  %v280 = vld [vmem:[%s3 + $0x38] sm:$0xff]
  %v281 = vld [vmem:[%s3 + $0x40] sm:$0xff]
  %v282 = vld [vmem:[%s3 + $0x48] sm:$0xff]
  %v283 = vld [vmem:[%s3 + $0x50] sm:$0xff]
  %v284 = vld [vmem:[%s3 + $0x58] sm:$0xff]
  %v285 = vld [vmem:[%s3 + $0x60] sm:$0xff]
  %v286 = vld [vmem:[%s3 + $0x68] sm:$0xff]
  %v287 = vld [vmem:[%s3 + $0x70] sm:$0xff]
  %v288 = vld [vmem:[%s3 + $0x78] sm:$0xff]
  %v289 = vld [vmem:[%s3 + $0x80] sm:$0xff]
  %v290 = vld [vmem:[%s3 + $0x88] sm:$0xff]
  %v291 = vld [vmem:[%s3 + $0x90] sm:$0xff]
  %v292 = vld [vmem:[%s3 + $0x98] sm:$0xff]
  %v293 = vld [vmem:[%s3 + $0xa0] sm:$0xff]
  %v294 = vld [vmem:[%s3 + $0xa8] sm:$0xff]
  %v295 = vld [vmem:[%s3 + $0xb0] sm:$0xff]
  %v296 = vld [vmem:[%s3 + $0xb8] sm:$0xff]
  %v297 = vld [vmem:[%s3 + $0xc0] sm:$0xff]
  %v298 = vld [vmem:[%s3 + $0xc8] sm:$0xff]
  %v299 = vld [vmem:[%s3 + $0xd0] sm:$0xff]
  %v300 = vld [vmem:[%s3 + $0xd8] sm:$0xff]
  %v301 = vld [vmem:[%s3 + $0xe0] sm:$0xff]
  %v302 = vld [vmem:[%s3 + $0xe8] sm:$0xff]
  %v303 = vld [vmem:[%s3 + $0xf0] sm:$0xff]
  %v304 = vld [vmem:[%s3 + $0xf8] sm:$0xff]
  %306 = vset.pattern.permute.xlu0 0
  %307 = vperm.xlu0 %306, %v273
  %v308 = vpop.permute.xlu0 %307
  %311 = vset.pattern.permute.xlu0 0
  %312 = vperm.xlu0 %311, %v274
  %v313 = vpop.permute.xlu0 %312
  %316 = vset.pattern.permute.xlu0 0
  %317 = vperm.xlu0 %316, %v275
  %v318 = vpop.permute.xlu0 %317
  %321 = vset.pattern.permute.xlu0 0
  %322 = vperm.xlu0 %321, %v276
  %v323 = vpop.permute.xlu0 %322
  %326 = vset.pattern.permute.xlu0 0
  %327 = vperm.xlu0 %326, %v277
  %v328 = vpop.permute.xlu0 %327
  %331 = vset.pattern.permute.xlu0 0
  %332 = vperm.xlu0 %331, %v278
  %v333 = vpop.permute.xlu0 %332
  %336 = vset.pattern.permute.xlu0 0
  %337 = vperm.xlu0 %336, %v279
  %v338 = vpop.permute.xlu0 %337
  %341 = vset.pattern.permute.xlu0 0
  %342 = vperm.xlu0 %341, %v280
  %v343 = vpop.permute.xlu0 %342
  %346 = vset.pattern.permute.xlu0 0
  %347 = vperm.xlu0 %346, %v281
  %v348 = vpop.permute.xlu0 %347
  %351 = vset.pattern.permute.xlu0 0
  %352 = vperm.xlu0 %351, %v282
  %v353 = vpop.permute.xlu0 %352
  %356 = vset.pattern.permute.xlu0 0
  %357 = vperm.xlu0 %356, %v283
  %v358 = vpop.permute.xlu0 %357
  %361 = vset.pattern.permute.xlu0 0
  %362 = vperm.xlu0 %361, %v284
  %v363 = vpop.permute.xlu0 %362
  %366 = vset.pattern.permute.xlu0 0
  %367 = vperm.xlu0 %366, %v285
  %v368 = vpop.permute.xlu0 %367
  %371 = vset.pattern.permute.xlu0 0
  %372 = vperm.xlu0 %371, %v286
  %v373 = vpop.permute.xlu0 %372
  %376 = vset.pattern.permute.xlu0 0
  %377 = vperm.xlu0 %376, %v287
  %v378 = vpop.permute.xlu0 %377
  %381 = vset.pattern.permute.xlu0 0
  %382 = vperm.xlu0 %381, %v288
  %v383 = vpop.permute.xlu0 %382
  %386 = vset.pattern.permute.xlu0 0
  %387 = vperm.xlu0 %386, %v289
  %v388 = vpop.permute.xlu0 %387
  %391 = vset.pattern.permute.xlu0 0
  %392 = vperm.xlu0 %391, %v290
  %v393 = vpop.permute.xlu0 %392
  %396 = vset.pattern.permute.xlu0 0
  %397 = vperm.xlu0 %396, %v291
  %v398 = vpop.permute.xlu0 %397
  %401 = vset.pattern.permute.xlu0 0
  %402 = vperm.xlu0 %401, %v292
  %v403 = vpop.permute.xlu0 %402
  %406 = vset.pattern.permute.xlu0 0
  %407 = vperm.xlu0 %406, %v293
  %v408 = vpop.permute.xlu0 %407
  %411 = vset.pattern.permute.xlu0 0
  %412 = vperm.xlu0 %411, %v294
  %v413 = vpop.permute.xlu0 %412
  %416 = vset.pattern.permute.xlu0 0
  %417 = vperm.xlu0 %416, %v295
  %v418 = vpop.permute.xlu0 %417
  %421 = vset.pattern.permute.xlu0 0
  %422 = vperm.xlu0 %421, %v296
  %v423 = vpop.permute.xlu0 %422
  %426 = vset.pattern.permute.xlu0 0
  %427 = vperm.xlu0 %426, %v297
  %v428 = vpop.permute.xlu0 %427
  %431 = vset.pattern.permute.xlu0 0
  %432 = vperm.xlu0 %431, %v298
  %v433 = vpop.permute.xlu0 %432
  %436 = vset.pattern.permute.xlu0 0
  %437 = vperm.xlu0 %436, %v299
  %v438 = vpop.permute.xlu0 %437
  %441 = vset.pattern.permute.xlu0 0
  %442 = vperm.xlu0 %441, %v300
  %v443 = vpop.permute.xlu0 %442
  %446 = vset.pattern.permute.xlu0 0
  %447 = vperm.xlu0 %446, %v301
  %v448 = vpop.permute.xlu0 %447
  %451 = vset.pattern.permute.xlu0 0
  %452 = vperm.xlu0 %451, %v302
  %v453 = vpop.permute.xlu0 %452
  %456 = vset.pattern.permute.xlu0 0
  %457 = vperm.xlu0 %456, %v303
  %v458 = vpop.permute.xlu0 %457
  %461 = vset.pattern.permute.xlu0 0
  %462 = vperm.xlu0 %461, %v304
  %v463 = vpop.permute.xlu0 %462
  %v465 = vadd.f32 %v241, %v308
  %v466 = vadd.f32 %v242, %v313
  %v467 = vadd.f32 %v243, %v318
  %v468 = vadd.f32 %v244, %v323
  %v469 = vadd.f32 %v245, %v328
  %v470 = vadd.f32 %v246, %v333
  %v471 = vadd.f32 %v247, %v338
  %v472 = vadd.f32 %v248, %v343
  %v473 = vadd.f32 %v249, %v348
  %v474 = vadd.f32 %v250, %v353
  %v475 = vadd.f32 %v251, %v358
  %v476 = vadd.f32 %v252, %v363
  %v477 = vadd.f32 %v253, %v368
  %v478 = vadd.f32 %v254, %v373
  %v479 = vadd.f32 %v255, %v378
  %v480 = vadd.f32 %v256, %v383
  %v481 = vadd.f32 %v257, %v388
  %v482 = vadd.f32 %v258, %v393
  %v483 = vadd.f32 %v259, %v398
  %v484 = vadd.f32 %v260, %v403
  %v485 = vadd.f32 %v261, %v408
  %v486 = vadd.f32 %v262, %v413
  %v487 = vadd.f32 %v263, %v418
  %v488 = vadd.f32 %v264, %v423
  %v489 = vadd.f32 %v265, %v428
  %v490 = vadd.f32 %v266, %v433
  %v491 = vadd.f32 %v267, %v438
  %v492 = vadd.f32 %v268, %v443
  %v493 = vadd.f32 %v269, %v448
  %v494 = vadd.f32 %v270, %v453
  %v495 = vadd.f32 %v271, %v458
  %v496 = vadd.f32 %v272, %v463
  %vm497 = vcmp.ge.f32.partialorder %v465, 0.0
  %vm498 = vcmp.ge.f32.partialorder %v466, 0.0
  %vm499 = vcmp.ge.f32.partialorder %v467, 0.0
  %vm500 = vcmp.ge.f32.partialorder %v468, 0.0
  %vm501 = vcmp.ge.f32.partialorder %v469, 0.0
  %vm502 = vcmp.ge.f32.partialorder %v470, 0.0
  %vm503 = vcmp.ge.f32.partialorder %v471, 0.0
  %vm504 = vcmp.ge.f32.partialorder %v472, 0.0
  %vm505 = vcmp.ge.f32.partialorder %v473, 0.0
  %vm506 = vcmp.ge.f32.partialorder %v474, 0.0
  %vm507 = vcmp.ge.f32.partialorder %v475, 0.0
  %vm508 = vcmp.ge.f32.partialorder %v476, 0.0
  %vm509 = vcmp.ge.f32.partialorder %v477, 0.0
  %vm510 = vcmp.ge.f32.partialorder %v478, 0.0
  %vm511 = vcmp.ge.f32.partialorder %v479, 0.0
  %vm512 = vcmp.ge.f32.partialorder %v480, 0.0
  %vm513 = vcmp.ge.f32.partialorder %v481, 0.0
  %vm514 = vcmp.ge.f32.partialorder %v482, 0.0
  %vm515 = vcmp.ge.f32.partialorder %v483, 0.0
  %vm516 = vcmp.ge.f32.partialorder %v484, 0.0
  %vm517 = vcmp.ge.f32.partialorder %v485, 0.0
  %vm518 = vcmp.ge.f32.partialorder %v486, 0.0
  %vm519 = vcmp.ge.f32.partialorder %v487, 0.0
  %vm520 = vcmp.ge.f32.partialorder %v488, 0.0
  %vm521 = vcmp.ge.f32.partialorder %v489, 0.0
  %vm522 = vcmp.ge.f32.partialorder %v490, 0.0
  %vm523 = vcmp.ge.f32.partialorder %v491, 0.0
  %vm524 = vcmp.ge.f32.partialorder %v492, 0.0
  %vm525 = vcmp.ge.f32.partialorder %v493, 0.0
  %vm526 = vcmp.ge.f32.partialorder %v494, 0.0
  %vm527 = vcmp.ge.f32.partialorder %v495, 0.0
  %vm528 = vcmp.ge.f32.partialorder %v496, 0.0
  %v529 = vmul.f32 %v465, 0.2
  %v530 = vmul.f32 %v466, 0.2
  %v531 = vmul.f32 %v467, 0.2
  %v532 = vmul.f32 %v468, 0.2
  %v533 = vmul.f32 %v469, 0.2
  %v534 = vmul.f32 %v470, 0.2
  %v535 = vmul.f32 %v471, 0.2
  %v536 = vmul.f32 %v472, 0.2
  %v537 = vmul.f32 %v473, 0.2
  %v538 = vmul.f32 %v474, 0.2
  %v539 = vmul.f32 %v475, 0.2
  %v540 = vmul.f32 %v476, 0.2
  %v541 = vmul.f32 %v477, 0.2
  %v542 = vmul.f32 %v478, 0.2
  %v543 = vmul.f32 %v479, 0.2
  %v544 = vmul.f32 %v480, 0.2
  %v545 = vmul.f32 %v481, 0.2
  %v546 = vmul.f32 %v482, 0.2
  %v547 = vmul.f32 %v483, 0.2
  %v548 = vmul.f32 %v484, 0.2
  %v549 = vmul.f32 %v485, 0.2
  %v550 = vmul.f32 %v486, 0.2
  %v551 = vmul.f32 %v487, 0.2
  %v552 = vmul.f32 %v488, 0.2
  %v553 = vmul.f32 %v489, 0.2
  %v554 = vmul.f32 %v490, 0.2
  %v555 = vmul.f32 %v491, 0.2
  %v556 = vmul.f32 %v492, 0.2
  %v557 = vmul.f32 %v493, 0.2
  %v558 = vmul.f32 %v494, 0.2
  %v559 = vmul.f32 %v495, 0.2
  %v560 = vmul.f32 %v496, 0.2
  %v561 = vsel %vm497, %v465, %v529
  %v562 = vsel %vm498, %v466, %v530
  %v563 = vsel %vm499, %v467, %v531
  %v564 = vsel %vm500, %v468, %v532
  %v565 = vsel %vm501, %v469, %v533
  %v566 = vsel %vm502, %v470, %v534
  %v567 = vsel %vm503, %v471, %v535
  %v568 = vsel %vm504, %v472, %v536
  %v569 = vsel %vm505, %v473, %v537
  %v570 = vsel %vm506, %v474, %v538
  %v571 = vsel %vm507, %v475, %v539
  %v572 = vsel %vm508, %v476, %v540
  %v573 = vsel %vm509, %v477, %v541
  %v574 = vsel %vm510, %v478, %v542
  %v575 = vsel %vm511, %v479, %v543
  %v576 = vsel %vm512, %v480, %v544
  %v577 = vsel %vm513, %v481, %v545
  %v578 = vsel %vm514, %v482, %v546
  %v579 = vsel %vm515, %v483, %v547
  %v580 = vsel %vm516, %v484, %v548
  %v581 = vsel %vm517, %v485, %v549
  %v582 = vsel %vm518, %v486, %v550
  %v583 = vsel %vm519, %v487, %v551
  %v584 = vsel %vm520, %v488, %v552
  %v585 = vsel %vm521, %v489, %v553
  %v586 = vsel %vm522, %v490, %v554
  %v587 = vsel %vm523, %v491, %v555
  %v588 = vsel %vm524, %v492, %v556
  %v589 = vsel %vm525, %v493, %v557
  %v590 = vsel %vm526, %v494, %v558
  %v591 = vsel %vm527, %v495, %v559
  %v592 = vsel %vm528, %v496, %v560
  %v593 = vld [vmem:[%s0] sm:$0xff]
  %v594 = vld [vmem:[%s0 + $0x8] sm:$0xff]
  %v595 = vld [vmem:[%s0 + $0x10] sm:$0xff]
  %v596 = vld [vmem:[%s0 + $0x18] sm:$0xff]
  %v597 = vld [vmem:[%s0 + $0x20] sm:$0xff]
  %v598 = vld [vmem:[%s0 + $0x28] sm:$0xff]
  %v599 = vld [vmem:[%s0 + $0x30] sm:$0xff]
  %v600 = vld [vmem:[%s0 + $0x38] sm:$0xff]
  %601 = vmatpush.msra.mxu0 %v576
  %602 = vmatpush.msra.mxu0 %v575
  %603 = vmatpush.msra.mxu0 %v574
  %604 = vmatpush.msra.mxu0 %v573
  %605 = vmatpush.msra.mxu0 %v572
  %606 = vmatpush.msra.mxu0 %v571
  %607 = vmatpush.msra.mxu0 %v570
  %608 = vmatpush.msra.mxu0 %v569
  %609 = vmatpush.msra.mxu0 %v568
  %610 = vmatpush.msra.mxu0 %v567
  %611 = vmatpush.msra.mxu0 %v566
  %612 = vmatpush.msra.mxu0 %v565
  %613 = vmatpush.msra.mxu0 %v564
  %614 = vmatpush.msra.mxu0 %v563
  %615 = vmatpush.msra.mxu0 %v562
  %616 = vmatpush.msra.mxu0 %v561
  %617 = vmatmul.f32.gmra.mxu0 %v593
  %v618 = vpop.f32.mrf.mxu0
  %v619 = vadd.f32 0.0, %v618
  %620 = vmatmul.f32.gmra.mxu0 %v595
  %v621 = vpop.f32.mrf.mxu0
  %v622 = vadd.f32 0.0, %v621
  %623 = vmatmul.f32.gmra.mxu0 %v597
  %v624 = vpop.f32.mrf.mxu0
  %v625 = vadd.f32 0.0, %v624
  %626 = vmatmul.f32.gmra.mxu0 %v599
  %v627 = vpop.f32.mrf.mxu0
  %v628 = vadd.f32 0.0, %v627
  %629 = vdwg.mxu0
  %630 = vmatpush.msra.mxu0 %v592
  %631 = vmatpush.msra.mxu0 %v591
  %632 = vmatpush.msra.mxu0 %v590
  %633 = vmatpush.msra.mxu0 %v589
  %634 = vmatpush.msra.mxu0 %v588
  %635 = vmatpush.msra.mxu0 %v587
  %636 = vmatpush.msra.mxu0 %v586
  %637 = vmatpush.msra.mxu0 %v585
  %638 = vmatpush.msra.mxu0 %v584
  %639 = vmatpush.msra.mxu0 %v583
  %640 = vmatpush.msra.mxu0 %v582
  %641 = vmatpush.msra.mxu0 %v581
  %642 = vmatpush.msra.mxu0 %v580
  %643 = vmatpush.msra.mxu0 %v579
  %644 = vmatpush.msra.mxu0 %v578
  %645 = vmatpush.msra.mxu0 %v577
  %646 = vmatmul.f32.gmra.mxu0 %v594
  %v647 = vpop.f32.mrf.mxu0
  %v648 = vadd.f32 %v619, %v647
  %649 = vmatmul.f32.gmra.mxu0 %v596
  %v650 = vpop.f32.mrf.mxu0
  %v651 = vadd.f32 %v622, %v650
  %652 = vmatmul.f32.gmra.mxu0 %v598
  %v653 = vpop.f32.mrf.mxu0
  %v654 = vadd.f32 %v625, %v653
  %655 = vmatmul.f32.gmra.mxu0 %v600
  %v656 = vpop.f32.mrf.mxu0
  %v657 = vadd.f32 %v628, %v656
  %658 = vdwg.mxu0
  %659 = vst [vmem:[%s4] sm:$0xff] %v648
  %660 = vst [vmem:[%s4 + $0x8] sm:$0xff] %v651
  %661 = vst [vmem:[%s4 + $0x10] sm:$0xff] %v654
  %662 = vst [vmem:[%s4 + $0x18] sm:$0xff] %v657
  // Predicated region
  $region18: #{discriminator_forward.7} parent=0 // pred_check
    _
  $region19: #{discriminator_forward.7} parent=0 // pred_check_branch
    %664 = sbr.rel (0) target = $region21
  $region20: #{discriminator_forward.7} parent=0 // pred_region
    _
  $region21: #{discriminator_forward.7} parent=0 // pred_fallthru
    _
  // Predicated region
  $region22: #{discriminator_forward.7} parent=0 // pred_check
    _
  $region23: #{discriminator_forward.7} parent=0 // pred_check_branch
    %666 = sbr.rel (0) target = $region25
  $region24: #{discriminator_forward.7} parent=0 // pred_region
    _
  $region25: #{discriminator_forward.7} parent=0 // pred_fallthru
    _

// kernel: discriminator_forward.8
$region0: #{discriminator_forward.8}
  #allocation0 [shape = 'u32[]', space=smem, size = 0x4, offset = 0x4, fixed_abs, tag = 'smem constant byte address 0x4 - core index']
  #allocation1 [shape = 'u32[72,128]{1,0:T(1,128)}', space=vmem, size = 0x9000, scoped, tag = 'internal scratch']
  %s0 = inlined_call_operand.vmem [shape: f32[64,512], index: 0, kind: input, shape index: {}]
  %s1 = inlined_call_operand.vmem [shape: f32[512,32], index: 1, kind: input, shape index: {}]
  %s2 = inlined_call_operand.vmem [shape: f32[512,1], index: 2, kind: input, shape index: {}]
  %s3 = inlined_call_operand.vmem [shape: f32[512,1], index: 3, kind: input, shape index: {}]
  %s4 = inlined_call_operand.vmem [shape: f32[64,32], index: 4, kind: output, shape index: {}]
  %s5 = sld [smem:[#allocation0]]
  $region26: #{discriminator_forward.8} parent=0
    _
  %s7 = ssub.s32 1, %s5
  %s8 = scalar_select 0, %s7, %s5
  // Predicated region
  $region2: #{discriminator_forward.8} parent=0 // pred_check
    _
  $region3: #{discriminator_forward.8} parent=0 // pred_check_branch
    %10 = sbr.rel (0) target = $region5
  $region4: #{discriminator_forward.8} parent=0 // pred_region
    _
  $region5: #{discriminator_forward.8} parent=0 // pred_fallthru
    _
  // Predicated region
  $region6: #{discriminator_forward.8} parent=0 // pred_check
    _
  $region7: #{discriminator_forward.8} parent=0 // pred_check_branch
    %12 = sbr.rel (0) target = $region9
  $region8: #{discriminator_forward.8} parent=0 // pred_region
    _
  $region9: #{discriminator_forward.8} parent=0 // pred_fallthru
    _
  // Predicated region
  $region10: #{discriminator_forward.8} parent=0 // pred_check
    _
  $region11: #{discriminator_forward.8} parent=0 // pred_check_branch
    %14 = sbr.rel (0) target = $region13
  $region12: #{discriminator_forward.8} parent=0 // pred_region
    _
  $region13: #{discriminator_forward.8} parent=0 // pred_fallthru
    _
  // Predicated region
  $region14: #{discriminator_forward.8} parent=0 // pred_check
    _
  $region15: #{discriminator_forward.8} parent=0 // pred_check_branch
    %16 = sbr.rel (0) target = $region17
  $region16: #{discriminator_forward.8} parent=0 // pred_region
    _
  $region17: #{discriminator_forward.8} parent=0 // pred_fallthru
    _
  %v17 = vld [vmem:[%s1] sm:$0xff]
  %v18 = vld [vmem:[%s1 + $0x8] sm:$0xff]
  %v19 = vld [vmem:[%s1 + $0x10] sm:$0xff]
  %v20 = vld [vmem:[%s1 + $0x18] sm:$0xff]
  %v21 = vld [vmem:[%s1 + $0x20] sm:$0xff]
  %v22 = vld [vmem:[%s1 + $0x28] sm:$0xff]
  %v23 = vld [vmem:[%s1 + $0x30] sm:$0xff]
  %v24 = vld [vmem:[%s1 + $0x38] sm:$0xff]
  %v25 = vld [vmem:[%s1 + $0x40] sm:$0xff]
  %v26 = vld [vmem:[%s1 + $0x48] sm:$0xff]
  %v27 = vld [vmem:[%s1 + $0x50] sm:$0xff]
  %v28 = vld [vmem:[%s1 + $0x58] sm:$0xff]
  %v29 = vld [vmem:[%s1 + $0x60] sm:$0xff]
  %v30 = vld [vmem:[%s1 + $0x68] sm:$0xff]
  %v31 = vld [vmem:[%s1 + $0x70] sm:$0xff]
  %v32 = vld [vmem:[%s1 + $0x78] sm:$0xff]
  %v33 = vld [vmem:[%s1 + $0x80] sm:$0xff]
  %v34 = vld [vmem:[%s1 + $0x88] sm:$0xff]
  %v35 = vld [vmem:[%s1 + $0x90] sm:$0xff]
  %v36 = vld [vmem:[%s1 + $0x98] sm:$0xff]
  %v37 = vld [vmem:[%s1 + $0xa0] sm:$0xff]
  %v38 = vld [vmem:[%s1 + $0xa8] sm:$0xff]
  %v39 = vld [vmem:[%s1 + $0xb0] sm:$0xff]
  %v40 = vld [vmem:[%s1 + $0xb8] sm:$0xff]
  %v41 = vld [vmem:[%s1 + $0xc0] sm:$0xff]
  %v42 = vld [vmem:[%s1 + $0xc8] sm:$0xff]
  %v43 = vld [vmem:[%s1 + $0xd0] sm:$0xff]
  %v44 = vld [vmem:[%s1 + $0xd8] sm:$0xff]
  %v45 = vld [vmem:[%s1 + $0xe0] sm:$0xff]
  %v46 = vld [vmem:[%s1 + $0xe8] sm:$0xff]
  %v47 = vld [vmem:[%s1 + $0xf0] sm:$0xff]
  %v48 = vld [vmem:[%s1 + $0xf8] sm:$0xff]
  %v49 = vld [vmem:[%s1 + $0x100] sm:$0xff]
  %v50 = vld [vmem:[%s1 + $0x108] sm:$0xff]
  %v51 = vld [vmem:[%s1 + $0x110] sm:$0xff]
  %v52 = vld [vmem:[%s1 + $0x118] sm:$0xff]
  %v53 = vld [vmem:[%s1 + $0x120] sm:$0xff]
  %v54 = vld [vmem:[%s1 + $0x128] sm:$0xff]
  %v55 = vld [vmem:[%s1 + $0x130] sm:$0xff]
  %v56 = vld [vmem:[%s1 + $0x138] sm:$0xff]
  %v57 = vld [vmem:[%s1 + $0x140] sm:$0xff]
  %v58 = vld [vmem:[%s1 + $0x148] sm:$0xff]
  %v59 = vld [vmem:[%s1 + $0x150] sm:$0xff]
  %v60 = vld [vmem:[%s1 + $0x158] sm:$0xff]
  %v61 = vld [vmem:[%s1 + $0x160] sm:$0xff]
  %v62 = vld [vmem:[%s1 + $0x168] sm:$0xff]
  %v63 = vld [vmem:[%s1 + $0x170] sm:$0xff]
  %v64 = vld [vmem:[%s1 + $0x178] sm:$0xff]
  %v65 = vld [vmem:[%s1 + $0x180] sm:$0xff]
  %v66 = vld [vmem:[%s1 + $0x188] sm:$0xff]
  %v67 = vld [vmem:[%s1 + $0x190] sm:$0xff]
  %v68 = vld [vmem:[%s1 + $0x198] sm:$0xff]
  %v69 = vld [vmem:[%s1 + $0x1a0] sm:$0xff]
  %v70 = vld [vmem:[%s1 + $0x1a8] sm:$0xff]
  %v71 = vld [vmem:[%s1 + $0x1b0] sm:$0xff]
  %v72 = vld [vmem:[%s1 + $0x1b8] sm:$0xff]
  %v73 = vld [vmem:[%s1 + $0x1c0] sm:$0xff]
  %v74 = vld [vmem:[%s1 + $0x1c8] sm:$0xff]
  %v75 = vld [vmem:[%s1 + $0x1d0] sm:$0xff]
  %v76 = vld [vmem:[%s1 + $0x1d8] sm:$0xff]
  %v77 = vld [vmem:[%s1 + $0x1e0] sm:$0xff]
  %v78 = vld [vmem:[%s1 + $0x1e8] sm:$0xff]
  %v79 = vld [vmem:[%s1 + $0x1f0] sm:$0xff]
  %v80 = vld [vmem:[%s1 + $0x1f8] sm:$0xff]
  %v81 = vld [vmem:[%s2] sm:$0xff]
  %v82 = vld [vmem:[%s2 + $0x8] sm:$0xff]
  %v83 = vld [vmem:[%s2 + $0x10] sm:$0xff]
  %v84 = vld [vmem:[%s2 + $0x18] sm:$0xff]
  %v85 = vld [vmem:[%s2 + $0x20] sm:$0xff]
  %v86 = vld [vmem:[%s2 + $0x28] sm:$0xff]
  %v87 = vld [vmem:[%s2 + $0x30] sm:$0xff]
  %v88 = vld [vmem:[%s2 + $0x38] sm:$0xff]
  %v89 = vld [vmem:[%s2 + $0x40] sm:$0xff]
  %v90 = vld [vmem:[%s2 + $0x48] sm:$0xff]
  %v91 = vld [vmem:[%s2 + $0x50] sm:$0xff]
  %v92 = vld [vmem:[%s2 + $0x58] sm:$0xff]
  %v93 = vld [vmem:[%s2 + $0x60] sm:$0xff]
  %v94 = vld [vmem:[%s2 + $0x68] sm:$0xff]
  %v95 = vld [vmem:[%s2 + $0x70] sm:$0xff]
  %v96 = vld [vmem:[%s2 + $0x78] sm:$0xff]
  %v97 = vld [vmem:[%s2 + $0x80] sm:$0xff]
  %v98 = vld [vmem:[%s2 + $0x88] sm:$0xff]
  %v99 = vld [vmem:[%s2 + $0x90] sm:$0xff]
  %v100 = vld [vmem:[%s2 + $0x98] sm:$0xff]
  %v101 = vld [vmem:[%s2 + $0xa0] sm:$0xff]
  %v102 = vld [vmem:[%s2 + $0xa8] sm:$0xff]
  %v103 = vld [vmem:[%s2 + $0xb0] sm:$0xff]
  %v104 = vld [vmem:[%s2 + $0xb8] sm:$0xff]
  %v105 = vld [vmem:[%s2 + $0xc0] sm:$0xff]
  %v106 = vld [vmem:[%s2 + $0xc8] sm:$0xff]
  %v107 = vld [vmem:[%s2 + $0xd0] sm:$0xff]
  %v108 = vld [vmem:[%s2 + $0xd8] sm:$0xff]
  %v109 = vld [vmem:[%s2 + $0xe0] sm:$0xff]
  %v110 = vld [vmem:[%s2 + $0xe8] sm:$0xff]
  %v111 = vld [vmem:[%s2 + $0xf0] sm:$0xff]
  %v112 = vld [vmem:[%s2 + $0xf8] sm:$0xff]
  %v113 = vld [vmem:[%s2 + $0x100] sm:$0xff]
  %v114 = vld [vmem:[%s2 + $0x108] sm:$0xff]
  %v115 = vld [vmem:[%s2 + $0x110] sm:$0xff]
  %v116 = vld [vmem:[%s2 + $0x118] sm:$0xff]
  %v117 = vld [vmem:[%s2 + $0x120] sm:$0xff]
  %v118 = vld [vmem:[%s2 + $0x128] sm:$0xff]
  %v119 = vld [vmem:[%s2 + $0x130] sm:$0xff]
  %v120 = vld [vmem:[%s2 + $0x138] sm:$0xff]
  %v121 = vld [vmem:[%s2 + $0x140] sm:$0xff]
  %v122 = vld [vmem:[%s2 + $0x148] sm:$0xff]
  %v123 = vld [vmem:[%s2 + $0x150] sm:$0xff]
  %v124 = vld [vmem:[%s2 + $0x158] sm:$0xff]
  %v125 = vld [vmem:[%s2 + $0x160] sm:$0xff]
  %v126 = vld [vmem:[%s2 + $0x168] sm:$0xff]
  %v127 = vld [vmem:[%s2 + $0x170] sm:$0xff]
  %v128 = vld [vmem:[%s2 + $0x178] sm:$0xff]
  %v129 = vld [vmem:[%s2 + $0x180] sm:$0xff]
  %v130 = vld [vmem:[%s2 + $0x188] sm:$0xff]
  %v131 = vld [vmem:[%s2 + $0x190] sm:$0xff]
  %v132 = vld [vmem:[%s2 + $0x198] sm:$0xff]
  %v133 = vld [vmem:[%s2 + $0x1a0] sm:$0xff]
  %v134 = vld [vmem:[%s2 + $0x1a8] sm:$0xff]
  %v135 = vld [vmem:[%s2 + $0x1b0] sm:$0xff]
  %v136 = vld [vmem:[%s2 + $0x1b8] sm:$0xff]
  %v137 = vld [vmem:[%s2 + $0x1c0] sm:$0xff]
  %v138 = vld [vmem:[%s2 + $0x1c8] sm:$0xff]
  %v139 = vld [vmem:[%s2 + $0x1d0] sm:$0xff]
  %v140 = vld [vmem:[%s2 + $0x1d8] sm:$0xff]
  %v141 = vld [vmem:[%s2 + $0x1e0] sm:$0xff]
  %v142 = vld [vmem:[%s2 + $0x1e8] sm:$0xff]
  %v143 = vld [vmem:[%s2 + $0x1f0] sm:$0xff]
  %v144 = vld [vmem:[%s2 + $0x1f8] sm:$0xff]
  %146 = vset.pattern.permute.xlu0 0
  %147 = vperm.xlu0 %146, %v81
  %v148 = vpop.permute.xlu0 %147
  %151 = vset.pattern.permute.xlu0 0
  %152 = vperm.xlu0 %151, %v82
  %v153 = vpop.permute.xlu0 %152
  %156 = vset.pattern.permute.xlu0 0
  %157 = vperm.xlu0 %156, %v83
  %v158 = vpop.permute.xlu0 %157
  %161 = vset.pattern.permute.xlu0 0
  %162 = vperm.xlu0 %161, %v84
  %v163 = vpop.permute.xlu0 %162
  %166 = vset.pattern.permute.xlu0 0
  %167 = vperm.xlu0 %166, %v85
  %v168 = vpop.permute.xlu0 %167
  %171 = vset.pattern.permute.xlu0 0
  %172 = vperm.xlu0 %171, %v86
  %v173 = vpop.permute.xlu0 %172
  %176 = vset.pattern.permute.xlu0 0
  %177 = vperm.xlu0 %176, %v87
  %v178 = vpop.permute.xlu0 %177
  %181 = vset.pattern.permute.xlu0 0
  %182 = vperm.xlu0 %181, %v88
  %v183 = vpop.permute.xlu0 %182
  %186 = vset.pattern.permute.xlu0 0
  %187 = vperm.xlu0 %186, %v89
  %v188 = vpop.permute.xlu0 %187
  %191 = vset.pattern.permute.xlu0 0
  %192 = vperm.xlu0 %191, %v90
  %v193 = vpop.permute.xlu0 %192
  %196 = vset.pattern.permute.xlu0 0
  %197 = vperm.xlu0 %196, %v91
  %v198 = vpop.permute.xlu0 %197
  %201 = vset.pattern.permute.xlu0 0
  %202 = vperm.xlu0 %201, %v92
  %v203 = vpop.permute.xlu0 %202
  %206 = vset.pattern.permute.xlu0 0
  %207 = vperm.xlu0 %206, %v93
  %v208 = vpop.permute.xlu0 %207
  %211 = vset.pattern.permute.xlu0 0
  %212 = vperm.xlu0 %211, %v94
  %v213 = vpop.permute.xlu0 %212
  %216 = vset.pattern.permute.xlu0 0
  %217 = vperm.xlu0 %216, %v95
  %v218 = vpop.permute.xlu0 %217
  %221 = vset.pattern.permute.xlu0 0
  %222 = vperm.xlu0 %221, %v96
  %v223 = vpop.permute.xlu0 %222
  %226 = vset.pattern.permute.xlu0 0
  %227 = vperm.xlu0 %226, %v97
  %v228 = vpop.permute.xlu0 %227
  %231 = vset.pattern.permute.xlu0 0
  %232 = vperm.xlu0 %231, %v98
  %v233 = vpop.permute.xlu0 %232
  %236 = vset.pattern.permute.xlu0 0
  %237 = vperm.xlu0 %236, %v99
  %v238 = vpop.permute.xlu0 %237
  %241 = vset.pattern.permute.xlu0 0
  %242 = vperm.xlu0 %241, %v100
  %v243 = vpop.permute.xlu0 %242
  %246 = vset.pattern.permute.xlu0 0
  %247 = vperm.xlu0 %246, %v101
  %v248 = vpop.permute.xlu0 %247
  %251 = vset.pattern.permute.xlu0 0
  %252 = vperm.xlu0 %251, %v102
  %v253 = vpop.permute.xlu0 %252
  %256 = vset.pattern.permute.xlu0 0
  %257 = vperm.xlu0 %256, %v103
  %v258 = vpop.permute.xlu0 %257
  %261 = vset.pattern.permute.xlu0 0
  %262 = vperm.xlu0 %261, %v104
  %v263 = vpop.permute.xlu0 %262
  %266 = vset.pattern.permute.xlu0 0
  %267 = vperm.xlu0 %266, %v105
  %v268 = vpop.permute.xlu0 %267
  %271 = vset.pattern.permute.xlu0 0
  %272 = vperm.xlu0 %271, %v106
  %v273 = vpop.permute.xlu0 %272
  %276 = vset.pattern.permute.xlu0 0
  %277 = vperm.xlu0 %276, %v107
  %v278 = vpop.permute.xlu0 %277
  %281 = vset.pattern.permute.xlu0 0
  %282 = vperm.xlu0 %281, %v108
  %v283 = vpop.permute.xlu0 %282
  %286 = vset.pattern.permute.xlu0 0
  %287 = vperm.xlu0 %286, %v109
  %v288 = vpop.permute.xlu0 %287
  %291 = vset.pattern.permute.xlu0 0
  %292 = vperm.xlu0 %291, %v110
  %v293 = vpop.permute.xlu0 %292
  %296 = vset.pattern.permute.xlu0 0
  %297 = vperm.xlu0 %296, %v111
  %v298 = vpop.permute.xlu0 %297
  %301 = vset.pattern.permute.xlu0 0
  %302 = vperm.xlu0 %301, %v112
  %v303 = vpop.permute.xlu0 %302
  %306 = vset.pattern.permute.xlu0 0
  %307 = vperm.xlu0 %306, %v113
  %v308 = vpop.permute.xlu0 %307
  %311 = vset.pattern.permute.xlu0 0
  %312 = vperm.xlu0 %311, %v114
  %v313 = vpop.permute.xlu0 %312
  %316 = vset.pattern.permute.xlu0 0
  %317 = vperm.xlu0 %316, %v115
  %v318 = vpop.permute.xlu0 %317
  %321 = vset.pattern.permute.xlu0 0
  %322 = vperm.xlu0 %321, %v116
  %v323 = vpop.permute.xlu0 %322
  %326 = vset.pattern.permute.xlu0 0
  %327 = vperm.xlu0 %326, %v117
  %v328 = vpop.permute.xlu0 %327
  %331 = vset.pattern.permute.xlu0 0
  %332 = vperm.xlu0 %331, %v118
  %v333 = vpop.permute.xlu0 %332
  %336 = vset.pattern.permute.xlu0 0
  %337 = vperm.xlu0 %336, %v119
  %v338 = vpop.permute.xlu0 %337
  %341 = vset.pattern.permute.xlu0 0
  %342 = vperm.xlu0 %341, %v120
  %v343 = vpop.permute.xlu0 %342
  %346 = vset.pattern.permute.xlu0 0
  %347 = vperm.xlu0 %346, %v121
  %v348 = vpop.permute.xlu0 %347
  %351 = vset.pattern.permute.xlu0 0
  %352 = vperm.xlu0 %351, %v122
  %v353 = vpop.permute.xlu0 %352
  %356 = vset.pattern.permute.xlu0 0
  %357 = vperm.xlu0 %356, %v123
  %v358 = vpop.permute.xlu0 %357
  %361 = vset.pattern.permute.xlu0 0
  %362 = vperm.xlu0 %361, %v124
  %v363 = vpop.permute.xlu0 %362
  %366 = vset.pattern.permute.xlu0 0
  %367 = vperm.xlu0 %366, %v125
  %v368 = vpop.permute.xlu0 %367
  %371 = vset.pattern.permute.xlu0 0
  %372 = vperm.xlu0 %371, %v126
  %v373 = vpop.permute.xlu0 %372
  %376 = vset.pattern.permute.xlu0 0
  %377 = vperm.xlu0 %376, %v127
  %v378 = vpop.permute.xlu0 %377
  %381 = vset.pattern.permute.xlu0 0
  %382 = vperm.xlu0 %381, %v128
  %v383 = vpop.permute.xlu0 %382
  %386 = vset.pattern.permute.xlu0 0
  %387 = vperm.xlu0 %386, %v129
  %v388 = vpop.permute.xlu0 %387
  %391 = vset.pattern.permute.xlu0 0
  %392 = vperm.xlu0 %391, %v130
  %v393 = vpop.permute.xlu0 %392
  %396 = vset.pattern.permute.xlu0 0
  %397 = vperm.xlu0 %396, %v131
  %v398 = vpop.permute.xlu0 %397
  %401 = vset.pattern.permute.xlu0 0
  %402 = vperm.xlu0 %401, %v132
  %v403 = vpop.permute.xlu0 %402
  %406 = vset.pattern.permute.xlu0 0
  %407 = vperm.xlu0 %406, %v133
  %v408 = vpop.permute.xlu0 %407
  %411 = vset.pattern.permute.xlu0 0
  %412 = vperm.xlu0 %411, %v134
  %v413 = vpop.permute.xlu0 %412
  %416 = vset.pattern.permute.xlu0 0
  %417 = vperm.xlu0 %416, %v135
  %v418 = vpop.permute.xlu0 %417
  %421 = vset.pattern.permute.xlu0 0
  %422 = vperm.xlu0 %421, %v136
  %v423 = vpop.permute.xlu0 %422
  %426 = vset.pattern.permute.xlu0 0
  %427 = vperm.xlu0 %426, %v137
  %v428 = vpop.permute.xlu0 %427
  %431 = vset.pattern.permute.xlu0 0
  %432 = vperm.xlu0 %431, %v138
  %v433 = vpop.permute.xlu0 %432
  %436 = vset.pattern.permute.xlu0 0
  %437 = vperm.xlu0 %436, %v139
  %v438 = vpop.permute.xlu0 %437
  %441 = vset.pattern.permute.xlu0 0
  %442 = vperm.xlu0 %441, %v140
  %v443 = vpop.permute.xlu0 %442
  %446 = vset.pattern.permute.xlu0 0
  %447 = vperm.xlu0 %446, %v141
  %v448 = vpop.permute.xlu0 %447
  %451 = vset.pattern.permute.xlu0 0
  %452 = vperm.xlu0 %451, %v142
  %v453 = vpop.permute.xlu0 %452
  %456 = vset.pattern.permute.xlu0 0
  %457 = vperm.xlu0 %456, %v143
  %v458 = vpop.permute.xlu0 %457
  %461 = vset.pattern.permute.xlu0 0
  %462 = vperm.xlu0 %461, %v144
  %v463 = vpop.permute.xlu0 %462
  %v465 = vmul.f32 %v17, %v148
  %v466 = vmul.f32 %v18, %v153
  %v467 = vmul.f32 %v19, %v158
  %v468 = vmul.f32 %v20, %v163
  %v469 = vmul.f32 %v21, %v168
  %v470 = vmul.f32 %v22, %v173
  %v471 = vmul.f32 %v23, %v178
  %v472 = vmul.f32 %v24, %v183
  %v473 = vmul.f32 %v25, %v188
  %v474 = vmul.f32 %v26, %v193
  %v475 = vmul.f32 %v27, %v198
  %v476 = vmul.f32 %v28, %v203
  %v477 = vmul.f32 %v29, %v208
  %v478 = vmul.f32 %v30, %v213
  %v479 = vmul.f32 %v31, %v218
  %v480 = vmul.f32 %v32, %v223
  %v481 = vmul.f32 %v33, %v228
  %v482 = vmul.f32 %v34, %v233
  %v483 = vmul.f32 %v35, %v238
  %v484 = vmul.f32 %v36, %v243
  %v485 = vmul.f32 %v37, %v248
  %v486 = vmul.f32 %v38, %v253
  %v487 = vmul.f32 %v39, %v258
  %v488 = vmul.f32 %v40, %v263
  %v489 = vmul.f32 %v41, %v268
  %v490 = vmul.f32 %v42, %v273
  %v491 = vmul.f32 %v43, %v278
  %v492 = vmul.f32 %v44, %v283
  %v493 = vmul.f32 %v45, %v288
  %v494 = vmul.f32 %v46, %v293
  %v495 = vmul.f32 %v47, %v298
  %v496 = vmul.f32 %v48, %v303
  %v497 = vmul.f32 %v49, %v308
  %v498 = vmul.f32 %v50, %v313
  %v499 = vmul.f32 %v51, %v318
  %v500 = vmul.f32 %v52, %v323
  %v501 = vmul.f32 %v53, %v328
  %v502 = vmul.f32 %v54, %v333
  %v503 = vmul.f32 %v55, %v338
  %v504 = vmul.f32 %v56, %v343
  %v505 = vmul.f32 %v57, %v348
  %v506 = vmul.f32 %v58, %v353
  %v507 = vmul.f32 %v59, %v358
  %v508 = vmul.f32 %v60, %v363
  %v509 = vmul.f32 %v61, %v368
  %v510 = vmul.f32 %v62, %v373
  %v511 = vmul.f32 %v63, %v378
  %v512 = vmul.f32 %v64, %v383
  %v513 = vmul.f32 %v65, %v388
  %v514 = vmul.f32 %v66, %v393
  %v515 = vmul.f32 %v67, %v398
  %v516 = vmul.f32 %v68, %v403
  %v517 = vmul.f32 %v69, %v408
  %v518 = vmul.f32 %v70, %v413
  %v519 = vmul.f32 %v71, %v418
  %v520 = vmul.f32 %v72, %v423
  %v521 = vmul.f32 %v73, %v428
  %v522 = vmul.f32 %v74, %v433
  %v523 = vmul.f32 %v75, %v438
  %v524 = vmul.f32 %v76, %v443
  %v525 = vmul.f32 %v77, %v448
  %v526 = vmul.f32 %v78, %v453
  %v527 = vmul.f32 %v79, %v458
  %v528 = vmul.f32 %v80, %v463
  %v529 = vld [vmem:[%s3] sm:$0xff]
  %v530 = vld [vmem:[%s3 + $0x8] sm:$0xff]
  %v531 = vld [vmem:[%s3 + $0x10] sm:$0xff]
  %v532 = vld [vmem:[%s3 + $0x18] sm:$0xff]
  %v533 = vld [vmem:[%s3 + $0x20] sm:$0xff]
  %v534 = vld [vmem:[%s3 + $0x28] sm:$0xff]
  %v535 = vld [vmem:[%s3 + $0x30] sm:$0xff]
  %v536 = vld [vmem:[%s3 + $0x38] sm:$0xff]
  %v537 = vld [vmem:[%s3 + $0x40] sm:$0xff]
  %v538 = vld [vmem:[%s3 + $0x48] sm:$0xff]
  %v539 = vld [vmem:[%s3 + $0x50] sm:$0xff]
  %v540 = vld [vmem:[%s3 + $0x58] sm:$0xff]
  %v541 = vld [vmem:[%s3 + $0x60] sm:$0xff]
  %v542 = vld [vmem:[%s3 + $0x68] sm:$0xff]
  %v543 = vld [vmem:[%s3 + $0x70] sm:$0xff]
  %v544 = vld [vmem:[%s3 + $0x78] sm:$0xff]
  %v545 = vld [vmem:[%s3 + $0x80] sm:$0xff]
  %v546 = vld [vmem:[%s3 + $0x88] sm:$0xff]
  %v547 = vld [vmem:[%s3 + $0x90] sm:$0xff]
  %v548 = vld [vmem:[%s3 + $0x98] sm:$0xff]
  %v549 = vld [vmem:[%s3 + $0xa0] sm:$0xff]
  %v550 = vld [vmem:[%s3 + $0xa8] sm:$0xff]
  %v551 = vld [vmem:[%s3 + $0xb0] sm:$0xff]
  %v552 = vld [vmem:[%s3 + $0xb8] sm:$0xff]
  %v553 = vld [vmem:[%s3 + $0xc0] sm:$0xff]
  %v554 = vld [vmem:[%s3 + $0xc8] sm:$0xff]
  %v555 = vld [vmem:[%s3 + $0xd0] sm:$0xff]
  %v556 = vld [vmem:[%s3 + $0xd8] sm:$0xff]
  %v557 = vld [vmem:[%s3 + $0xe0] sm:$0xff]
  %v558 = vld [vmem:[%s3 + $0xe8] sm:$0xff]
  %v559 = vld [vmem:[%s3 + $0xf0] sm:$0xff]
  %v560 = vld [vmem:[%s3 + $0xf8] sm:$0xff]
  %v561 = vld [vmem:[%s3 + $0x100] sm:$0xff]
  %v562 = vld [vmem:[%s3 + $0x108] sm:$0xff]
  %v563 = vld [vmem:[%s3 + $0x110] sm:$0xff]
  %v564 = vld [vmem:[%s3 + $0x118] sm:$0xff]
  %v565 = vld [vmem:[%s3 + $0x120] sm:$0xff]
  %v566 = vld [vmem:[%s3 + $0x128] sm:$0xff]
  %v567 = vld [vmem:[%s3 + $0x130] sm:$0xff]
  %v568 = vld [vmem:[%s3 + $0x138] sm:$0xff]
  %v569 = vld [vmem:[%s3 + $0x140] sm:$0xff]
  %v570 = vld [vmem:[%s3 + $0x148] sm:$0xff]
  %v571 = vld [vmem:[%s3 + $0x150] sm:$0xff]
  %v572 = vld [vmem:[%s3 + $0x158] sm:$0xff]
  %v573 = vld [vmem:[%s3 + $0x160] sm:$0xff]
  %v574 = vld [vmem:[%s3 + $0x168] sm:$0xff]
  %v575 = vld [vmem:[%s3 + $0x170] sm:$0xff]
  %v576 = vld [vmem:[%s3 + $0x178] sm:$0xff]
  %v577 = vld [vmem:[%s3 + $0x180] sm:$0xff]
  %v578 = vld [vmem:[%s3 + $0x188] sm:$0xff]
  %v579 = vld [vmem:[%s3 + $0x190] sm:$0xff]
  %v580 = vld [vmem:[%s3 + $0x198] sm:$0xff]
  %v581 = vld [vmem:[%s3 + $0x1a0] sm:$0xff]
  %v582 = vld [vmem:[%s3 + $0x1a8] sm:$0xff]
  %v583 = vld [vmem:[%s3 + $0x1b0] sm:$0xff]
  %v584 = vld [vmem:[%s3 + $0x1b8] sm:$0xff]
  %v585 = vld [vmem:[%s3 + $0x1c0] sm:$0xff]
  %v586 = vld [vmem:[%s3 + $0x1c8] sm:$0xff]
  %v587 = vld [vmem:[%s3 + $0x1d0] sm:$0xff]
  %v588 = vld [vmem:[%s3 + $0x1d8] sm:$0xff]
  %v589 = vld [vmem:[%s3 + $0x1e0] sm:$0xff]
  %v590 = vld [vmem:[%s3 + $0x1e8] sm:$0xff]
  %v591 = vld [vmem:[%s3 + $0x1f0] sm:$0xff]
  %v592 = vld [vmem:[%s3 + $0x1f8] sm:$0xff]
  %594 = vset.pattern.permute.xlu0 0
  %595 = vperm.xlu0 %594, %v529
  %v596 = vpop.permute.xlu0 %595
  %599 = vset.pattern.permute.xlu0 0
  %600 = vperm.xlu0 %599, %v530
  %v601 = vpop.permute.xlu0 %600
  %604 = vset.pattern.permute.xlu0 0
  %605 = vperm.xlu0 %604, %v531
  %v606 = vpop.permute.xlu0 %605
  %609 = vset.pattern.permute.xlu0 0
  %610 = vperm.xlu0 %609, %v532
  %v611 = vpop.permute.xlu0 %610
  %614 = vset.pattern.permute.xlu0 0
  %615 = vperm.xlu0 %614, %v533
  %v616 = vpop.permute.xlu0 %615
  %619 = vset.pattern.permute.xlu0 0
  %620 = vperm.xlu0 %619, %v534
  %v621 = vpop.permute.xlu0 %620
  %624 = vset.pattern.permute.xlu0 0
  %625 = vperm.xlu0 %624, %v535
  %v626 = vpop.permute.xlu0 %625
  %629 = vset.pattern.permute.xlu0 0
  %630 = vperm.xlu0 %629, %v536
  %v631 = vpop.permute.xlu0 %630
  %634 = vset.pattern.permute.xlu0 0
  %635 = vperm.xlu0 %634, %v537
  %v636 = vpop.permute.xlu0 %635
  %639 = vset.pattern.permute.xlu0 0
  %640 = vperm.xlu0 %639, %v538
  %v641 = vpop.permute.xlu0 %640
  %644 = vset.pattern.permute.xlu0 0
  %645 = vperm.xlu0 %644, %v539
  %v646 = vpop.permute.xlu0 %645
  %649 = vset.pattern.permute.xlu0 0
  %650 = vperm.xlu0 %649, %v540
  %v651 = vpop.permute.xlu0 %650
  %654 = vset.pattern.permute.xlu0 0
  %655 = vperm.xlu0 %654, %v541
  %v656 = vpop.permute.xlu0 %655
  %659 = vset.pattern.permute.xlu0 0
  %660 = vperm.xlu0 %659, %v542
  %v661 = vpop.permute.xlu0 %660
  %664 = vset.pattern.permute.xlu0 0
  %665 = vperm.xlu0 %664, %v543
  %v666 = vpop.permute.xlu0 %665
  %669 = vset.pattern.permute.xlu0 0
  %670 = vperm.xlu0 %669, %v544
  %v671 = vpop.permute.xlu0 %670
  %674 = vset.pattern.permute.xlu0 0
  %675 = vperm.xlu0 %674, %v545
  %v676 = vpop.permute.xlu0 %675
  %679 = vset.pattern.permute.xlu0 0
  %680 = vperm.xlu0 %679, %v546
  %v681 = vpop.permute.xlu0 %680
  %684 = vset.pattern.permute.xlu0 0
  %685 = vperm.xlu0 %684, %v547
  %v686 = vpop.permute.xlu0 %685
  %689 = vset.pattern.permute.xlu0 0
  %690 = vperm.xlu0 %689, %v548
  %v691 = vpop.permute.xlu0 %690
  %694 = vset.pattern.permute.xlu0 0
  %695 = vperm.xlu0 %694, %v549
  %v696 = vpop.permute.xlu0 %695
  %699 = vset.pattern.permute.xlu0 0
  %700 = vperm.xlu0 %699, %v550
  %v701 = vpop.permute.xlu0 %700
  %704 = vset.pattern.permute.xlu0 0
  %705 = vperm.xlu0 %704, %v551
  %v706 = vpop.permute.xlu0 %705
  %709 = vset.pattern.permute.xlu0 0
  %710 = vperm.xlu0 %709, %v552
  %v711 = vpop.permute.xlu0 %710
  %714 = vset.pattern.permute.xlu0 0
  %715 = vperm.xlu0 %714, %v553
  %v716 = vpop.permute.xlu0 %715
  %719 = vset.pattern.permute.xlu0 0
  %720 = vperm.xlu0 %719, %v554
  %v721 = vpop.permute.xlu0 %720
  %724 = vset.pattern.permute.xlu0 0
  %725 = vperm.xlu0 %724, %v555
  %v726 = vpop.permute.xlu0 %725
  %729 = vset.pattern.permute.xlu0 0
  %730 = vperm.xlu0 %729, %v556
  %v731 = vpop.permute.xlu0 %730
  %734 = vset.pattern.permute.xlu0 0
  %735 = vperm.xlu0 %734, %v557
  %v736 = vpop.permute.xlu0 %735
  %739 = vset.pattern.permute.xlu0 0
  %740 = vperm.xlu0 %739, %v558
  %v741 = vpop.permute.xlu0 %740
  %744 = vset.pattern.permute.xlu0 0
  %745 = vperm.xlu0 %744, %v559
  %v746 = vpop.permute.xlu0 %745
  %749 = vset.pattern.permute.xlu0 0
  %750 = vperm.xlu0 %749, %v560
  %v751 = vpop.permute.xlu0 %750
  %754 = vset.pattern.permute.xlu0 0
  %755 = vperm.xlu0 %754, %v561
  %v756 = vpop.permute.xlu0 %755
  %759 = vset.pattern.permute.xlu0 0
  %760 = vperm.xlu0 %759, %v562
  %v761 = vpop.permute.xlu0 %760
  %764 = vset.pattern.permute.xlu0 0
  %765 = vperm.xlu0 %764, %v563
  %v766 = vpop.permute.xlu0 %765
  %769 = vset.pattern.permute.xlu0 0
  %770 = vperm.xlu0 %769, %v564
  %v771 = vpop.permute.xlu0 %770
  %774 = vset.pattern.permute.xlu0 0
  %775 = vperm.xlu0 %774, %v565
  %v776 = vpop.permute.xlu0 %775
  %779 = vset.pattern.permute.xlu0 0
  %780 = vperm.xlu0 %779, %v566
  %v781 = vpop.permute.xlu0 %780
  %784 = vset.pattern.permute.xlu0 0
  %785 = vperm.xlu0 %784, %v567
  %v786 = vpop.permute.xlu0 %785
  %789 = vset.pattern.permute.xlu0 0
  %790 = vperm.xlu0 %789, %v568
  %v791 = vpop.permute.xlu0 %790
  %794 = vset.pattern.permute.xlu0 0
  %795 = vperm.xlu0 %794, %v569
  %v796 = vpop.permute.xlu0 %795
  %799 = vset.pattern.permute.xlu0 0
  %800 = vperm.xlu0 %799, %v570
  %v801 = vpop.permute.xlu0 %800
  %804 = vset.pattern.permute.xlu0 0
  %805 = vperm.xlu0 %804, %v571
  %v806 = vpop.permute.xlu0 %805
  %809 = vset.pattern.permute.xlu0 0
  %810 = vperm.xlu0 %809, %v572
  %v811 = vpop.permute.xlu0 %810
  %814 = vset.pattern.permute.xlu0 0
  %815 = vperm.xlu0 %814, %v573
  %v816 = vpop.permute.xlu0 %815
  %819 = vset.pattern.permute.xlu0 0
  %820 = vperm.xlu0 %819, %v574
  %v821 = vpop.permute.xlu0 %820
  %824 = vset.pattern.permute.xlu0 0
  %825 = vperm.xlu0 %824, %v575
  %v826 = vpop.permute.xlu0 %825
  %829 = vset.pattern.permute.xlu0 0
  %830 = vperm.xlu0 %829, %v576
  %v831 = vpop.permute.xlu0 %830
  %834 = vset.pattern.permute.xlu0 0
  %835 = vperm.xlu0 %834, %v577
  %v836 = vpop.permute.xlu0 %835
  %839 = vset.pattern.permute.xlu0 0
  %840 = vperm.xlu0 %839, %v578
  %v841 = vpop.permute.xlu0 %840
  %844 = vset.pattern.permute.xlu0 0
  %845 = vperm.xlu0 %844, %v579
  %v846 = vpop.permute.xlu0 %845
  %849 = vset.pattern.permute.xlu0 0
  %850 = vperm.xlu0 %849, %v580
  %v851 = vpop.permute.xlu0 %850
  %854 = vset.pattern.permute.xlu0 0
  %855 = vperm.xlu0 %854, %v581
  %v856 = vpop.permute.xlu0 %855
  %859 = vset.pattern.permute.xlu0 0
  %860 = vperm.xlu0 %859, %v582
  %v861 = vpop.permute.xlu0 %860
  %864 = vset.pattern.permute.xlu0 0
  %865 = vperm.xlu0 %864, %v583
  %v866 = vpop.permute.xlu0 %865
  %869 = vset.pattern.permute.xlu0 0
  %870 = vperm.xlu0 %869, %v584
  %v871 = vpop.permute.xlu0 %870
  %874 = vset.pattern.permute.xlu0 0
  %875 = vperm.xlu0 %874, %v585
  %v876 = vpop.permute.xlu0 %875
  %879 = vset.pattern.permute.xlu0 0
  %880 = vperm.xlu0 %879, %v586
  %v881 = vpop.permute.xlu0 %880
  %884 = vset.pattern.permute.xlu0 0
  %885 = vperm.xlu0 %884, %v587
  %v886 = vpop.permute.xlu0 %885
  %889 = vset.pattern.permute.xlu0 0
  %890 = vperm.xlu0 %889, %v588
  %v891 = vpop.permute.xlu0 %890
  %894 = vset.pattern.permute.xlu0 0
  %895 = vperm.xlu0 %894, %v589
  %v896 = vpop.permute.xlu0 %895
  %899 = vset.pattern.permute.xlu0 0
  %900 = vperm.xlu0 %899, %v590
  %v901 = vpop.permute.xlu0 %900
  %904 = vset.pattern.permute.xlu0 0
  %905 = vperm.xlu0 %904, %v591
  %v906 = vpop.permute.xlu0 %905
  %909 = vset.pattern.permute.xlu0 0
  %910 = vperm.xlu0 %909, %v592
  %v911 = vpop.permute.xlu0 %910
  %v913 = vadd.f32 %v465, %v596
  %v914 = vadd.f32 %v466, %v601
  %v915 = vadd.f32 %v467, %v606
  %v916 = vadd.f32 %v468, %v611
  %v917 = vadd.f32 %v469, %v616
  %v918 = vadd.f32 %v470, %v621
  %v919 = vadd.f32 %v471, %v626
  %v920 = vadd.f32 %v472, %v631
  %v921 = vadd.f32 %v473, %v636
  %v922 = vadd.f32 %v474, %v641
  %v923 = vadd.f32 %v475, %v646
  %v924 = vadd.f32 %v476, %v651
  %v925 = vadd.f32 %v477, %v656
  %v926 = vadd.f32 %v478, %v661
  %v927 = vadd.f32 %v479, %v666
  %v928 = vadd.f32 %v480, %v671
  %v929 = vadd.f32 %v481, %v676
  %v930 = vadd.f32 %v482, %v681
  %v931 = vadd.f32 %v483, %v686
  %v932 = vadd.f32 %v484, %v691
  %v933 = vadd.f32 %v485, %v696
  %v934 = vadd.f32 %v486, %v701
  %v935 = vadd.f32 %v487, %v706
  %v936 = vadd.f32 %v488, %v711
  %v937 = vadd.f32 %v489, %v716
  %v938 = vadd.f32 %v490, %v721
  %v939 = vadd.f32 %v491, %v726
  %v940 = vadd.f32 %v492, %v731
  %v941 = vadd.f32 %v493, %v736
  %v942 = vadd.f32 %v494, %v741
  %v943 = vadd.f32 %v495, %v746
  %v944 = vadd.f32 %v496, %v751
  %v945 = vadd.f32 %v497, %v756
  %v946 = vadd.f32 %v498, %v761
  %v947 = vadd.f32 %v499, %v766
  %v948 = vadd.f32 %v500, %v771
  %v949 = vadd.f32 %v501, %v776
  %v950 = vadd.f32 %v502, %v781
  %v951 = vadd.f32 %v503, %v786
  %v952 = vadd.f32 %v504, %v791
  %v953 = vadd.f32 %v505, %v796
  %v954 = vadd.f32 %v506, %v801
  %v955 = vadd.f32 %v507, %v806
  %v956 = vadd.f32 %v508, %v811
  %v957 = vadd.f32 %v509, %v816
  %v958 = vadd.f32 %v510, %v821
  %v959 = vadd.f32 %v511, %v826
  %v960 = vadd.f32 %v512, %v831
  %v961 = vadd.f32 %v513, %v836
  %v962 = vadd.f32 %v514, %v841
  %v963 = vadd.f32 %v515, %v846
  %v964 = vadd.f32 %v516, %v851
  %v965 = vadd.f32 %v517, %v856
  %v966 = vadd.f32 %v518, %v861
  %v967 = vadd.f32 %v519, %v866
  %v968 = vadd.f32 %v520, %v871
  %v969 = vadd.f32 %v521, %v876
  %v970 = vadd.f32 %v522, %v881
  %v971 = vadd.f32 %v523, %v886
  %v972 = vadd.f32 %v524, %v891
  %v973 = vadd.f32 %v525, %v896
  %v974 = vadd.f32 %v526, %v901
  %v975 = vadd.f32 %v527, %v906
  %v976 = vadd.f32 %v528, %v911
  %vm977 = vcmp.ge.f32.partialorder %v913, 0.0
  %vm978 = vcmp.ge.f32.partialorder %v914, 0.0
  %vm979 = vcmp.ge.f32.partialorder %v915, 0.0
  %vm980 = vcmp.ge.f32.partialorder %v916, 0.0
  %vm981 = vcmp.ge.f32.partialorder %v917, 0.0
  %vm982 = vcmp.ge.f32.partialorder %v918, 0.0
  %vm983 = vcmp.ge.f32.partialorder %v919, 0.0
  %vm984 = vcmp.ge.f32.partialorder %v920, 0.0
  %vm985 = vcmp.ge.f32.partialorder %v921, 0.0
  %vm986 = vcmp.ge.f32.partialorder %v922, 0.0
  %vm987 = vcmp.ge.f32.partialorder %v923, 0.0
  %vm988 = vcmp.ge.f32.partialorder %v924, 0.0
  %vm989 = vcmp.ge.f32.partialorder %v925, 0.0
  %vm990 = vcmp.ge.f32.partialorder %v926, 0.0
  %vm991 = vcmp.ge.f32.partialorder %v927, 0.0
  %vm992 = vcmp.ge.f32.partialorder %v928, 0.0
  %vm993 = vcmp.ge.f32.partialorder %v929, 0.0
  %vm994 = vcmp.ge.f32.partialorder %v930, 0.0
  %vm995 = vcmp.ge.f32.partialorder %v931, 0.0
  %vm996 = vcmp.ge.f32.partialorder %v932, 0.0
  %vm997 = vcmp.ge.f32.partialorder %v933, 0.0
  %vm998 = vcmp.ge.f32.partialorder %v934, 0.0
  %vm999 = vcmp.ge.f32.partialorder %v935, 0.0
  %vm1000 = vcmp.ge.f32.partialorder %v936, 0.0
  %vm1001 = vcmp.ge.f32.partialorder %v937, 0.0
  %vm1002 = vcmp.ge.f32.partialorder %v938, 0.0
  %vm1003 = vcmp.ge.f32.partialorder %v939, 0.0
  %vm1004 = vcmp.ge.f32.partialorder %v940, 0.0
  %vm1005 = vcmp.ge.f32.partialorder %v941, 0.0
  %vm1006 = vcmp.ge.f32.partialorder %v942, 0.0
  %vm1007 = vcmp.ge.f32.partialorder %v943, 0.0
  %vm1008 = vcmp.ge.f32.partialorder %v944, 0.0
  %vm1009 = vcmp.ge.f32.partialorder %v945, 0.0
  %vm1010 = vcmp.ge.f32.partialorder %v946, 0.0
  %vm1011 = vcmp.ge.f32.partialorder %v947, 0.0
  %vm1012 = vcmp.ge.f32.partialorder %v948, 0.0
  %vm1013 = vcmp.ge.f32.partialorder %v949, 0.0
  %vm1014 = vcmp.ge.f32.partialorder %v950, 0.0
  %vm1015 = vcmp.ge.f32.partialorder %v951, 0.0
  %vm1016 = vcmp.ge.f32.partialorder %v952, 0.0
  %vm1017 = vcmp.ge.f32.partialorder %v953, 0.0
  %vm1018 = vcmp.ge.f32.partialorder %v954, 0.0
  %vm1019 = vcmp.ge.f32.partialorder %v955, 0.0
  %vm1020 = vcmp.ge.f32.partialorder %v956, 0.0
  %vm1021 = vcmp.ge.f32.partialorder %v957, 0.0
  %vm1022 = vcmp.ge.f32.partialorder %v958, 0.0
  %vm1023 = vcmp.ge.f32.partialorder %v959, 0.0
  %vm1024 = vcmp.ge.f32.partialorder %v960, 0.0
  %vm1025 = vcmp.ge.f32.partialorder %v961, 0.0
  %vm1026 = vcmp.ge.f32.partialorder %v962, 0.0
  %vm1027 = vcmp.ge.f32.partialorder %v963, 0.0
  %vm1028 = vcmp.ge.f32.partialorder %v964, 0.0
  %vm1029 = vcmp.ge.f32.partialorder %v965, 0.0
  %vm1030 = vcmp.ge.f32.partialorder %v966, 0.0
  %vm1031 = vcmp.ge.f32.partialorder %v967, 0.0
  %vm1032 = vcmp.ge.f32.partialorder %v968, 0.0
  %vm1033 = vcmp.ge.f32.partialorder %v969, 0.0
  %vm1034 = vcmp.ge.f32.partialorder %v970, 0.0
  %vm1035 = vcmp.ge.f32.partialorder %v971, 0.0
  %vm1036 = vcmp.ge.f32.partialorder %v972, 0.0
  %vm1037 = vcmp.ge.f32.partialorder %v973, 0.0
  %vm1038 = vcmp.ge.f32.partialorder %v974, 0.0
  %vm1039 = vcmp.ge.f32.partialorder %v975, 0.0
  %vm1040 = vcmp.ge.f32.partialorder %v976, 0.0
  %v1041 = vmul.f32 %v913, 0.2
  %v1042 = vmul.f32 %v914, 0.2
  %v1043 = vmul.f32 %v915, 0.2
  %v1044 = vmul.f32 %v916, 0.2
  %v1045 = vmul.f32 %v917, 0.2
  %v1046 = vmul.f32 %v918, 0.2
  %v1047 = vmul.f32 %v919, 0.2
  %v1048 = vmul.f32 %v920, 0.2
  %v1049 = vmul.f32 %v921, 0.2
  %v1050 = vmul.f32 %v922, 0.2
  %v1051 = vmul.f32 %v923, 0.2
  %v1052 = vmul.f32 %v924, 0.2
  %v1053 = vmul.f32 %v925, 0.2
  %v1054 = vmul.f32 %v926, 0.2
  %v1055 = vmul.f32 %v927, 0.2
  %v1056 = vmul.f32 %v928, 0.2
  %v1057 = vmul.f32 %v929, 0.2
  %v1058 = vmul.f32 %v930, 0.2
  %v1059 = vmul.f32 %v931, 0.2
  %v1060 = vmul.f32 %v932, 0.2
  %v1061 = vmul.f32 %v933, 0.2
  %v1062 = vmul.f32 %v934, 0.2
  %v1063 = vmul.f32 %v935, 0.2
  %v1064 = vmul.f32 %v936, 0.2
  %v1065 = vmul.f32 %v937, 0.2
  %v1066 = vmul.f32 %v938, 0.2
  %v1067 = vmul.f32 %v939, 0.2
  %v1068 = vmul.f32 %v940, 0.2
  %v1069 = vmul.f32 %v941, 0.2
  %v1070 = vmul.f32 %v942, 0.2
  %v1071 = vmul.f32 %v943, 0.2
  %v1072 = vmul.f32 %v944, 0.2
  %v1073 = vmul.f32 %v945, 0.2
  %v1074 = vmul.f32 %v946, 0.2
  %v1075 = vmul.f32 %v947, 0.2
  %v1076 = vmul.f32 %v948, 0.2
  %v1077 = vmul.f32 %v949, 0.2
  %v1078 = vmul.f32 %v950, 0.2
  %v1079 = vmul.f32 %v951, 0.2
  %v1080 = vmul.f32 %v952, 0.2
  %v1081 = vmul.f32 %v953, 0.2
  %v1082 = vmul.f32 %v954, 0.2
  %v1083 = vmul.f32 %v955, 0.2
  %v1084 = vmul.f32 %v956, 0.2
  %v1085 = vmul.f32 %v957, 0.2
  %v1086 = vmul.f32 %v958, 0.2
  %v1087 = vmul.f32 %v959, 0.2
  %v1088 = vmul.f32 %v960, 0.2
  %v1089 = vmul.f32 %v961, 0.2
  %v1090 = vmul.f32 %v962, 0.2
  %v1091 = vmul.f32 %v963, 0.2
  %v1092 = vmul.f32 %v964, 0.2
  %v1093 = vmul.f32 %v965, 0.2
  %v1094 = vmul.f32 %v966, 0.2
  %v1095 = vmul.f32 %v967, 0.2
  %v1096 = vmul.f32 %v968, 0.2
  %v1097 = vmul.f32 %v969, 0.2
  %v1098 = vmul.f32 %v970, 0.2
  %v1099 = vmul.f32 %v971, 0.2
  %v1100 = vmul.f32 %v972, 0.2
  %v1101 = vmul.f32 %v973, 0.2
  %v1102 = vmul.f32 %v974, 0.2
  %v1103 = vmul.f32 %v975, 0.2
  %v1104 = vmul.f32 %v976, 0.2
  %v1105 = vsel %vm977, %v913, %v1041
  %v1106 = vsel %vm978, %v914, %v1042
  %v1107 = vsel %vm979, %v915, %v1043
  %v1108 = vsel %vm980, %v916, %v1044
  %v1109 = vsel %vm981, %v917, %v1045
  %v1110 = vsel %vm982, %v918, %v1046
  %v1111 = vsel %vm983, %v919, %v1047
  %v1112 = vsel %vm984, %v920, %v1048
  %v1113 = vsel %vm985, %v921, %v1049
  %v1114 = vsel %vm986, %v922, %v1050
  %v1115 = vsel %vm987, %v923, %v1051
  %v1116 = vsel %vm988, %v924, %v1052
  %v1117 = vsel %vm989, %v925, %v1053
  %v1118 = vsel %vm990, %v926, %v1054
  %v1119 = vsel %vm991, %v927, %v1055
  %v1120 = vsel %vm992, %v928, %v1056
  %v1121 = vsel %vm993, %v929, %v1057
  %v1122 = vsel %vm994, %v930, %v1058
  %v1123 = vsel %vm995, %v931, %v1059
  %v1124 = vsel %vm996, %v932, %v1060
  %v1125 = vsel %vm997, %v933, %v1061
  %v1126 = vsel %vm998, %v934, %v1062
  %v1127 = vsel %vm999, %v935, %v1063
  %v1128 = vsel %vm1000, %v936, %v1064
  %v1129 = vsel %vm1001, %v937, %v1065
  %v1130 = vsel %vm1002, %v938, %v1066
  %v1131 = vsel %vm1003, %v939, %v1067
  %v1132 = vsel %vm1004, %v940, %v1068
  %v1133 = vsel %vm1005, %v941, %v1069
  %v1134 = vsel %vm1006, %v942, %v1070
  %v1135 = vsel %vm1007, %v943, %v1071
  %v1136 = vsel %vm1008, %v944, %v1072
  %v1137 = vsel %vm1009, %v945, %v1073
  %v1138 = vsel %vm1010, %v946, %v1074
  %v1139 = vsel %vm1011, %v947, %v1075
  %v1140 = vsel %vm1012, %v948, %v1076
  %v1141 = vsel %vm1013, %v949, %v1077
  %v1142 = vsel %vm1014, %v950, %v1078
  %v1143 = vsel %vm1015, %v951, %v1079
  %v1144 = vsel %vm1016, %v952, %v1080
  %v1145 = vsel %vm1017, %v953, %v1081
  %v1146 = vsel %vm1018, %v954, %v1082
  %v1147 = vsel %vm1019, %v955, %v1083
  %v1148 = vsel %vm1020, %v956, %v1084
  %v1149 = vsel %vm1021, %v957, %v1085
  %v1150 = vsel %vm1022, %v958, %v1086
  %v1151 = vsel %vm1023, %v959, %v1087
  %v1152 = vsel %vm1024, %v960, %v1088
  %v1153 = vsel %vm1025, %v961, %v1089
  %v1154 = vsel %vm1026, %v962, %v1090
  %v1155 = vsel %vm1027, %v963, %v1091
  %v1156 = vsel %vm1028, %v964, %v1092
  %v1157 = vsel %vm1029, %v965, %v1093
  %v1158 = vsel %vm1030, %v966, %v1094
  %v1159 = vsel %vm1031, %v967, %v1095
  %v1160 = vsel %vm1032, %v968, %v1096
  %v1161 = vsel %vm1033, %v969, %v1097
  %v1162 = vsel %vm1034, %v970, %v1098
  %v1163 = vsel %vm1035, %v971, %v1099
  %v1164 = vsel %vm1036, %v972, %v1100
  %v1165 = vsel %vm1037, %v973, %v1101
  %v1166 = vsel %vm1038, %v974, %v1102
  %v1167 = vsel %vm1039, %v975, %v1103
  %v1168 = vsel %vm1040, %v976, %v1104
  %v1169 = vld [vmem:[%s0] sm:$0xff]
  %v1170 = vld [vmem:[%s0 + $0x8] sm:$0xff]
  %v1171 = vld [vmem:[%s0 + $0x10] sm:$0xff]
  %v1172 = vld [vmem:[%s0 + $0x18] sm:$0xff]
  %v1173 = vld [vmem:[%s0 + $0x20] sm:$0xff]
  %v1174 = vld [vmem:[%s0 + $0x28] sm:$0xff]
  %v1175 = vld [vmem:[%s0 + $0x30] sm:$0xff]
  %v1176 = vld [vmem:[%s0 + $0x38] sm:$0xff]
  %v1177 = vld [vmem:[%s0 + $0x40] sm:$0xff]
  %v1178 = vld [vmem:[%s0 + $0x48] sm:$0xff]
  %v1179 = vld [vmem:[%s0 + $0x50] sm:$0xff]
  %v1180 = vld [vmem:[%s0 + $0x58] sm:$0xff]
  %v1181 = vld [vmem:[%s0 + $0x60] sm:$0xff]
  %v1182 = vld [vmem:[%s0 + $0x68] sm:$0xff]
  %v1183 = vld [vmem:[%s0 + $0x70] sm:$0xff]
  %v1184 = vld [vmem:[%s0 + $0x78] sm:$0xff]
  %v1185 = vld [vmem:[%s0 + $0x80] sm:$0xff]
  %v1186 = vld [vmem:[%s0 + $0x88] sm:$0xff]
  %v1187 = vld [vmem:[%s0 + $0x90] sm:$0xff]
  %v1188 = vld [vmem:[%s0 + $0x98] sm:$0xff]
  %v1189 = vld [vmem:[%s0 + $0xa0] sm:$0xff]
  %v1190 = vld [vmem:[%s0 + $0xa8] sm:$0xff]
  %v1191 = vld [vmem:[%s0 + $0xb0] sm:$0xff]
  %v1192 = vld [vmem:[%s0 + $0xb8] sm:$0xff]
  %v1193 = vld [vmem:[%s0 + $0xc0] sm:$0xff]
  %v1194 = vld [vmem:[%s0 + $0xc8] sm:$0xff]
  %v1195 = vld [vmem:[%s0 + $0xd0] sm:$0xff]
  %v1196 = vld [vmem:[%s0 + $0xd8] sm:$0xff]
  %v1197 = vld [vmem:[%s0 + $0xe0] sm:$0xff]
  %v1198 = vld [vmem:[%s0 + $0xe8] sm:$0xff]
  %v1199 = vld [vmem:[%s0 + $0xf0] sm:$0xff]
  %v1200 = vld [vmem:[%s0 + $0xf8] sm:$0xff]
  %1201 = vmatpush.msra.mxu0 %v1120
  %1202 = vmatpush.msra.mxu0 %v1119
  %1203 = vmatpush.msra.mxu0 %v1118
  %1204 = vmatpush.msra.mxu0 %v1117
  %1205 = vmatpush.msra.mxu0 %v1116
  %1206 = vmatpush.msra.mxu0 %v1115
  %1207 = vmatpush.msra.mxu0 %v1114
  %1208 = vmatpush.msra.mxu0 %v1113
  %1209 = vmatpush.msra.mxu0 %v1112
  %1210 = vmatpush.msra.mxu0 %v1111
  %1211 = vmatpush.msra.mxu0 %v1110
  %1212 = vmatpush.msra.mxu0 %v1109
  %1213 = vmatpush.msra.mxu0 %v1108
  %1214 = vmatpush.msra.mxu0 %v1107
  %1215 = vmatpush.msra.mxu0 %v1106
  %1216 = vmatpush.msra.mxu0 %v1105
  %1217 = vmatmul.f32.gmra.mxu0 %v1169
  %v1218 = vpop.f32.mrf.mxu0
  %v1219 = vadd.f32 0.0, %v1218
  %1220 = vmatmul.f32.gmra.mxu0 %v1173
  %v1221 = vpop.f32.mrf.mxu0
  %v1222 = vadd.f32 0.0, %v1221
  %1223 = vmatmul.f32.gmra.mxu0 %v1177
  %v1224 = vpop.f32.mrf.mxu0
  %v1225 = vadd.f32 0.0, %v1224
  %1226 = vmatmul.f32.gmra.mxu0 %v1181
  %v1227 = vpop.f32.mrf.mxu0
  %v1228 = vadd.f32 0.0, %v1227
  %1229 = vmatmul.f32.gmra.mxu0 %v1185
  %v1230 = vpop.f32.mrf.mxu0
  %v1231 = vadd.f32 0.0, %v1230
  %1232 = vmatmul.f32.gmra.mxu0 %v1189
  %v1233 = vpop.f32.mrf.mxu0
  %v1234 = vadd.f32 0.0, %v1233
  %1235 = vmatmul.f32.gmra.mxu0 %v1193
  %v1236 = vpop.f32.mrf.mxu0
  %v1237 = vadd.f32 0.0, %v1236
  %1238 = vmatmul.f32.gmra.mxu0 %v1197
  %v1239 = vpop.f32.mrf.mxu0
  %v1240 = vadd.f32 0.0, %v1239
  %1241 = vdwg.mxu0
  %1242 = vmatpush.msra.mxu0 %v1136
  %1243 = vmatpush.msra.mxu0 %v1135
  %1244 = vmatpush.msra.mxu0 %v1134
  %1245 = vmatpush.msra.mxu0 %v1133
  %1246 = vmatpush.msra.mxu0 %v1132
  %1247 = vmatpush.msra.mxu0 %v1131
  %1248 = vmatpush.msra.mxu0 %v1130
  %1249 = vmatpush.msra.mxu0 %v1129
  %1250 = vmatpush.msra.mxu0 %v1128
  %1251 = vmatpush.msra.mxu0 %v1127
  %1252 = vmatpush.msra.mxu0 %v1126
  %1253 = vmatpush.msra.mxu0 %v1125
  %1254 = vmatpush.msra.mxu0 %v1124
  %1255 = vmatpush.msra.mxu0 %v1123
  %1256 = vmatpush.msra.mxu0 %v1122
  %1257 = vmatpush.msra.mxu0 %v1121
  %1258 = vmatmul.f32.gmra.mxu0 %v1170
  %v1259 = vpop.f32.mrf.mxu0
  %v1260 = vadd.f32 %v1219, %v1259
  %1261 = vmatmul.f32.gmra.mxu0 %v1174
  %v1262 = vpop.f32.mrf.mxu0
  %v1263 = vadd.f32 %v1222, %v1262
  %1264 = vmatmul.f32.gmra.mxu0 %v1178
  %v1265 = vpop.f32.mrf.mxu0
  %v1266 = vadd.f32 %v1225, %v1265
  %1267 = vmatmul.f32.gmra.mxu0 %v1182
  %v1268 = vpop.f32.mrf.mxu0
  %v1269 = vadd.f32 %v1228, %v1268
  %1270 = vmatmul.f32.gmra.mxu0 %v1186
  %v1271 = vpop.f32.mrf.mxu0
  %v1272 = vadd.f32 %v1231, %v1271
  %1273 = vmatmul.f32.gmra.mxu0 %v1190
  %v1274 = vpop.f32.mrf.mxu0
  %v1275 = vadd.f32 %v1234, %v1274
  %1276 = vmatmul.f32.gmra.mxu0 %v1194
  %v1277 = vpop.f32.mrf.mxu0
  %v1278 = vadd.f32 %v1237, %v1277
  %1279 = vmatmul.f32.gmra.mxu0 %v1198
  %v1280 = vpop.f32.mrf.mxu0
  %v1281 = vadd.f32 %v1240, %v1280
  %1282 = vdwg.mxu0
  %1283 = vmatpush.msra.mxu0 %v1152
  %1284 = vmatpush.msra.mxu0 %v1151
  %1285 = vmatpush.msra.mxu0 %v1150
  %1286 = vmatpush.msra.mxu0 %v1149
  %1287 = vmatpush.msra.mxu0 %v1148
  %1288 = vmatpush.msra.mxu0 %v1147
  %1289 = vmatpush.msra.mxu0 %v1146
  %1290 = vmatpush.msra.mxu0 %v1145
  %1291 = vmatpush.msra.mxu0 %v1144
  %1292 = vmatpush.msra.mxu0 %v1143
  %1293 = vmatpush.msra.mxu0 %v1142
  %1294 = vmatpush.msra.mxu0 %v1141
  %1295 = vmatpush.msra.mxu0 %v1140
  %1296 = vmatpush.msra.mxu0 %v1139
  %1297 = vmatpush.msra.mxu0 %v1138
  %1298 = vmatpush.msra.mxu0 %v1137
  %1299 = vmatmul.f32.gmra.mxu0 %v1171
  %v1300 = vpop.f32.mrf.mxu0
  %v1301 = vadd.f32 %v1260, %v1300
  %1302 = vmatmul.f32.gmra.mxu0 %v1175
  %v1303 = vpop.f32.mrf.mxu0
  %v1304 = vadd.f32 %v1263, %v1303
  %1305 = vmatmul.f32.gmra.mxu0 %v1179
  %v1306 = vpop.f32.mrf.mxu0
  %v1307 = vadd.f32 %v1266, %v1306
  %1308 = vmatmul.f32.gmra.mxu0 %v1183
  %v1309 = vpop.f32.mrf.mxu0
  %v1310 = vadd.f32 %v1269, %v1309
  %1311 = vmatmul.f32.gmra.mxu0 %v1187
  %v1312 = vpop.f32.mrf.mxu0
  %v1313 = vadd.f32 %v1272, %v1312
  %1314 = vmatmul.f32.gmra.mxu0 %v1191
  %v1315 = vpop.f32.mrf.mxu0
  %v1316 = vadd.f32 %v1275, %v1315
  %1317 = vmatmul.f32.gmra.mxu0 %v1195
  %v1318 = vpop.f32.mrf.mxu0
  %v1319 = vadd.f32 %v1278, %v1318
  %1320 = vmatmul.f32.gmra.mxu0 %v1199
  %v1321 = vpop.f32.mrf.mxu0
  %v1322 = vadd.f32 %v1281, %v1321
  %1323 = vdwg.mxu0
  %1324 = vmatpush.msra.mxu0 %v1168
  %1325 = vmatpush.msra.mxu0 %v1167
  %1326 = vmatpush.msra.mxu0 %v1166
  %1327 = vmatpush.msra.mxu0 %v1165
  %1328 = vmatpush.msra.mxu0 %v1164
  %1329 = vmatpush.msra.mxu0 %v1163
  %1330 = vmatpush.msra.mxu0 %v1162
  %1331 = vmatpush.msra.mxu0 %v1161
  %1332 = vmatpush.msra.mxu0 %v1160
  %1333 = vmatpush.msra.mxu0 %v1159
  %1334 = vmatpush.msra.mxu0 %v1158
  %1335 = vmatpush.msra.mxu0 %v1157
  %1336 = vmatpush.msra.mxu0 %v1156
  %1337 = vmatpush.msra.mxu0 %v1155
  %1338 = vmatpush.msra.mxu0 %v1154
  %1339 = vmatpush.msra.mxu0 %v1153
  %1340 = vmatmul.f32.gmra.mxu0 %v1172
  %v1341 = vpop.f32.mrf.mxu0
  %v1342 = vadd.f32 %v1301, %v1341
  %1343 = vmatmul.f32.gmra.mxu0 %v1176
  %v1344 = vpop.f32.mrf.mxu0
  %v1345 = vadd.f32 %v1304, %v1344
  %1346 = vmatmul.f32.gmra.mxu0 %v1180
  %v1347 = vpop.f32.mrf.mxu0
  %v1348 = vadd.f32 %v1307, %v1347
  %1349 = vmatmul.f32.gmra.mxu0 %v1184
  %v1350 = vpop.f32.mrf.mxu0
  %v1351 = vadd.f32 %v1310, %v1350
  %1352 = vmatmul.f32.gmra.mxu0 %v1188
  %v1353 = vpop.f32.mrf.mxu0
  %v1354 = vadd.f32 %v1313, %v1353
  %1355 = vmatmul.f32.gmra.mxu0 %v1192
  %v1356 = vpop.f32.mrf.mxu0
  %v1357 = vadd.f32 %v1316, %v1356
  %1358 = vmatmul.f32.gmra.mxu0 %v1196
  %v1359 = vpop.f32.mrf.mxu0
  %v1360 = vadd.f32 %v1319, %v1359
  %1361 = vmatmul.f32.gmra.mxu0 %v1200
  %v1362 = vpop.f32.mrf.mxu0
  %v1363 = vadd.f32 %v1322, %v1362
  %1364 = vdwg.mxu0
  %vm1365 = vcmask 261120
  %1366 = vst.msk [vmem:[%s4] sm:$0xff] %vm1365, %v1342
  %1367 = vst.msk [vmem:[%s4 + $0x8] sm:$0xff] %vm1365, %v1345
  %1368 = vst.msk [vmem:[%s4 + $0x10] sm:$0xff] %vm1365, %v1348
  %1369 = vst.msk [vmem:[%s4 + $0x18] sm:$0xff] %vm1365, %v1351
  %1370 = vst.msk [vmem:[%s4 + $0x20] sm:$0xff] %vm1365, %v1354
  %1371 = vst.msk [vmem:[%s4 + $0x28] sm:$0xff] %vm1365, %v1357
  %1372 = vst.msk [vmem:[%s4 + $0x30] sm:$0xff] %vm1365, %v1360
  %1373 = vst.msk [vmem:[%s4 + $0x38] sm:$0xff] %vm1365, %v1363
  // Predicated region
  $region18: #{discriminator_forward.8} parent=0 // pred_check
    _
  $region19: #{discriminator_forward.8} parent=0 // pred_check_branch
    %1375 = sbr.rel (0) target = $region21
  $region20: #{discriminator_forward.8} parent=0 // pred_region
    _
  $region21: #{discriminator_forward.8} parent=0 // pred_fallthru
    _
  // Predicated region
  $region22: #{discriminator_forward.8} parent=0 // pred_check
    _
  $region23: #{discriminator_forward.8} parent=0 // pred_check_branch
    %1377 = sbr.rel (0) target = $region25
  $region24: #{discriminator_forward.8} parent=0 // pred_region
    _
  $region25: #{discriminator_forward.8} parent=0 // pred_fallthru
    _

// kernel: discriminator_forward.9
$region0: #{discriminator_forward.9}
  #allocation0 [shape = 'u32[]', space=smem, size = 0x4, offset = 0x4, fixed_abs, tag = 'smem constant byte address 0x4 - core index']
  #allocation1 [shape = 'u32[72,128]{1,0:T(1,128)}', space=vmem, size = 0x9000, scoped, tag = 'internal scratch']
  %s0 = inlined_call_operand.vmem [shape: f32[1,1024], index: 0, kind: input, shape index: {}]
  %s1 = inlined_call_operand.vmem [shape: f32[1024,2], index: 1, kind: input, shape index: {}]
  %s2 = inlined_call_operand.vmem [shape: f32[1024,1], index: 2, kind: input, shape index: {}]
  %s3 = inlined_call_operand.vmem [shape: f32[1024,1], index: 3, kind: input, shape index: {}]
  %s4 = inlined_call_operand.hbm [shape: f32[1,2], index: 4, kind: output, shape index: {}]
  %s5 = sld [smem:[#allocation0]]
  $region26: #{discriminator_forward.9} parent=0
    _
  %s7 = ssub.s32 1, %s5
  %s8 = scalar_select 0, %s7, %s5
  $region1: #{discriminator_forward.9} parent=0
    #allocation2 [shape = 'u8[512]{0}', space=vmem, size = 0x400, scoped, tag = 'output window, operand 0, single buffered']
    #allocation3 [shape = 's32[1]{0}', space=sflag, size = 0x4, scoped, tag = 'scoped memory for discriminator_forward.9']
    %9 = vsyncpa [#allocation3], 0
    // Predicated region
    $region2: #{discriminator_forward.9} parent=1 // pred_check
      _
    $region3: #{discriminator_forward.9} parent=1 // pred_check_branch
      %11 = sbr.rel (0) target = $region5
    $region4: #{discriminator_forward.9} parent=1 // pred_region
      _
    $region5: #{discriminator_forward.9} parent=1 // pred_fallthru
      _
    // Predicated region
    $region6: #{discriminator_forward.9} parent=1 // pred_check
      _
    $region7: #{discriminator_forward.9} parent=1 // pred_check_branch
      %13 = sbr.rel (0) target = $region9
    $region8: #{discriminator_forward.9} parent=1 // pred_region
      _
    $region9: #{discriminator_forward.9} parent=1 // pred_fallthru
      _
    // Predicated region
    $region10: #{discriminator_forward.9} parent=1 // pred_check
      _
    $region11: #{discriminator_forward.9} parent=1 // pred_check_branch
      %15 = sbr.rel (0) target = $region13
    $region12: #{discriminator_forward.9} parent=1 // pred_region
      _
    $region13: #{discriminator_forward.9} parent=1 // pred_fallthru
      _
    // Predicated region
    $region14: #{discriminator_forward.9} parent=1 // pred_check
      _
    $region15: #{discriminator_forward.9} parent=1 // pred_check_branch
      %17 = sbr.rel (0) target = $region17
    $region16: #{discriminator_forward.9} parent=1 // pred_region
      _
    $region17: #{discriminator_forward.9} parent=1 // pred_fallthru
      _
    %v18 = vld [vmem:[%s1] sm:$0xff]
    %v19 = vld [vmem:[%s1 + $0x8] sm:$0xff]
    %v20 = vld [vmem:[%s1 + $0x10] sm:$0xff]
    %v21 = vld [vmem:[%s1 + $0x18] sm:$0xff]
    %v22 = vld [vmem:[%s1 + $0x20] sm:$0xff]
    %v23 = vld [vmem:[%s1 + $0x28] sm:$0xff]
    %v24 = vld [vmem:[%s1 + $0x30] sm:$0xff]
    %v25 = vld [vmem:[%s1 + $0x38] sm:$0xff]
    %v26 = vld [vmem:[%s1 + $0x40] sm:$0xff]
    %v27 = vld [vmem:[%s1 + $0x48] sm:$0xff]
    %v28 = vld [vmem:[%s1 + $0x50] sm:$0xff]
    %v29 = vld [vmem:[%s1 + $0x58] sm:$0xff]
    %v30 = vld [vmem:[%s1 + $0x60] sm:$0xff]
    %v31 = vld [vmem:[%s1 + $0x68] sm:$0xff]
    %v32 = vld [vmem:[%s1 + $0x70] sm:$0xff]
    %v33 = vld [vmem:[%s1 + $0x78] sm:$0xff]
    %v34 = vld [vmem:[%s1 + $0x80] sm:$0xff]
    %v35 = vld [vmem:[%s1 + $0x88] sm:$0xff]
    %v36 = vld [vmem:[%s1 + $0x90] sm:$0xff]
    %v37 = vld [vmem:[%s1 + $0x98] sm:$0xff]
    %v38 = vld [vmem:[%s1 + $0xa0] sm:$0xff]
    %v39 = vld [vmem:[%s1 + $0xa8] sm:$0xff]
    %v40 = vld [vmem:[%s1 + $0xb0] sm:$0xff]
    %v41 = vld [vmem:[%s1 + $0xb8] sm:$0xff]
    %v42 = vld [vmem:[%s1 + $0xc0] sm:$0xff]
    %v43 = vld [vmem:[%s1 + $0xc8] sm:$0xff]
    %v44 = vld [vmem:[%s1 + $0xd0] sm:$0xff]
    %v45 = vld [vmem:[%s1 + $0xd8] sm:$0xff]
    %v46 = vld [vmem:[%s1 + $0xe0] sm:$0xff]
    %v47 = vld [vmem:[%s1 + $0xe8] sm:$0xff]
    %v48 = vld [vmem:[%s1 + $0xf0] sm:$0xff]
    %v49 = vld [vmem:[%s1 + $0xf8] sm:$0xff]
    %v50 = vld [vmem:[%s1 + $0x100] sm:$0xff]
    %v51 = vld [vmem:[%s1 + $0x108] sm:$0xff]
    %v52 = vld [vmem:[%s1 + $0x110] sm:$0xff]
    %v53 = vld [vmem:[%s1 + $0x118] sm:$0xff]
    %v54 = vld [vmem:[%s1 + $0x120] sm:$0xff]
    %v55 = vld [vmem:[%s1 + $0x128] sm:$0xff]
    %v56 = vld [vmem:[%s1 + $0x130] sm:$0xff]
    %v57 = vld [vmem:[%s1 + $0x138] sm:$0xff]
    %v58 = vld [vmem:[%s1 + $0x140] sm:$0xff]
    %v59 = vld [vmem:[%s1 + $0x148] sm:$0xff]
    %v60 = vld [vmem:[%s1 + $0x150] sm:$0xff]
    %v61 = vld [vmem:[%s1 + $0x158] sm:$0xff]
    %v62 = vld [vmem:[%s1 + $0x160] sm:$0xff]
    %v63 = vld [vmem:[%s1 + $0x168] sm:$0xff]
    %v64 = vld [vmem:[%s1 + $0x170] sm:$0xff]
    %v65 = vld [vmem:[%s1 + $0x178] sm:$0xff]
    %v66 = vld [vmem:[%s1 + $0x180] sm:$0xff]
    %v67 = vld [vmem:[%s1 + $0x188] sm:$0xff]
    %v68 = vld [vmem:[%s1 + $0x190] sm:$0xff]
    %v69 = vld [vmem:[%s1 + $0x198] sm:$0xff]
    %v70 = vld [vmem:[%s1 + $0x1a0] sm:$0xff]
    %v71 = vld [vmem:[%s1 + $0x1a8] sm:$0xff]
    %v72 = vld [vmem:[%s1 + $0x1b0] sm:$0xff]
    %v73 = vld [vmem:[%s1 + $0x1b8] sm:$0xff]
    %v74 = vld [vmem:[%s1 + $0x1c0] sm:$0xff]
    %v75 = vld [vmem:[%s1 + $0x1c8] sm:$0xff]
    %v76 = vld [vmem:[%s1 + $0x1d0] sm:$0xff]
    %v77 = vld [vmem:[%s1 + $0x1d8] sm:$0xff]
    %v78 = vld [vmem:[%s1 + $0x1e0] sm:$0xff]
    %v79 = vld [vmem:[%s1 + $0x1e8] sm:$0xff]
    %v80 = vld [vmem:[%s1 + $0x1f0] sm:$0xff]
    %v81 = vld [vmem:[%s1 + $0x1f8] sm:$0xff]
    %v82 = vld [vmem:[%s1 + $0x200] sm:$0xff]
    %v83 = vld [vmem:[%s1 + $0x208] sm:$0xff]
    %v84 = vld [vmem:[%s1 + $0x210] sm:$0xff]
    %v85 = vld [vmem:[%s1 + $0x218] sm:$0xff]
    %v86 = vld [vmem:[%s1 + $0x220] sm:$0xff]
    %v87 = vld [vmem:[%s1 + $0x228] sm:$0xff]
    %v88 = vld [vmem:[%s1 + $0x230] sm:$0xff]
    %v89 = vld [vmem:[%s1 + $0x238] sm:$0xff]
    %v90 = vld [vmem:[%s1 + $0x240] sm:$0xff]
    %v91 = vld [vmem:[%s1 + $0x248] sm:$0xff]
    %v92 = vld [vmem:[%s1 + $0x250] sm:$0xff]
    %v93 = vld [vmem:[%s1 + $0x258] sm:$0xff]
    %v94 = vld [vmem:[%s1 + $0x260] sm:$0xff]
    %v95 = vld [vmem:[%s1 + $0x268] sm:$0xff]
    %v96 = vld [vmem:[%s1 + $0x270] sm:$0xff]
    %v97 = vld [vmem:[%s1 + $0x278] sm:$0xff]
    %v98 = vld [vmem:[%s1 + $0x280] sm:$0xff]
    %v99 = vld [vmem:[%s1 + $0x288] sm:$0xff]
    %v100 = vld [vmem:[%s1 + $0x290] sm:$0xff]
    %v101 = vld [vmem:[%s1 + $0x298] sm:$0xff]
    %v102 = vld [vmem:[%s1 + $0x2a0] sm:$0xff]
    %v103 = vld [vmem:[%s1 + $0x2a8] sm:$0xff]
    %v104 = vld [vmem:[%s1 + $0x2b0] sm:$0xff]
    %v105 = vld [vmem:[%s1 + $0x2b8] sm:$0xff]
    %v106 = vld [vmem:[%s1 + $0x2c0] sm:$0xff]
    %v107 = vld [vmem:[%s1 + $0x2c8] sm:$0xff]
    %v108 = vld [vmem:[%s1 + $0x2d0] sm:$0xff]
    %v109 = vld [vmem:[%s1 + $0x2d8] sm:$0xff]
    %v110 = vld [vmem:[%s1 + $0x2e0] sm:$0xff]
    %v111 = vld [vmem:[%s1 + $0x2e8] sm:$0xff]
    %v112 = vld [vmem:[%s1 + $0x2f0] sm:$0xff]
    %v113 = vld [vmem:[%s1 + $0x2f8] sm:$0xff]
    %v114 = vld [vmem:[%s1 + $0x300] sm:$0xff]
    %v115 = vld [vmem:[%s1 + $0x308] sm:$0xff]
    %v116 = vld [vmem:[%s1 + $0x310] sm:$0xff]
    %v117 = vld [vmem:[%s1 + $0x318] sm:$0xff]
    %v118 = vld [vmem:[%s1 + $0x320] sm:$0xff]
    %v119 = vld [vmem:[%s1 + $0x328] sm:$0xff]
    %v120 = vld [vmem:[%s1 + $0x330] sm:$0xff]
    %v121 = vld [vmem:[%s1 + $0x338] sm:$0xff]
    %v122 = vld [vmem:[%s1 + $0x340] sm:$0xff]
    %v123 = vld [vmem:[%s1 + $0x348] sm:$0xff]
    %v124 = vld [vmem:[%s1 + $0x350] sm:$0xff]
    %v125 = vld [vmem:[%s1 + $0x358] sm:$0xff]
    %v126 = vld [vmem:[%s1 + $0x360] sm:$0xff]
    %v127 = vld [vmem:[%s1 + $0x368] sm:$0xff]
    %v128 = vld [vmem:[%s1 + $0x370] sm:$0xff]
    %v129 = vld [vmem:[%s1 + $0x378] sm:$0xff]
    %v130 = vld [vmem:[%s1 + $0x380] sm:$0xff]
    %v131 = vld [vmem:[%s1 + $0x388] sm:$0xff]
    %v132 = vld [vmem:[%s1 + $0x390] sm:$0xff]
    %v133 = vld [vmem:[%s1 + $0x398] sm:$0xff]
    %v134 = vld [vmem:[%s1 + $0x3a0] sm:$0xff]
    %v135 = vld [vmem:[%s1 + $0x3a8] sm:$0xff]
    %v136 = vld [vmem:[%s1 + $0x3b0] sm:$0xff]
    %v137 = vld [vmem:[%s1 + $0x3b8] sm:$0xff]
    %v138 = vld [vmem:[%s1 + $0x3c0] sm:$0xff]
    %v139 = vld [vmem:[%s1 + $0x3c8] sm:$0xff]
    %v140 = vld [vmem:[%s1 + $0x3d0] sm:$0xff]
    %v141 = vld [vmem:[%s1 + $0x3d8] sm:$0xff]
    %v142 = vld [vmem:[%s1 + $0x3e0] sm:$0xff]
    %v143 = vld [vmem:[%s1 + $0x3e8] sm:$0xff]
    %v144 = vld [vmem:[%s1 + $0x3f0] sm:$0xff]
    %v145 = vld [vmem:[%s1 + $0x3f8] sm:$0xff]
    %v146 = vld [vmem:[%s2] sm:$0xff]
    %v147 = vld [vmem:[%s2 + $0x8] sm:$0xff]
    %v148 = vld [vmem:[%s2 + $0x10] sm:$0xff]
    %v149 = vld [vmem:[%s2 + $0x18] sm:$0xff]
    %v150 = vld [vmem:[%s2 + $0x20] sm:$0xff]
    %v151 = vld [vmem:[%s2 + $0x28] sm:$0xff]
    %v152 = vld [vmem:[%s2 + $0x30] sm:$0xff]
    %v153 = vld [vmem:[%s2 + $0x38] sm:$0xff]
    %v154 = vld [vmem:[%s2 + $0x40] sm:$0xff]
    %v155 = vld [vmem:[%s2 + $0x48] sm:$0xff]
    %v156 = vld [vmem:[%s2 + $0x50] sm:$0xff]
    %v157 = vld [vmem:[%s2 + $0x58] sm:$0xff]
    %v158 = vld [vmem:[%s2 + $0x60] sm:$0xff]
    %v159 = vld [vmem:[%s2 + $0x68] sm:$0xff]
    %v160 = vld [vmem:[%s2 + $0x70] sm:$0xff]
    %v161 = vld [vmem:[%s2 + $0x78] sm:$0xff]
    %v162 = vld [vmem:[%s2 + $0x80] sm:$0xff]
    %v163 = vld [vmem:[%s2 + $0x88] sm:$0xff]
    %v164 = vld [vmem:[%s2 + $0x90] sm:$0xff]
    %v165 = vld [vmem:[%s2 + $0x98] sm:$0xff]
    %v166 = vld [vmem:[%s2 + $0xa0] sm:$0xff]
    %v167 = vld [vmem:[%s2 + $0xa8] sm:$0xff]
    %v168 = vld [vmem:[%s2 + $0xb0] sm:$0xff]
    %v169 = vld [vmem:[%s2 + $0xb8] sm:$0xff]
    %v170 = vld [vmem:[%s2 + $0xc0] sm:$0xff]
    %v171 = vld [vmem:[%s2 + $0xc8] sm:$0xff]
    %v172 = vld [vmem:[%s2 + $0xd0] sm:$0xff]
    %v173 = vld [vmem:[%s2 + $0xd8] sm:$0xff]
    %v174 = vld [vmem:[%s2 + $0xe0] sm:$0xff]
    %v175 = vld [vmem:[%s2 + $0xe8] sm:$0xff]
    %v176 = vld [vmem:[%s2 + $0xf0] sm:$0xff]
    %v177 = vld [vmem:[%s2 + $0xf8] sm:$0xff]
    %v178 = vld [vmem:[%s2 + $0x100] sm:$0xff]
    %v179 = vld [vmem:[%s2 + $0x108] sm:$0xff]
    %v180 = vld [vmem:[%s2 + $0x110] sm:$0xff]
    %v181 = vld [vmem:[%s2 + $0x118] sm:$0xff]
    %v182 = vld [vmem:[%s2 + $0x120] sm:$0xff]
    %v183 = vld [vmem:[%s2 + $0x128] sm:$0xff]
    %v184 = vld [vmem:[%s2 + $0x130] sm:$0xff]
    %v185 = vld [vmem:[%s2 + $0x138] sm:$0xff]
    %v186 = vld [vmem:[%s2 + $0x140] sm:$0xff]
    %v187 = vld [vmem:[%s2 + $0x148] sm:$0xff]
    %v188 = vld [vmem:[%s2 + $0x150] sm:$0xff]
    %v189 = vld [vmem:[%s2 + $0x158] sm:$0xff]
    %v190 = vld [vmem:[%s2 + $0x160] sm:$0xff]
    %v191 = vld [vmem:[%s2 + $0x168] sm:$0xff]
    %v192 = vld [vmem:[%s2 + $0x170] sm:$0xff]
    %v193 = vld [vmem:[%s2 + $0x178] sm:$0xff]
    %v194 = vld [vmem:[%s2 + $0x180] sm:$0xff]
    %v195 = vld [vmem:[%s2 + $0x188] sm:$0xff]
    %v196 = vld [vmem:[%s2 + $0x190] sm:$0xff]
    %v197 = vld [vmem:[%s2 + $0x198] sm:$0xff]
    %v198 = vld [vmem:[%s2 + $0x1a0] sm:$0xff]
    %v199 = vld [vmem:[%s2 + $0x1a8] sm:$0xff]
    %v200 = vld [vmem:[%s2 + $0x1b0] sm:$0xff]
    %v201 = vld [vmem:[%s2 + $0x1b8] sm:$0xff]
    %v202 = vld [vmem:[%s2 + $0x1c0] sm:$0xff]
    %v203 = vld [vmem:[%s2 + $0x1c8] sm:$0xff]
    %v204 = vld [vmem:[%s2 + $0x1d0] sm:$0xff]
    %v205 = vld [vmem:[%s2 + $0x1d8] sm:$0xff]
    %v206 = vld [vmem:[%s2 + $0x1e0] sm:$0xff]
    %v207 = vld [vmem:[%s2 + $0x1e8] sm:$0xff]
    %v208 = vld [vmem:[%s2 + $0x1f0] sm:$0xff]
    %v209 = vld [vmem:[%s2 + $0x1f8] sm:$0xff]
    %v210 = vld [vmem:[%s2 + $0x200] sm:$0xff]
    %v211 = vld [vmem:[%s2 + $0x208] sm:$0xff]
    %v212 = vld [vmem:[%s2 + $0x210] sm:$0xff]
    %v213 = vld [vmem:[%s2 + $0x218] sm:$0xff]
    %v214 = vld [vmem:[%s2 + $0x220] sm:$0xff]
    %v215 = vld [vmem:[%s2 + $0x228] sm:$0xff]
    %v216 = vld [vmem:[%s2 + $0x230] sm:$0xff]
    %v217 = vld [vmem:[%s2 + $0x238] sm:$0xff]
    %v218 = vld [vmem:[%s2 + $0x240] sm:$0xff]
    %v219 = vld [vmem:[%s2 + $0x248] sm:$0xff]
    %v220 = vld [vmem:[%s2 + $0x250] sm:$0xff]
    %v221 = vld [vmem:[%s2 + $0x258] sm:$0xff]
    %v222 = vld [vmem:[%s2 + $0x260] sm:$0xff]
    %v223 = vld [vmem:[%s2 + $0x268] sm:$0xff]
    %v224 = vld [vmem:[%s2 + $0x270] sm:$0xff]
    %v225 = vld [vmem:[%s2 + $0x278] sm:$0xff]
    %v226 = vld [vmem:[%s2 + $0x280] sm:$0xff]
    %v227 = vld [vmem:[%s2 + $0x288] sm:$0xff]
    %v228 = vld [vmem:[%s2 + $0x290] sm:$0xff]
    %v229 = vld [vmem:[%s2 + $0x298] sm:$0xff]
    %v230 = vld [vmem:[%s2 + $0x2a0] sm:$0xff]
    %v231 = vld [vmem:[%s2 + $0x2a8] sm:$0xff]
    %v232 = vld [vmem:[%s2 + $0x2b0] sm:$0xff]
    %v233 = vld [vmem:[%s2 + $0x2b8] sm:$0xff]
    %v234 = vld [vmem:[%s2 + $0x2c0] sm:$0xff]
    %v235 = vld [vmem:[%s2 + $0x2c8] sm:$0xff]
    %v236 = vld [vmem:[%s2 + $0x2d0] sm:$0xff]
    %v237 = vld [vmem:[%s2 + $0x2d8] sm:$0xff]
    %v238 = vld [vmem:[%s2 + $0x2e0] sm:$0xff]
    %v239 = vld [vmem:[%s2 + $0x2e8] sm:$0xff]
    %v240 = vld [vmem:[%s2 + $0x2f0] sm:$0xff]
    %v241 = vld [vmem:[%s2 + $0x2f8] sm:$0xff]
    %v242 = vld [vmem:[%s2 + $0x300] sm:$0xff]
    %v243 = vld [vmem:[%s2 + $0x308] sm:$0xff]
    %v244 = vld [vmem:[%s2 + $0x310] sm:$0xff]
    %v245 = vld [vmem:[%s2 + $0x318] sm:$0xff]
    %v246 = vld [vmem:[%s2 + $0x320] sm:$0xff]
    %v247 = vld [vmem:[%s2 + $0x328] sm:$0xff]
    %v248 = vld [vmem:[%s2 + $0x330] sm:$0xff]
    %v249 = vld [vmem:[%s2 + $0x338] sm:$0xff]
    %v250 = vld [vmem:[%s2 + $0x340] sm:$0xff]
    %v251 = vld [vmem:[%s2 + $0x348] sm:$0xff]
    %v252 = vld [vmem:[%s2 + $0x350] sm:$0xff]
    %v253 = vld [vmem:[%s2 + $0x358] sm:$0xff]
    %v254 = vld [vmem:[%s2 + $0x360] sm:$0xff]
    %v255 = vld [vmem:[%s2 + $0x368] sm:$0xff]
    %v256 = vld [vmem:[%s2 + $0x370] sm:$0xff]
    %v257 = vld [vmem:[%s2 + $0x378] sm:$0xff]
    %v258 = vld [vmem:[%s2 + $0x380] sm:$0xff]
    %v259 = vld [vmem:[%s2 + $0x388] sm:$0xff]
    %v260 = vld [vmem:[%s2 + $0x390] sm:$0xff]
    %v261 = vld [vmem:[%s2 + $0x398] sm:$0xff]
    %v262 = vld [vmem:[%s2 + $0x3a0] sm:$0xff]
    %v263 = vld [vmem:[%s2 + $0x3a8] sm:$0xff]
    %v264 = vld [vmem:[%s2 + $0x3b0] sm:$0xff]
    %v265 = vld [vmem:[%s2 + $0x3b8] sm:$0xff]
    %v266 = vld [vmem:[%s2 + $0x3c0] sm:$0xff]
    %v267 = vld [vmem:[%s2 + $0x3c8] sm:$0xff]
    %v268 = vld [vmem:[%s2 + $0x3d0] sm:$0xff]
    %v269 = vld [vmem:[%s2 + $0x3d8] sm:$0xff]
    %v270 = vld [vmem:[%s2 + $0x3e0] sm:$0xff]
    %v271 = vld [vmem:[%s2 + $0x3e8] sm:$0xff]
    %v272 = vld [vmem:[%s2 + $0x3f0] sm:$0xff]
    %v273 = vld [vmem:[%s2 + $0x3f8] sm:$0xff]
    %275 = vset.pattern.permute.xlu0 0
    %276 = vperm.xlu0 %275, %v146
    %v277 = vpop.permute.xlu0 %276
    %280 = vset.pattern.permute.xlu0 0
    %281 = vperm.xlu0 %280, %v147
    %v282 = vpop.permute.xlu0 %281
    %285 = vset.pattern.permute.xlu0 0
    %286 = vperm.xlu0 %285, %v148
    %v287 = vpop.permute.xlu0 %286
    %290 = vset.pattern.permute.xlu0 0
    %291 = vperm.xlu0 %290, %v149
    %v292 = vpop.permute.xlu0 %291
    %295 = vset.pattern.permute.xlu0 0
    %296 = vperm.xlu0 %295, %v150
    %v297 = vpop.permute.xlu0 %296
    %300 = vset.pattern.permute.xlu0 0
    %301 = vperm.xlu0 %300, %v151
    %v302 = vpop.permute.xlu0 %301
    %305 = vset.pattern.permute.xlu0 0
    %306 = vperm.xlu0 %305, %v152
    %v307 = vpop.permute.xlu0 %306
    %310 = vset.pattern.permute.xlu0 0
    %311 = vperm.xlu0 %310, %v153
    %v312 = vpop.permute.xlu0 %311
    %315 = vset.pattern.permute.xlu0 0
    %316 = vperm.xlu0 %315, %v154
    %v317 = vpop.permute.xlu0 %316
    %320 = vset.pattern.permute.xlu0 0
    %321 = vperm.xlu0 %320, %v155
    %v322 = vpop.permute.xlu0 %321
    %325 = vset.pattern.permute.xlu0 0
    %326 = vperm.xlu0 %325, %v156
    %v327 = vpop.permute.xlu0 %326
    %330 = vset.pattern.permute.xlu0 0
    %331 = vperm.xlu0 %330, %v157
    %v332 = vpop.permute.xlu0 %331
    %335 = vset.pattern.permute.xlu0 0
    %336 = vperm.xlu0 %335, %v158
    %v337 = vpop.permute.xlu0 %336
    %340 = vset.pattern.permute.xlu0 0
    %341 = vperm.xlu0 %340, %v159
    %v342 = vpop.permute.xlu0 %341
    %345 = vset.pattern.permute.xlu0 0
    %346 = vperm.xlu0 %345, %v160
    %v347 = vpop.permute.xlu0 %346
    %350 = vset.pattern.permute.xlu0 0
    %351 = vperm.xlu0 %350, %v161
    %v352 = vpop.permute.xlu0 %351
    %355 = vset.pattern.permute.xlu0 0
    %356 = vperm.xlu0 %355, %v162
    %v357 = vpop.permute.xlu0 %356
    %360 = vset.pattern.permute.xlu0 0
    %361 = vperm.xlu0 %360, %v163
    %v362 = vpop.permute.xlu0 %361
    %365 = vset.pattern.permute.xlu0 0
    %366 = vperm.xlu0 %365, %v164
    %v367 = vpop.permute.xlu0 %366
    %370 = vset.pattern.permute.xlu0 0
    %371 = vperm.xlu0 %370, %v165
    %v372 = vpop.permute.xlu0 %371
    %375 = vset.pattern.permute.xlu0 0
    %376 = vperm.xlu0 %375, %v166
    %v377 = vpop.permute.xlu0 %376
    %380 = vset.pattern.permute.xlu0 0
    %381 = vperm.xlu0 %380, %v167
    %v382 = vpop.permute.xlu0 %381
    %385 = vset.pattern.permute.xlu0 0
    %386 = vperm.xlu0 %385, %v168
    %v387 = vpop.permute.xlu0 %386
    %390 = vset.pattern.permute.xlu0 0
    %391 = vperm.xlu0 %390, %v169
    %v392 = vpop.permute.xlu0 %391
    %395 = vset.pattern.permute.xlu0 0
    %396 = vperm.xlu0 %395, %v170
    %v397 = vpop.permute.xlu0 %396
    %400 = vset.pattern.permute.xlu0 0
    %401 = vperm.xlu0 %400, %v171
    %v402 = vpop.permute.xlu0 %401
    %405 = vset.pattern.permute.xlu0 0
    %406 = vperm.xlu0 %405, %v172
    %v407 = vpop.permute.xlu0 %406
    %410 = vset.pattern.permute.xlu0 0
    %411 = vperm.xlu0 %410, %v173
    %v412 = vpop.permute.xlu0 %411
    %415 = vset.pattern.permute.xlu0 0
    %416 = vperm.xlu0 %415, %v174
    %v417 = vpop.permute.xlu0 %416
    %420 = vset.pattern.permute.xlu0 0
    %421 = vperm.xlu0 %420, %v175
    %v422 = vpop.permute.xlu0 %421
    %425 = vset.pattern.permute.xlu0 0
    %426 = vperm.xlu0 %425, %v176
    %v427 = vpop.permute.xlu0 %426
    %430 = vset.pattern.permute.xlu0 0
    %431 = vperm.xlu0 %430, %v177
    %v432 = vpop.permute.xlu0 %431
    %435 = vset.pattern.permute.xlu0 0
    %436 = vperm.xlu0 %435, %v178
    %v437 = vpop.permute.xlu0 %436
    %440 = vset.pattern.permute.xlu0 0
    %441 = vperm.xlu0 %440, %v179
    %v442 = vpop.permute.xlu0 %441
    %445 = vset.pattern.permute.xlu0 0
    %446 = vperm.xlu0 %445, %v180
    %v447 = vpop.permute.xlu0 %446
    %450 = vset.pattern.permute.xlu0 0
    %451 = vperm.xlu0 %450, %v181
    %v452 = vpop.permute.xlu0 %451
    %455 = vset.pattern.permute.xlu0 0
    %456 = vperm.xlu0 %455, %v182
    %v457 = vpop.permute.xlu0 %456
    %460 = vset.pattern.permute.xlu0 0
    %461 = vperm.xlu0 %460, %v183
    %v462 = vpop.permute.xlu0 %461
    %465 = vset.pattern.permute.xlu0 0
    %466 = vperm.xlu0 %465, %v184
    %v467 = vpop.permute.xlu0 %466
    %470 = vset.pattern.permute.xlu0 0
    %471 = vperm.xlu0 %470, %v185
    %v472 = vpop.permute.xlu0 %471
    %475 = vset.pattern.permute.xlu0 0
    %476 = vperm.xlu0 %475, %v186
    %v477 = vpop.permute.xlu0 %476
    %480 = vset.pattern.permute.xlu0 0
    %481 = vperm.xlu0 %480, %v187
    %v482 = vpop.permute.xlu0 %481
    %485 = vset.pattern.permute.xlu0 0
    %486 = vperm.xlu0 %485, %v188
    %v487 = vpop.permute.xlu0 %486
    %490 = vset.pattern.permute.xlu0 0
    %491 = vperm.xlu0 %490, %v189
    %v492 = vpop.permute.xlu0 %491
    %495 = vset.pattern.permute.xlu0 0
    %496 = vperm.xlu0 %495, %v190
    %v497 = vpop.permute.xlu0 %496
    %500 = vset.pattern.permute.xlu0 0
    %501 = vperm.xlu0 %500, %v191
    %v502 = vpop.permute.xlu0 %501
    %505 = vset.pattern.permute.xlu0 0
    %506 = vperm.xlu0 %505, %v192
    %v507 = vpop.permute.xlu0 %506
    %510 = vset.pattern.permute.xlu0 0
    %511 = vperm.xlu0 %510, %v193
    %v512 = vpop.permute.xlu0 %511
    %515 = vset.pattern.permute.xlu0 0
    %516 = vperm.xlu0 %515, %v194
    %v517 = vpop.permute.xlu0 %516
    %520 = vset.pattern.permute.xlu0 0
    %521 = vperm.xlu0 %520, %v195
    %v522 = vpop.permute.xlu0 %521
    %525 = vset.pattern.permute.xlu0 0
    %526 = vperm.xlu0 %525, %v196
    %v527 = vpop.permute.xlu0 %526
    %530 = vset.pattern.permute.xlu0 0
    %531 = vperm.xlu0 %530, %v197
    %v532 = vpop.permute.xlu0 %531
    %535 = vset.pattern.permute.xlu0 0
    %536 = vperm.xlu0 %535, %v198
    %v537 = vpop.permute.xlu0 %536
    %540 = vset.pattern.permute.xlu0 0
    %541 = vperm.xlu0 %540, %v199
    %v542 = vpop.permute.xlu0 %541
    %545 = vset.pattern.permute.xlu0 0
    %546 = vperm.xlu0 %545, %v200
    %v547 = vpop.permute.xlu0 %546
    %550 = vset.pattern.permute.xlu0 0
    %551 = vperm.xlu0 %550, %v201
    %v552 = vpop.permute.xlu0 %551
    %555 = vset.pattern.permute.xlu0 0
    %556 = vperm.xlu0 %555, %v202
    %v557 = vpop.permute.xlu0 %556
    %560 = vset.pattern.permute.xlu0 0
    %561 = vperm.xlu0 %560, %v203
    %v562 = vpop.permute.xlu0 %561
    %565 = vset.pattern.permute.xlu0 0
    %566 = vperm.xlu0 %565, %v204
    %v567 = vpop.permute.xlu0 %566
    %570 = vset.pattern.permute.xlu0 0
    %571 = vperm.xlu0 %570, %v205
    %v572 = vpop.permute.xlu0 %571
    %575 = vset.pattern.permute.xlu0 0
    %576 = vperm.xlu0 %575, %v206
    %v577 = vpop.permute.xlu0 %576
    %580 = vset.pattern.permute.xlu0 0
    %581 = vperm.xlu0 %580, %v207
    %v582 = vpop.permute.xlu0 %581
    %585 = vset.pattern.permute.xlu0 0
    %586 = vperm.xlu0 %585, %v208
    %v587 = vpop.permute.xlu0 %586
    %590 = vset.pattern.permute.xlu0 0
    %591 = vperm.xlu0 %590, %v209
    %v592 = vpop.permute.xlu0 %591
    %595 = vset.pattern.permute.xlu0 0
    %596 = vperm.xlu0 %595, %v210
    %v597 = vpop.permute.xlu0 %596
    %600 = vset.pattern.permute.xlu0 0
    %601 = vperm.xlu0 %600, %v211
    %v602 = vpop.permute.xlu0 %601
    %605 = vset.pattern.permute.xlu0 0
    %606 = vperm.xlu0 %605, %v212
    %v607 = vpop.permute.xlu0 %606
    %610 = vset.pattern.permute.xlu0 0
    %611 = vperm.xlu0 %610, %v213
    %v612 = vpop.permute.xlu0 %611
    %615 = vset.pattern.permute.xlu0 0
    %616 = vperm.xlu0 %615, %v214
    %v617 = vpop.permute.xlu0 %616
    %620 = vset.pattern.permute.xlu0 0
    %621 = vperm.xlu0 %620, %v215
    %v622 = vpop.permute.xlu0 %621
    %625 = vset.pattern.permute.xlu0 0
    %626 = vperm.xlu0 %625, %v216
    %v627 = vpop.permute.xlu0 %626
    %630 = vset.pattern.permute.xlu0 0
    %631 = vperm.xlu0 %630, %v217
    %v632 = vpop.permute.xlu0 %631
    %635 = vset.pattern.permute.xlu0 0
    %636 = vperm.xlu0 %635, %v218
    %v637 = vpop.permute.xlu0 %636
    %640 = vset.pattern.permute.xlu0 0
    %641 = vperm.xlu0 %640, %v219
    %v642 = vpop.permute.xlu0 %641
    %645 = vset.pattern.permute.xlu0 0
    %646 = vperm.xlu0 %645, %v220
    %v647 = vpop.permute.xlu0 %646
    %650 = vset.pattern.permute.xlu0 0
    %651 = vperm.xlu0 %650, %v221
    %v652 = vpop.permute.xlu0 %651
    %655 = vset.pattern.permute.xlu0 0
    %656 = vperm.xlu0 %655, %v222
    %v657 = vpop.permute.xlu0 %656
    %660 = vset.pattern.permute.xlu0 0
    %661 = vperm.xlu0 %660, %v223
    %v662 = vpop.permute.xlu0 %661
    %665 = vset.pattern.permute.xlu0 0
    %666 = vperm.xlu0 %665, %v224
    %v667 = vpop.permute.xlu0 %666
    %670 = vset.pattern.permute.xlu0 0
    %671 = vperm.xlu0 %670, %v225
    %v672 = vpop.permute.xlu0 %671
    %675 = vset.pattern.permute.xlu0 0
    %676 = vperm.xlu0 %675, %v226
    %v677 = vpop.permute.xlu0 %676
    %680 = vset.pattern.permute.xlu0 0
    %681 = vperm.xlu0 %680, %v227
    %v682 = vpop.permute.xlu0 %681
    %685 = vset.pattern.permute.xlu0 0
    %686 = vperm.xlu0 %685, %v228
    %v687 = vpop.permute.xlu0 %686
    %690 = vset.pattern.permute.xlu0 0
    %691 = vperm.xlu0 %690, %v229
    %v692 = vpop.permute.xlu0 %691
    %695 = vset.pattern.permute.xlu0 0
    %696 = vperm.xlu0 %695, %v230
    %v697 = vpop.permute.xlu0 %696
    %700 = vset.pattern.permute.xlu0 0
    %701 = vperm.xlu0 %700, %v231
    %v702 = vpop.permute.xlu0 %701
    %705 = vset.pattern.permute.xlu0 0
    %706 = vperm.xlu0 %705, %v232
    %v707 = vpop.permute.xlu0 %706
    %710 = vset.pattern.permute.xlu0 0
    %711 = vperm.xlu0 %710, %v233
    %v712 = vpop.permute.xlu0 %711
    %715 = vset.pattern.permute.xlu0 0
    %716 = vperm.xlu0 %715, %v234
    %v717 = vpop.permute.xlu0 %716
    %720 = vset.pattern.permute.xlu0 0
    %721 = vperm.xlu0 %720, %v235
    %v722 = vpop.permute.xlu0 %721
    %725 = vset.pattern.permute.xlu0 0
    %726 = vperm.xlu0 %725, %v236
    %v727 = vpop.permute.xlu0 %726
    %730 = vset.pattern.permute.xlu0 0
    %731 = vperm.xlu0 %730, %v237
    %v732 = vpop.permute.xlu0 %731
    %735 = vset.pattern.permute.xlu0 0
    %736 = vperm.xlu0 %735, %v238
    %v737 = vpop.permute.xlu0 %736
    %740 = vset.pattern.permute.xlu0 0
    %741 = vperm.xlu0 %740, %v239
    %v742 = vpop.permute.xlu0 %741
    %745 = vset.pattern.permute.xlu0 0
    %746 = vperm.xlu0 %745, %v240
    %v747 = vpop.permute.xlu0 %746
    %750 = vset.pattern.permute.xlu0 0
    %751 = vperm.xlu0 %750, %v241
    %v752 = vpop.permute.xlu0 %751
    %755 = vset.pattern.permute.xlu0 0
    %756 = vperm.xlu0 %755, %v242
    %v757 = vpop.permute.xlu0 %756
    %760 = vset.pattern.permute.xlu0 0
    %761 = vperm.xlu0 %760, %v243
    %v762 = vpop.permute.xlu0 %761
    %765 = vset.pattern.permute.xlu0 0
    %766 = vperm.xlu0 %765, %v244
    %v767 = vpop.permute.xlu0 %766
    %770 = vset.pattern.permute.xlu0 0
    %771 = vperm.xlu0 %770, %v245
    %v772 = vpop.permute.xlu0 %771
    %775 = vset.pattern.permute.xlu0 0
    %776 = vperm.xlu0 %775, %v246
    %v777 = vpop.permute.xlu0 %776
    %780 = vset.pattern.permute.xlu0 0
    %781 = vperm.xlu0 %780, %v247
    %v782 = vpop.permute.xlu0 %781
    %785 = vset.pattern.permute.xlu0 0
    %786 = vperm.xlu0 %785, %v248
    %v787 = vpop.permute.xlu0 %786
    %790 = vset.pattern.permute.xlu0 0
    %791 = vperm.xlu0 %790, %v249
    %v792 = vpop.permute.xlu0 %791
    %795 = vset.pattern.permute.xlu0 0
    %796 = vperm.xlu0 %795, %v250
    %v797 = vpop.permute.xlu0 %796
    %800 = vset.pattern.permute.xlu0 0
    %801 = vperm.xlu0 %800, %v251
    %v802 = vpop.permute.xlu0 %801
    %805 = vset.pattern.permute.xlu0 0
    %806 = vperm.xlu0 %805, %v252
    %v807 = vpop.permute.xlu0 %806
    %810 = vset.pattern.permute.xlu0 0
    %811 = vperm.xlu0 %810, %v253
    %v812 = vpop.permute.xlu0 %811
    %815 = vset.pattern.permute.xlu0 0
    %816 = vperm.xlu0 %815, %v254
    %v817 = vpop.permute.xlu0 %816
    %820 = vset.pattern.permute.xlu0 0
    %821 = vperm.xlu0 %820, %v255
    %v822 = vpop.permute.xlu0 %821
    %825 = vset.pattern.permute.xlu0 0
    %826 = vperm.xlu0 %825, %v256
    %v827 = vpop.permute.xlu0 %826
    %830 = vset.pattern.permute.xlu0 0
    %831 = vperm.xlu0 %830, %v257
    %v832 = vpop.permute.xlu0 %831
    %835 = vset.pattern.permute.xlu0 0
    %836 = vperm.xlu0 %835, %v258
    %v837 = vpop.permute.xlu0 %836
    %840 = vset.pattern.permute.xlu0 0
    %841 = vperm.xlu0 %840, %v259
    %v842 = vpop.permute.xlu0 %841
    %845 = vset.pattern.permute.xlu0 0
    %846 = vperm.xlu0 %845, %v260
    %v847 = vpop.permute.xlu0 %846
    %850 = vset.pattern.permute.xlu0 0
    %851 = vperm.xlu0 %850, %v261
    %v852 = vpop.permute.xlu0 %851
    %855 = vset.pattern.permute.xlu0 0
    %856 = vperm.xlu0 %855, %v262
    %v857 = vpop.permute.xlu0 %856
    %860 = vset.pattern.permute.xlu0 0
    %861 = vperm.xlu0 %860, %v263
    %v862 = vpop.permute.xlu0 %861
    %865 = vset.pattern.permute.xlu0 0
    %866 = vperm.xlu0 %865, %v264
    %v867 = vpop.permute.xlu0 %866
    %870 = vset.pattern.permute.xlu0 0
    %871 = vperm.xlu0 %870, %v265
    %v872 = vpop.permute.xlu0 %871
    %875 = vset.pattern.permute.xlu0 0
    %876 = vperm.xlu0 %875, %v266
    %v877 = vpop.permute.xlu0 %876
    %880 = vset.pattern.permute.xlu0 0
    %881 = vperm.xlu0 %880, %v267
    %v882 = vpop.permute.xlu0 %881
    %885 = vset.pattern.permute.xlu0 0
    %886 = vperm.xlu0 %885, %v268
    %v887 = vpop.permute.xlu0 %886
    %890 = vset.pattern.permute.xlu0 0
    %891 = vperm.xlu0 %890, %v269
    %v892 = vpop.permute.xlu0 %891
    %895 = vset.pattern.permute.xlu0 0
    %896 = vperm.xlu0 %895, %v270
    %v897 = vpop.permute.xlu0 %896
    %900 = vset.pattern.permute.xlu0 0
    %901 = vperm.xlu0 %900, %v271
    %v902 = vpop.permute.xlu0 %901
    %905 = vset.pattern.permute.xlu0 0
    %906 = vperm.xlu0 %905, %v272
    %v907 = vpop.permute.xlu0 %906
    %910 = vset.pattern.permute.xlu0 0
    %911 = vperm.xlu0 %910, %v273
    %v912 = vpop.permute.xlu0 %911
    %v914 = vmul.f32 %v18, %v277
    %v915 = vmul.f32 %v19, %v282
    %v916 = vmul.f32 %v20, %v287
    %v917 = vmul.f32 %v21, %v292
    %v918 = vmul.f32 %v22, %v297
    %v919 = vmul.f32 %v23, %v302
    %v920 = vmul.f32 %v24, %v307
    %v921 = vmul.f32 %v25, %v312
    %v922 = vmul.f32 %v26, %v317
    %v923 = vmul.f32 %v27, %v322
    %v924 = vmul.f32 %v28, %v327
    %v925 = vmul.f32 %v29, %v332
    %v926 = vmul.f32 %v30, %v337
    %v927 = vmul.f32 %v31, %v342
    %v928 = vmul.f32 %v32, %v347
    %v929 = vmul.f32 %v33, %v352
    %v930 = vmul.f32 %v34, %v357
    %v931 = vmul.f32 %v35, %v362
    %v932 = vmul.f32 %v36, %v367
    %v933 = vmul.f32 %v37, %v372
    %v934 = vmul.f32 %v38, %v377
    %v935 = vmul.f32 %v39, %v382
    %v936 = vmul.f32 %v40, %v387
    %v937 = vmul.f32 %v41, %v392
    %v938 = vmul.f32 %v42, %v397
    %v939 = vmul.f32 %v43, %v402
    %v940 = vmul.f32 %v44, %v407
    %v941 = vmul.f32 %v45, %v412
    %v942 = vmul.f32 %v46, %v417
    %v943 = vmul.f32 %v47, %v422
    %v944 = vmul.f32 %v48, %v427
    %v945 = vmul.f32 %v49, %v432
    %v946 = vmul.f32 %v50, %v437
    %v947 = vmul.f32 %v51, %v442
    %v948 = vmul.f32 %v52, %v447
    %v949 = vmul.f32 %v53, %v452
    %v950 = vmul.f32 %v54, %v457
    %v951 = vmul.f32 %v55, %v462
    %v952 = vmul.f32 %v56, %v467
    %v953 = vmul.f32 %v57, %v472
    %v954 = vmul.f32 %v58, %v477
    %v955 = vmul.f32 %v59, %v482
    %v956 = vmul.f32 %v60, %v487
    %v957 = vmul.f32 %v61, %v492
    %v958 = vmul.f32 %v62, %v497
    %v959 = vmul.f32 %v63, %v502
    %v960 = vmul.f32 %v64, %v507
    %v961 = vmul.f32 %v65, %v512
    %v962 = vmul.f32 %v66, %v517
    %v963 = vmul.f32 %v67, %v522
    %v964 = vmul.f32 %v68, %v527
    %v965 = vmul.f32 %v69, %v532
    %v966 = vmul.f32 %v70, %v537
    %v967 = vmul.f32 %v71, %v542
    %v968 = vmul.f32 %v72, %v547
    %v969 = vmul.f32 %v73, %v552
    %v970 = vmul.f32 %v74, %v557
    %v971 = vmul.f32 %v75, %v562
    %v972 = vmul.f32 %v76, %v567
    %v973 = vmul.f32 %v77, %v572
    %v974 = vmul.f32 %v78, %v577
    %v975 = vmul.f32 %v79, %v582
    %v976 = vmul.f32 %v80, %v587
    %v977 = vmul.f32 %v81, %v592
    %v978 = vmul.f32 %v82, %v597
    %v979 = vmul.f32 %v83, %v602
    %v980 = vmul.f32 %v84, %v607
    %v981 = vmul.f32 %v85, %v612
    %v982 = vmul.f32 %v86, %v617
    %v983 = vmul.f32 %v87, %v622
    %v984 = vmul.f32 %v88, %v627
    %v985 = vmul.f32 %v89, %v632
    %v986 = vmul.f32 %v90, %v637
    %v987 = vmul.f32 %v91, %v642
    %v988 = vmul.f32 %v92, %v647
    %v989 = vmul.f32 %v93, %v652
    %v990 = vmul.f32 %v94, %v657
    %v991 = vmul.f32 %v95, %v662
    %v992 = vmul.f32 %v96, %v667
    %v993 = vmul.f32 %v97, %v672
    %v994 = vmul.f32 %v98, %v677
    %v995 = vmul.f32 %v99, %v682
    %v996 = vmul.f32 %v100, %v687
    %v997 = vmul.f32 %v101, %v692
    %v998 = vmul.f32 %v102, %v697
    %v999 = vmul.f32 %v103, %v702
    %v1000 = vmul.f32 %v104, %v707
    %v1001 = vmul.f32 %v105, %v712
    %v1002 = vmul.f32 %v106, %v717
    %v1003 = vmul.f32 %v107, %v722
    %v1004 = vmul.f32 %v108, %v727
    %v1005 = vmul.f32 %v109, %v732
    %v1006 = vmul.f32 %v110, %v737
    %v1007 = vmul.f32 %v111, %v742
    %v1008 = vmul.f32 %v112, %v747
    %v1009 = vmul.f32 %v113, %v752
    %v1010 = vmul.f32 %v114, %v757
    %v1011 = vmul.f32 %v115, %v762
    %v1012 = vmul.f32 %v116, %v767
    %v1013 = vmul.f32 %v117, %v772
    %v1014 = vmul.f32 %v118, %v777
    %v1015 = vmul.f32 %v119, %v782
    %v1016 = vmul.f32 %v120, %v787
    %v1017 = vmul.f32 %v121, %v792
    %v1018 = vmul.f32 %v122, %v797
    %v1019 = vmul.f32 %v123, %v802
    %v1020 = vmul.f32 %v124, %v807
    %v1021 = vmul.f32 %v125, %v812
    %v1022 = vmul.f32 %v126, %v817
    %v1023 = vmul.f32 %v127, %v822
    %v1024 = vmul.f32 %v128, %v827
    %v1025 = vmul.f32 %v129, %v832
    %v1026 = vmul.f32 %v130, %v837
    %v1027 = vmul.f32 %v131, %v842
    %v1028 = vmul.f32 %v132, %v847
    %v1029 = vmul.f32 %v133, %v852
    %v1030 = vmul.f32 %v134, %v857
    %v1031 = vmul.f32 %v135, %v862
    %v1032 = vmul.f32 %v136, %v867
    %v1033 = vmul.f32 %v137, %v872
    %v1034 = vmul.f32 %v138, %v877
    %v1035 = vmul.f32 %v139, %v882
    %v1036 = vmul.f32 %v140, %v887
    %v1037 = vmul.f32 %v141, %v892
    %v1038 = vmul.f32 %v142, %v897
    %v1039 = vmul.f32 %v143, %v902
    %v1040 = vmul.f32 %v144, %v907
    %v1041 = vmul.f32 %v145, %v912
    %v1042 = vld [vmem:[%s3] sm:$0xff]
    %v1043 = vld [vmem:[%s3 + $0x8] sm:$0xff]
    %v1044 = vld [vmem:[%s3 + $0x10] sm:$0xff]
    %v1045 = vld [vmem:[%s3 + $0x18] sm:$0xff]
    %v1046 = vld [vmem:[%s3 + $0x20] sm:$0xff]
    %v1047 = vld [vmem:[%s3 + $0x28] sm:$0xff]
    %v1048 = vld [vmem:[%s3 + $0x30] sm:$0xff]
    %v1049 = vld [vmem:[%s3 + $0x38] sm:$0xff]
    %v1050 = vld [vmem:[%s3 + $0x40] sm:$0xff]
    %v1051 = vld [vmem:[%s3 + $0x48] sm:$0xff]
    %v1052 = vld [vmem:[%s3 + $0x50] sm:$0xff]
    %v1053 = vld [vmem:[%s3 + $0x58] sm:$0xff]
    %v1054 = vld [vmem:[%s3 + $0x60] sm:$0xff]
    %v1055 = vld [vmem:[%s3 + $0x68] sm:$0xff]
    %v1056 = vld [vmem:[%s3 + $0x70] sm:$0xff]
    %v1057 = vld [vmem:[%s3 + $0x78] sm:$0xff]
    %v1058 = vld [vmem:[%s3 + $0x80] sm:$0xff]
    %v1059 = vld [vmem:[%s3 + $0x88] sm:$0xff]
    %v1060 = vld [vmem:[%s3 + $0x90] sm:$0xff]
    %v1061 = vld [vmem:[%s3 + $0x98] sm:$0xff]
    %v1062 = vld [vmem:[%s3 + $0xa0] sm:$0xff]
    %v1063 = vld [vmem:[%s3 + $0xa8] sm:$0xff]
    %v1064 = vld [vmem:[%s3 + $0xb0] sm:$0xff]
    %v1065 = vld [vmem:[%s3 + $0xb8] sm:$0xff]
    %v1066 = vld [vmem:[%s3 + $0xc0] sm:$0xff]
    %v1067 = vld [vmem:[%s3 + $0xc8] sm:$0xff]
    %v1068 = vld [vmem:[%s3 + $0xd0] sm:$0xff]
    %v1069 = vld [vmem:[%s3 + $0xd8] sm:$0xff]
    %v1070 = vld [vmem:[%s3 + $0xe0] sm:$0xff]
    %v1071 = vld [vmem:[%s3 + $0xe8] sm:$0xff]
    %v1072 = vld [vmem:[%s3 + $0xf0] sm:$0xff]
    %v1073 = vld [vmem:[%s3 + $0xf8] sm:$0xff]
    %v1074 = vld [vmem:[%s3 + $0x100] sm:$0xff]
    %v1075 = vld [vmem:[%s3 + $0x108] sm:$0xff]
    %v1076 = vld [vmem:[%s3 + $0x110] sm:$0xff]
    %v1077 = vld [vmem:[%s3 + $0x118] sm:$0xff]
    %v1078 = vld [vmem:[%s3 + $0x120] sm:$0xff]
    %v1079 = vld [vmem:[%s3 + $0x128] sm:$0xff]
    %v1080 = vld [vmem:[%s3 + $0x130] sm:$0xff]
    %v1081 = vld [vmem:[%s3 + $0x138] sm:$0xff]
    %v1082 = vld [vmem:[%s3 + $0x140] sm:$0xff]
    %v1083 = vld [vmem:[%s3 + $0x148] sm:$0xff]
    %v1084 = vld [vmem:[%s3 + $0x150] sm:$0xff]
    %v1085 = vld [vmem:[%s3 + $0x158] sm:$0xff]
    %v1086 = vld [vmem:[%s3 + $0x160] sm:$0xff]
    %v1087 = vld [vmem:[%s3 + $0x168] sm:$0xff]
    %v1088 = vld [vmem:[%s3 + $0x170] sm:$0xff]
    %v1089 = vld [vmem:[%s3 + $0x178] sm:$0xff]
    %v1090 = vld [vmem:[%s3 + $0x180] sm:$0xff]
    %v1091 = vld [vmem:[%s3 + $0x188] sm:$0xff]
    %v1092 = vld [vmem:[%s3 + $0x190] sm:$0xff]
    %v1093 = vld [vmem:[%s3 + $0x198] sm:$0xff]
    %v1094 = vld [vmem:[%s3 + $0x1a0] sm:$0xff]
    %v1095 = vld [vmem:[%s3 + $0x1a8] sm:$0xff]
    %v1096 = vld [vmem:[%s3 + $0x1b0] sm:$0xff]
    %v1097 = vld [vmem:[%s3 + $0x1b8] sm:$0xff]
    %v1098 = vld [vmem:[%s3 + $0x1c0] sm:$0xff]
    %v1099 = vld [vmem:[%s3 + $0x1c8] sm:$0xff]
    %v1100 = vld [vmem:[%s3 + $0x1d0] sm:$0xff]
    %v1101 = vld [vmem:[%s3 + $0x1d8] sm:$0xff]
    %v1102 = vld [vmem:[%s3 + $0x1e0] sm:$0xff]
    %v1103 = vld [vmem:[%s3 + $0x1e8] sm:$0xff]
    %v1104 = vld [vmem:[%s3 + $0x1f0] sm:$0xff]
    %v1105 = vld [vmem:[%s3 + $0x1f8] sm:$0xff]
    %v1106 = vld [vmem:[%s3 + $0x200] sm:$0xff]
    %v1107 = vld [vmem:[%s3 + $0x208] sm:$0xff]
    %v1108 = vld [vmem:[%s3 + $0x210] sm:$0xff]
    %v1109 = vld [vmem:[%s3 + $0x218] sm:$0xff]
    %v1110 = vld [vmem:[%s3 + $0x220] sm:$0xff]
    %v1111 = vld [vmem:[%s3 + $0x228] sm:$0xff]
    %v1112 = vld [vmem:[%s3 + $0x230] sm:$0xff]
    %v1113 = vld [vmem:[%s3 + $0x238] sm:$0xff]
    %v1114 = vld [vmem:[%s3 + $0x240] sm:$0xff]
    %v1115 = vld [vmem:[%s3 + $0x248] sm:$0xff]
    %v1116 = vld [vmem:[%s3 + $0x250] sm:$0xff]
    %v1117 = vld [vmem:[%s3 + $0x258] sm:$0xff]
    %v1118 = vld [vmem:[%s3 + $0x260] sm:$0xff]
    %v1119 = vld [vmem:[%s3 + $0x268] sm:$0xff]
    %v1120 = vld [vmem:[%s3 + $0x270] sm:$0xff]
    %v1121 = vld [vmem:[%s3 + $0x278] sm:$0xff]
    %v1122 = vld [vmem:[%s3 + $0x280] sm:$0xff]
    %v1123 = vld [vmem:[%s3 + $0x288] sm:$0xff]
    %v1124 = vld [vmem:[%s3 + $0x290] sm:$0xff]
    %v1125 = vld [vmem:[%s3 + $0x298] sm:$0xff]
    %v1126 = vld [vmem:[%s3 + $0x2a0] sm:$0xff]
    %v1127 = vld [vmem:[%s3 + $0x2a8] sm:$0xff]
    %v1128 = vld [vmem:[%s3 + $0x2b0] sm:$0xff]
    %v1129 = vld [vmem:[%s3 + $0x2b8] sm:$0xff]
    %v1130 = vld [vmem:[%s3 + $0x2c0] sm:$0xff]
    %v1131 = vld [vmem:[%s3 + $0x2c8] sm:$0xff]
    %v1132 = vld [vmem:[%s3 + $0x2d0] sm:$0xff]
    %v1133 = vld [vmem:[%s3 + $0x2d8] sm:$0xff]
    %v1134 = vld [vmem:[%s3 + $0x2e0] sm:$0xff]
    %v1135 = vld [vmem:[%s3 + $0x2e8] sm:$0xff]
    %v1136 = vld [vmem:[%s3 + $0x2f0] sm:$0xff]
    %v1137 = vld [vmem:[%s3 + $0x2f8] sm:$0xff]
    %v1138 = vld [vmem:[%s3 + $0x300] sm:$0xff]
    %v1139 = vld [vmem:[%s3 + $0x308] sm:$0xff]
    %v1140 = vld [vmem:[%s3 + $0x310] sm:$0xff]
    %v1141 = vld [vmem:[%s3 + $0x318] sm:$0xff]
    %v1142 = vld [vmem:[%s3 + $0x320] sm:$0xff]
    %v1143 = vld [vmem:[%s3 + $0x328] sm:$0xff]
    %v1144 = vld [vmem:[%s3 + $0x330] sm:$0xff]
    %v1145 = vld [vmem:[%s3 + $0x338] sm:$0xff]
    %v1146 = vld [vmem:[%s3 + $0x340] sm:$0xff]
    %v1147 = vld [vmem:[%s3 + $0x348] sm:$0xff]
    %v1148 = vld [vmem:[%s3 + $0x350] sm:$0xff]
    %v1149 = vld [vmem:[%s3 + $0x358] sm:$0xff]
    %v1150 = vld [vmem:[%s3 + $0x360] sm:$0xff]
    %v1151 = vld [vmem:[%s3 + $0x368] sm:$0xff]
    %v1152 = vld [vmem:[%s3 + $0x370] sm:$0xff]
    %v1153 = vld [vmem:[%s3 + $0x378] sm:$0xff]
    %v1154 = vld [vmem:[%s3 + $0x380] sm:$0xff]
    %v1155 = vld [vmem:[%s3 + $0x388] sm:$0xff]
    %v1156 = vld [vmem:[%s3 + $0x390] sm:$0xff]
    %v1157 = vld [vmem:[%s3 + $0x398] sm:$0xff]
    %v1158 = vld [vmem:[%s3 + $0x3a0] sm:$0xff]
    %v1159 = vld [vmem:[%s3 + $0x3a8] sm:$0xff]
    %v1160 = vld [vmem:[%s3 + $0x3b0] sm:$0xff]
    %v1161 = vld [vmem:[%s3 + $0x3b8] sm:$0xff]
    %v1162 = vld [vmem:[%s3 + $0x3c0] sm:$0xff]
    %v1163 = vld [vmem:[%s3 + $0x3c8] sm:$0xff]
    %v1164 = vld [vmem:[%s3 + $0x3d0] sm:$0xff]
    %v1165 = vld [vmem:[%s3 + $0x3d8] sm:$0xff]
    %v1166 = vld [vmem:[%s3 + $0x3e0] sm:$0xff]
    %v1167 = vld [vmem:[%s3 + $0x3e8] sm:$0xff]
    %v1168 = vld [vmem:[%s3 + $0x3f0] sm:$0xff]
    %v1169 = vld [vmem:[%s3 + $0x3f8] sm:$0xff]
    %1171 = vset.pattern.permute.xlu0 0
    %1172 = vperm.xlu0 %1171, %v1042
    %v1173 = vpop.permute.xlu0 %1172
    %1176 = vset.pattern.permute.xlu0 0
    %1177 = vperm.xlu0 %1176, %v1043
    %v1178 = vpop.permute.xlu0 %1177
    %1181 = vset.pattern.permute.xlu0 0
    %1182 = vperm.xlu0 %1181, %v1044
    %v1183 = vpop.permute.xlu0 %1182
    %1186 = vset.pattern.permute.xlu0 0
    %1187 = vperm.xlu0 %1186, %v1045
    %v1188 = vpop.permute.xlu0 %1187
    %1191 = vset.pattern.permute.xlu0 0
    %1192 = vperm.xlu0 %1191, %v1046
    %v1193 = vpop.permute.xlu0 %1192
    %1196 = vset.pattern.permute.xlu0 0
    %1197 = vperm.xlu0 %1196, %v1047
    %v1198 = vpop.permute.xlu0 %1197
    %1201 = vset.pattern.permute.xlu0 0
    %1202 = vperm.xlu0 %1201, %v1048
    %v1203 = vpop.permute.xlu0 %1202
    %1206 = vset.pattern.permute.xlu0 0
    %1207 = vperm.xlu0 %1206, %v1049
    %v1208 = vpop.permute.xlu0 %1207
    %1211 = vset.pattern.permute.xlu0 0
    %1212 = vperm.xlu0 %1211, %v1050
    %v1213 = vpop.permute.xlu0 %1212
    %1216 = vset.pattern.permute.xlu0 0
    %1217 = vperm.xlu0 %1216, %v1051
    %v1218 = vpop.permute.xlu0 %1217
    %1221 = vset.pattern.permute.xlu0 0
    %1222 = vperm.xlu0 %1221, %v1052
    %v1223 = vpop.permute.xlu0 %1222
    %1226 = vset.pattern.permute.xlu0 0
    %1227 = vperm.xlu0 %1226, %v1053
    %v1228 = vpop.permute.xlu0 %1227
    %1231 = vset.pattern.permute.xlu0 0
    %1232 = vperm.xlu0 %1231, %v1054
    %v1233 = vpop.permute.xlu0 %1232
    %1236 = vset.pattern.permute.xlu0 0
    %1237 = vperm.xlu0 %1236, %v1055
    %v1238 = vpop.permute.xlu0 %1237
    %1241 = vset.pattern.permute.xlu0 0
    %1242 = vperm.xlu0 %1241, %v1056
    %v1243 = vpop.permute.xlu0 %1242
    %1246 = vset.pattern.permute.xlu0 0
    %1247 = vperm.xlu0 %1246, %v1057
    %v1248 = vpop.permute.xlu0 %1247
    %1251 = vset.pattern.permute.xlu0 0
    %1252 = vperm.xlu0 %1251, %v1058
    %v1253 = vpop.permute.xlu0 %1252
    %1256 = vset.pattern.permute.xlu0 0
    %1257 = vperm.xlu0 %1256, %v1059
    %v1258 = vpop.permute.xlu0 %1257
    %1261 = vset.pattern.permute.xlu0 0
    %1262 = vperm.xlu0 %1261, %v1060
    %v1263 = vpop.permute.xlu0 %1262
    %1266 = vset.pattern.permute.xlu0 0
    %1267 = vperm.xlu0 %1266, %v1061
    %v1268 = vpop.permute.xlu0 %1267
    %1271 = vset.pattern.permute.xlu0 0
    %1272 = vperm.xlu0 %1271, %v1062
    %v1273 = vpop.permute.xlu0 %1272
    %1276 = vset.pattern.permute.xlu0 0
    %1277 = vperm.xlu0 %1276, %v1063
    %v1278 = vpop.permute.xlu0 %1277
    %1281 = vset.pattern.permute.xlu0 0
    %1282 = vperm.xlu0 %1281, %v1064
    %v1283 = vpop.permute.xlu0 %1282
    %1286 = vset.pattern.permute.xlu0 0
    %1287 = vperm.xlu0 %1286, %v1065
    %v1288 = vpop.permute.xlu0 %1287
    %1291 = vset.pattern.permute.xlu0 0
    %1292 = vperm.xlu0 %1291, %v1066
    %v1293 = vpop.permute.xlu0 %1292
    %1296 = vset.pattern.permute.xlu0 0
    %1297 = vperm.xlu0 %1296, %v1067
    %v1298 = vpop.permute.xlu0 %1297
    %1301 = vset.pattern.permute.xlu0 0
    %1302 = vperm.xlu0 %1301, %v1068
    %v1303 = vpop.permute.xlu0 %1302
    %1306 = vset.pattern.permute.xlu0 0
    %1307 = vperm.xlu0 %1306, %v1069
    %v1308 = vpop.permute.xlu0 %1307
    %1311 = vset.pattern.permute.xlu0 0
    %1312 = vperm.xlu0 %1311, %v1070
    %v1313 = vpop.permute.xlu0 %1312
    %1316 = vset.pattern.permute.xlu0 0
    %1317 = vperm.xlu0 %1316, %v1071
    %v1318 = vpop.permute.xlu0 %1317
    %1321 = vset.pattern.permute.xlu0 0
    %1322 = vperm.xlu0 %1321, %v1072
    %v1323 = vpop.permute.xlu0 %1322
    %1326 = vset.pattern.permute.xlu0 0
    %1327 = vperm.xlu0 %1326, %v1073
    %v1328 = vpop.permute.xlu0 %1327
    %1331 = vset.pattern.permute.xlu0 0
    %1332 = vperm.xlu0 %1331, %v1074
    %v1333 = vpop.permute.xlu0 %1332
    %1336 = vset.pattern.permute.xlu0 0
    %1337 = vperm.xlu0 %1336, %v1075
    %v1338 = vpop.permute.xlu0 %1337
    %1341 = vset.pattern.permute.xlu0 0
    %1342 = vperm.xlu0 %1341, %v1076
    %v1343 = vpop.permute.xlu0 %1342
    %1346 = vset.pattern.permute.xlu0 0
    %1347 = vperm.xlu0 %1346, %v1077
    %v1348 = vpop.permute.xlu0 %1347
    %1351 = vset.pattern.permute.xlu0 0
    %1352 = vperm.xlu0 %1351, %v1078
    %v1353 = vpop.permute.xlu0 %1352
    %1356 = vset.pattern.permute.xlu0 0
    %1357 = vperm.xlu0 %1356, %v1079
    %v1358 = vpop.permute.xlu0 %1357
    %1361 = vset.pattern.permute.xlu0 0
    %1362 = vperm.xlu0 %1361, %v1080
    %v1363 = vpop.permute.xlu0 %1362
    %1366 = vset.pattern.permute.xlu0 0
    %1367 = vperm.xlu0 %1366, %v1081
    %v1368 = vpop.permute.xlu0 %1367
    %1371 = vset.pattern.permute.xlu0 0
    %1372 = vperm.xlu0 %1371, %v1082
    %v1373 = vpop.permute.xlu0 %1372
    %1376 = vset.pattern.permute.xlu0 0
    %1377 = vperm.xlu0 %1376, %v1083
    %v1378 = vpop.permute.xlu0 %1377
    %1381 = vset.pattern.permute.xlu0 0
    %1382 = vperm.xlu0 %1381, %v1084
    %v1383 = vpop.permute.xlu0 %1382
    %1386 = vset.pattern.permute.xlu0 0
    %1387 = vperm.xlu0 %1386, %v1085
    %v1388 = vpop.permute.xlu0 %1387
    %1391 = vset.pattern.permute.xlu0 0
    %1392 = vperm.xlu0 %1391, %v1086
    %v1393 = vpop.permute.xlu0 %1392
    %1396 = vset.pattern.permute.xlu0 0
    %1397 = vperm.xlu0 %1396, %v1087
    %v1398 = vpop.permute.xlu0 %1397
    %1401 = vset.pattern.permute.xlu0 0
    %1402 = vperm.xlu0 %1401, %v1088
    %v1403 = vpop.permute.xlu0 %1402
    %1406 = vset.pattern.permute.xlu0 0
    %1407 = vperm.xlu0 %1406, %v1089
    %v1408 = vpop.permute.xlu0 %1407
    %1411 = vset.pattern.permute.xlu0 0
    %1412 = vperm.xlu0 %1411, %v1090
    %v1413 = vpop.permute.xlu0 %1412
    %1416 = vset.pattern.permute.xlu0 0
    %1417 = vperm.xlu0 %1416, %v1091
    %v1418 = vpop.permute.xlu0 %1417
    %1421 = vset.pattern.permute.xlu0 0
    %1422 = vperm.xlu0 %1421, %v1092
    %v1423 = vpop.permute.xlu0 %1422
    %1426 = vset.pattern.permute.xlu0 0
    %1427 = vperm.xlu0 %1426, %v1093
    %v1428 = vpop.permute.xlu0 %1427
    %1431 = vset.pattern.permute.xlu0 0
    %1432 = vperm.xlu0 %1431, %v1094
    %v1433 = vpop.permute.xlu0 %1432
    %1436 = vset.pattern.permute.xlu0 0
    %1437 = vperm.xlu0 %1436, %v1095
    %v1438 = vpop.permute.xlu0 %1437
    %1441 = vset.pattern.permute.xlu0 0
    %1442 = vperm.xlu0 %1441, %v1096
    %v1443 = vpop.permute.xlu0 %1442
    %1446 = vset.pattern.permute.xlu0 0
    %1447 = vperm.xlu0 %1446, %v1097
    %v1448 = vpop.permute.xlu0 %1447
    %1451 = vset.pattern.permute.xlu0 0
    %1452 = vperm.xlu0 %1451, %v1098
    %v1453 = vpop.permute.xlu0 %1452
    %1456 = vset.pattern.permute.xlu0 0
    %1457 = vperm.xlu0 %1456, %v1099
    %v1458 = vpop.permute.xlu0 %1457
    %1461 = vset.pattern.permute.xlu0 0
    %1462 = vperm.xlu0 %1461, %v1100
    %v1463 = vpop.permute.xlu0 %1462
    %1466 = vset.pattern.permute.xlu0 0
    %1467 = vperm.xlu0 %1466, %v1101
    %v1468 = vpop.permute.xlu0 %1467
    %1471 = vset.pattern.permute.xlu0 0
    %1472 = vperm.xlu0 %1471, %v1102
    %v1473 = vpop.permute.xlu0 %1472
    %1476 = vset.pattern.permute.xlu0 0
    %1477 = vperm.xlu0 %1476, %v1103
    %v1478 = vpop.permute.xlu0 %1477
    %1481 = vset.pattern.permute.xlu0 0
    %1482 = vperm.xlu0 %1481, %v1104
    %v1483 = vpop.permute.xlu0 %1482
    %1486 = vset.pattern.permute.xlu0 0
    %1487 = vperm.xlu0 %1486, %v1105
    %v1488 = vpop.permute.xlu0 %1487
    %1491 = vset.pattern.permute.xlu0 0
    %1492 = vperm.xlu0 %1491, %v1106
    %v1493 = vpop.permute.xlu0 %1492
    %1496 = vset.pattern.permute.xlu0 0
    %1497 = vperm.xlu0 %1496, %v1107
    %v1498 = vpop.permute.xlu0 %1497
    %1501 = vset.pattern.permute.xlu0 0
    %1502 = vperm.xlu0 %1501, %v1108
    %v1503 = vpop.permute.xlu0 %1502
    %1506 = vset.pattern.permute.xlu0 0
    %1507 = vperm.xlu0 %1506, %v1109
    %v1508 = vpop.permute.xlu0 %1507
    %1511 = vset.pattern.permute.xlu0 0
    %1512 = vperm.xlu0 %1511, %v1110
    %v1513 = vpop.permute.xlu0 %1512
    %1516 = vset.pattern.permute.xlu0 0
    %1517 = vperm.xlu0 %1516, %v1111
    %v1518 = vpop.permute.xlu0 %1517
    %1521 = vset.pattern.permute.xlu0 0
    %1522 = vperm.xlu0 %1521, %v1112
    %v1523 = vpop.permute.xlu0 %1522
    %1526 = vset.pattern.permute.xlu0 0
    %1527 = vperm.xlu0 %1526, %v1113
    %v1528 = vpop.permute.xlu0 %1527
    %1531 = vset.pattern.permute.xlu0 0
    %1532 = vperm.xlu0 %1531, %v1114
    %v1533 = vpop.permute.xlu0 %1532
    %1536 = vset.pattern.permute.xlu0 0
    %1537 = vperm.xlu0 %1536, %v1115
    %v1538 = vpop.permute.xlu0 %1537
    %1541 = vset.pattern.permute.xlu0 0
    %1542 = vperm.xlu0 %1541, %v1116
    %v1543 = vpop.permute.xlu0 %1542
    %1546 = vset.pattern.permute.xlu0 0
    %1547 = vperm.xlu0 %1546, %v1117
    %v1548 = vpop.permute.xlu0 %1547
    %1551 = vset.pattern.permute.xlu0 0
    %1552 = vperm.xlu0 %1551, %v1118
    %v1553 = vpop.permute.xlu0 %1552
    %1556 = vset.pattern.permute.xlu0 0
    %1557 = vperm.xlu0 %1556, %v1119
    %v1558 = vpop.permute.xlu0 %1557
    %1561 = vset.pattern.permute.xlu0 0
    %1562 = vperm.xlu0 %1561, %v1120
    %v1563 = vpop.permute.xlu0 %1562
    %1566 = vset.pattern.permute.xlu0 0
    %1567 = vperm.xlu0 %1566, %v1121
    %v1568 = vpop.permute.xlu0 %1567
    %1571 = vset.pattern.permute.xlu0 0
    %1572 = vperm.xlu0 %1571, %v1122
    %v1573 = vpop.permute.xlu0 %1572
    %1576 = vset.pattern.permute.xlu0 0
    %1577 = vperm.xlu0 %1576, %v1123
    %v1578 = vpop.permute.xlu0 %1577
    %1581 = vset.pattern.permute.xlu0 0
    %1582 = vperm.xlu0 %1581, %v1124
    %v1583 = vpop.permute.xlu0 %1582
    %1586 = vset.pattern.permute.xlu0 0
    %1587 = vperm.xlu0 %1586, %v1125
    %v1588 = vpop.permute.xlu0 %1587
    %1591 = vset.pattern.permute.xlu0 0
    %1592 = vperm.xlu0 %1591, %v1126
    %v1593 = vpop.permute.xlu0 %1592
    %1596 = vset.pattern.permute.xlu0 0
    %1597 = vperm.xlu0 %1596, %v1127
    %v1598 = vpop.permute.xlu0 %1597
    %1601 = vset.pattern.permute.xlu0 0
    %1602 = vperm.xlu0 %1601, %v1128
    %v1603 = vpop.permute.xlu0 %1602
    %1606 = vset.pattern.permute.xlu0 0
    %1607 = vperm.xlu0 %1606, %v1129
    %v1608 = vpop.permute.xlu0 %1607
    %1611 = vset.pattern.permute.xlu0 0
    %1612 = vperm.xlu0 %1611, %v1130
    %v1613 = vpop.permute.xlu0 %1612
    %1616 = vset.pattern.permute.xlu0 0
    %1617 = vperm.xlu0 %1616, %v1131
    %v1618 = vpop.permute.xlu0 %1617
    %1621 = vset.pattern.permute.xlu0 0
    %1622 = vperm.xlu0 %1621, %v1132
    %v1623 = vpop.permute.xlu0 %1622
    %1626 = vset.pattern.permute.xlu0 0
    %1627 = vperm.xlu0 %1626, %v1133
    %v1628 = vpop.permute.xlu0 %1627
    %1631 = vset.pattern.permute.xlu0 0
    %1632 = vperm.xlu0 %1631, %v1134
    %v1633 = vpop.permute.xlu0 %1632
    %1636 = vset.pattern.permute.xlu0 0
    %1637 = vperm.xlu0 %1636, %v1135
    %v1638 = vpop.permute.xlu0 %1637
    %1641 = vset.pattern.permute.xlu0 0
    %1642 = vperm.xlu0 %1641, %v1136
    %v1643 = vpop.permute.xlu0 %1642
    %1646 = vset.pattern.permute.xlu0 0
    %1647 = vperm.xlu0 %1646, %v1137
    %v1648 = vpop.permute.xlu0 %1647
    %1651 = vset.pattern.permute.xlu0 0
    %1652 = vperm.xlu0 %1651, %v1138
    %v1653 = vpop.permute.xlu0 %1652
    %1656 = vset.pattern.permute.xlu0 0
    %1657 = vperm.xlu0 %1656, %v1139
    %v1658 = vpop.permute.xlu0 %1657
    %1661 = vset.pattern.permute.xlu0 0
    %1662 = vperm.xlu0 %1661, %v1140
    %v1663 = vpop.permute.xlu0 %1662
    %1666 = vset.pattern.permute.xlu0 0
    %1667 = vperm.xlu0 %1666, %v1141
    %v1668 = vpop.permute.xlu0 %1667
    %1671 = vset.pattern.permute.xlu0 0
    %1672 = vperm.xlu0 %1671, %v1142
    %v1673 = vpop.permute.xlu0 %1672
    %1676 = vset.pattern.permute.xlu0 0
    %1677 = vperm.xlu0 %1676, %v1143
    %v1678 = vpop.permute.xlu0 %1677
    %1681 = vset.pattern.permute.xlu0 0
    %1682 = vperm.xlu0 %1681, %v1144
    %v1683 = vpop.permute.xlu0 %1682
    %1686 = vset.pattern.permute.xlu0 0
    %1687 = vperm.xlu0 %1686, %v1145
    %v1688 = vpop.permute.xlu0 %1687
    %1691 = vset.pattern.permute.xlu0 0
    %1692 = vperm.xlu0 %1691, %v1146
    %v1693 = vpop.permute.xlu0 %1692
    %1696 = vset.pattern.permute.xlu0 0
    %1697 = vperm.xlu0 %1696, %v1147
    %v1698 = vpop.permute.xlu0 %1697
    %1701 = vset.pattern.permute.xlu0 0
    %1702 = vperm.xlu0 %1701, %v1148
    %v1703 = vpop.permute.xlu0 %1702
    %1706 = vset.pattern.permute.xlu0 0
    %1707 = vperm.xlu0 %1706, %v1149
    %v1708 = vpop.permute.xlu0 %1707
    %1711 = vset.pattern.permute.xlu0 0
    %1712 = vperm.xlu0 %1711, %v1150
    %v1713 = vpop.permute.xlu0 %1712
    %1716 = vset.pattern.permute.xlu0 0
    %1717 = vperm.xlu0 %1716, %v1151
    %v1718 = vpop.permute.xlu0 %1717
    %1721 = vset.pattern.permute.xlu0 0
    %1722 = vperm.xlu0 %1721, %v1152
    %v1723 = vpop.permute.xlu0 %1722
    %1726 = vset.pattern.permute.xlu0 0
    %1727 = vperm.xlu0 %1726, %v1153
    %v1728 = vpop.permute.xlu0 %1727
    %1731 = vset.pattern.permute.xlu0 0
    %1732 = vperm.xlu0 %1731, %v1154
    %v1733 = vpop.permute.xlu0 %1732
    %1736 = vset.pattern.permute.xlu0 0
    %1737 = vperm.xlu0 %1736, %v1155
    %v1738 = vpop.permute.xlu0 %1737
    %1741 = vset.pattern.permute.xlu0 0
    %1742 = vperm.xlu0 %1741, %v1156
    %v1743 = vpop.permute.xlu0 %1742
    %1746 = vset.pattern.permute.xlu0 0
    %1747 = vperm.xlu0 %1746, %v1157
    %v1748 = vpop.permute.xlu0 %1747
    %1751 = vset.pattern.permute.xlu0 0
    %1752 = vperm.xlu0 %1751, %v1158
    %v1753 = vpop.permute.xlu0 %1752
    %1756 = vset.pattern.permute.xlu0 0
    %1757 = vperm.xlu0 %1756, %v1159
    %v1758 = vpop.permute.xlu0 %1757
    %1761 = vset.pattern.permute.xlu0 0
    %1762 = vperm.xlu0 %1761, %v1160
    %v1763 = vpop.permute.xlu0 %1762
    %1766 = vset.pattern.permute.xlu0 0
    %1767 = vperm.xlu0 %1766, %v1161
    %v1768 = vpop.permute.xlu0 %1767
    %1771 = vset.pattern.permute.xlu0 0
    %1772 = vperm.xlu0 %1771, %v1162
    %v1773 = vpop.permute.xlu0 %1772
    %1776 = vset.pattern.permute.xlu0 0
    %1777 = vperm.xlu0 %1776, %v1163
    %v1778 = vpop.permute.xlu0 %1777
    %1781 = vset.pattern.permute.xlu0 0
    %1782 = vperm.xlu0 %1781, %v1164
    %v1783 = vpop.permute.xlu0 %1782
    %1786 = vset.pattern.permute.xlu0 0
    %1787 = vperm.xlu0 %1786, %v1165
    %v1788 = vpop.permute.xlu0 %1787
    %1791 = vset.pattern.permute.xlu0 0
    %1792 = vperm.xlu0 %1791, %v1166
    %v1793 = vpop.permute.xlu0 %1792
    %1796 = vset.pattern.permute.xlu0 0
    %1797 = vperm.xlu0 %1796, %v1167
    %v1798 = vpop.permute.xlu0 %1797
    %1801 = vset.pattern.permute.xlu0 0
    %1802 = vperm.xlu0 %1801, %v1168
    %v1803 = vpop.permute.xlu0 %1802
    %1806 = vset.pattern.permute.xlu0 0
    %1807 = vperm.xlu0 %1806, %v1169
    %v1808 = vpop.permute.xlu0 %1807
    %v1810 = vadd.f32 %v914, %v1173
    %v1811 = vadd.f32 %v915, %v1178
    %v1812 = vadd.f32 %v916, %v1183
    %v1813 = vadd.f32 %v917, %v1188
    %v1814 = vadd.f32 %v918, %v1193
    %v1815 = vadd.f32 %v919, %v1198
    %v1816 = vadd.f32 %v920, %v1203
    %v1817 = vadd.f32 %v921, %v1208
    %v1818 = vadd.f32 %v922, %v1213
    %v1819 = vadd.f32 %v923, %v1218
    %v1820 = vadd.f32 %v924, %v1223
    %v1821 = vadd.f32 %v925, %v1228
    %v1822 = vadd.f32 %v926, %v1233
    %v1823 = vadd.f32 %v927, %v1238
    %v1824 = vadd.f32 %v928, %v1243
    %v1825 = vadd.f32 %v929, %v1248
    %v1826 = vadd.f32 %v930, %v1253
    %v1827 = vadd.f32 %v931, %v1258
    %v1828 = vadd.f32 %v932, %v1263
    %v1829 = vadd.f32 %v933, %v1268
    %v1830 = vadd.f32 %v934, %v1273
    %v1831 = vadd.f32 %v935, %v1278
    %v1832 = vadd.f32 %v936, %v1283
    %v1833 = vadd.f32 %v937, %v1288
    %v1834 = vadd.f32 %v938, %v1293
    %v1835 = vadd.f32 %v939, %v1298
    %v1836 = vadd.f32 %v940, %v1303
    %v1837 = vadd.f32 %v941, %v1308
    %v1838 = vadd.f32 %v942, %v1313
    %v1839 = vadd.f32 %v943, %v1318
    %v1840 = vadd.f32 %v944, %v1323
    %v1841 = vadd.f32 %v945, %v1328
    %v1842 = vadd.f32 %v946, %v1333
    %v1843 = vadd.f32 %v947, %v1338
    %v1844 = vadd.f32 %v948, %v1343
    %v1845 = vadd.f32 %v949, %v1348
    %v1846 = vadd.f32 %v950, %v1353
    %v1847 = vadd.f32 %v951, %v1358
    %v1848 = vadd.f32 %v952, %v1363
    %v1849 = vadd.f32 %v953, %v1368
    %v1850 = vadd.f32 %v954, %v1373
    %v1851 = vadd.f32 %v955, %v1378
    %v1852 = vadd.f32 %v956, %v1383
    %v1853 = vadd.f32 %v957, %v1388
    %v1854 = vadd.f32 %v958, %v1393
    %v1855 = vadd.f32 %v959, %v1398
    %v1856 = vadd.f32 %v960, %v1403
    %v1857 = vadd.f32 %v961, %v1408
    %v1858 = vadd.f32 %v962, %v1413
    %v1859 = vadd.f32 %v963, %v1418
    %v1860 = vadd.f32 %v964, %v1423
    %v1861 = vadd.f32 %v965, %v1428
    %v1862 = vadd.f32 %v966, %v1433
    %v1863 = vadd.f32 %v967, %v1438
    %v1864 = vadd.f32 %v968, %v1443
    %v1865 = vadd.f32 %v969, %v1448
    %v1866 = vadd.f32 %v970, %v1453
    %v1867 = vadd.f32 %v971, %v1458
    %v1868 = vadd.f32 %v972, %v1463
    %v1869 = vadd.f32 %v973, %v1468
    %v1870 = vadd.f32 %v974, %v1473
    %v1871 = vadd.f32 %v975, %v1478
    %v1872 = vadd.f32 %v976, %v1483
    %v1873 = vadd.f32 %v977, %v1488
    %v1874 = vadd.f32 %v978, %v1493
    %v1875 = vadd.f32 %v979, %v1498
    %v1876 = vadd.f32 %v980, %v1503
    %v1877 = vadd.f32 %v981, %v1508
    %v1878 = vadd.f32 %v982, %v1513
    %v1879 = vadd.f32 %v983, %v1518
    %v1880 = vadd.f32 %v984, %v1523
    %v1881 = vadd.f32 %v985, %v1528
    %v1882 = vadd.f32 %v986, %v1533
    %v1883 = vadd.f32 %v987, %v1538
    %v1884 = vadd.f32 %v988, %v1543
    %v1885 = vadd.f32 %v989, %v1548
    %v1886 = vadd.f32 %v990, %v1553
    %v1887 = vadd.f32 %v991, %v1558
    %v1888 = vadd.f32 %v992, %v1563
    %v1889 = vadd.f32 %v993, %v1568
    %v1890 = vadd.f32 %v994, %v1573
    %v1891 = vadd.f32 %v995, %v1578
    %v1892 = vadd.f32 %v996, %v1583
    %v1893 = vadd.f32 %v997, %v1588
    %v1894 = vadd.f32 %v998, %v1593
    %v1895 = vadd.f32 %v999, %v1598
    %v1896 = vadd.f32 %v1000, %v1603
    %v1897 = vadd.f32 %v1001, %v1608
    %v1898 = vadd.f32 %v1002, %v1613
    %v1899 = vadd.f32 %v1003, %v1618
    %v1900 = vadd.f32 %v1004, %v1623
    %v1901 = vadd.f32 %v1005, %v1628
    %v1902 = vadd.f32 %v1006, %v1633
    %v1903 = vadd.f32 %v1007, %v1638
    %v1904 = vadd.f32 %v1008, %v1643
    %v1905 = vadd.f32 %v1009, %v1648
    %v1906 = vadd.f32 %v1010, %v1653
    %v1907 = vadd.f32 %v1011, %v1658
    %v1908 = vadd.f32 %v1012, %v1663
    %v1909 = vadd.f32 %v1013, %v1668
    %v1910 = vadd.f32 %v1014, %v1673
    %v1911 = vadd.f32 %v1015, %v1678
    %v1912 = vadd.f32 %v1016, %v1683
    %v1913 = vadd.f32 %v1017, %v1688
    %v1914 = vadd.f32 %v1018, %v1693
    %v1915 = vadd.f32 %v1019, %v1698
    %v1916 = vadd.f32 %v1020, %v1703
    %v1917 = vadd.f32 %v1021, %v1708
    %v1918 = vadd.f32 %v1022, %v1713
    %v1919 = vadd.f32 %v1023, %v1718
    %v1920 = vadd.f32 %v1024, %v1723
    %v1921 = vadd.f32 %v1025, %v1728
    %v1922 = vadd.f32 %v1026, %v1733
    %v1923 = vadd.f32 %v1027, %v1738
    %v1924 = vadd.f32 %v1028, %v1743
    %v1925 = vadd.f32 %v1029, %v1748
    %v1926 = vadd.f32 %v1030, %v1753
    %v1927 = vadd.f32 %v1031, %v1758
    %v1928 = vadd.f32 %v1032, %v1763
    %v1929 = vadd.f32 %v1033, %v1768
    %v1930 = vadd.f32 %v1034, %v1773
    %v1931 = vadd.f32 %v1035, %v1778
    %v1932 = vadd.f32 %v1036, %v1783
    %v1933 = vadd.f32 %v1037, %v1788
    %v1934 = vadd.f32 %v1038, %v1793
    %v1935 = vadd.f32 %v1039, %v1798
    %v1936 = vadd.f32 %v1040, %v1803
    %v1937 = vadd.f32 %v1041, %v1808
    %vm1938 = vcmp.ge.f32.partialorder %v1810, 0.0
    %vm1939 = vcmp.ge.f32.partialorder %v1811, 0.0
    %vm1940 = vcmp.ge.f32.partialorder %v1812, 0.0
    %vm1941 = vcmp.ge.f32.partialorder %v1813, 0.0
    %vm1942 = vcmp.ge.f32.partialorder %v1814, 0.0
    %vm1943 = vcmp.ge.f32.partialorder %v1815, 0.0
    %vm1944 = vcmp.ge.f32.partialorder %v1816, 0.0
    %vm1945 = vcmp.ge.f32.partialorder %v1817, 0.0
    %vm1946 = vcmp.ge.f32.partialorder %v1818, 0.0
    %vm1947 = vcmp.ge.f32.partialorder %v1819, 0.0
    %vm1948 = vcmp.ge.f32.partialorder %v1820, 0.0
    %vm1949 = vcmp.ge.f32.partialorder %v1821, 0.0
    %vm1950 = vcmp.ge.f32.partialorder %v1822, 0.0
    %vm1951 = vcmp.ge.f32.partialorder %v1823, 0.0
    %vm1952 = vcmp.ge.f32.partialorder %v1824, 0.0
    %vm1953 = vcmp.ge.f32.partialorder %v1825, 0.0
    %vm1954 = vcmp.ge.f32.partialorder %v1826, 0.0
    %vm1955 = vcmp.ge.f32.partialorder %v1827, 0.0
    %vm1956 = vcmp.ge.f32.partialorder %v1828, 0.0
    %vm1957 = vcmp.ge.f32.partialorder %v1829, 0.0
    %vm1958 = vcmp.ge.f32.partialorder %v1830, 0.0
    %vm1959 = vcmp.ge.f32.partialorder %v1831, 0.0
    %vm1960 = vcmp.ge.f32.partialorder %v1832, 0.0
    %vm1961 = vcmp.ge.f32.partialorder %v1833, 0.0
    %vm1962 = vcmp.ge.f32.partialorder %v1834, 0.0
    %vm1963 = vcmp.ge.f32.partialorder %v1835, 0.0
    %vm1964 = vcmp.ge.f32.partialorder %v1836, 0.0
    %vm1965 = vcmp.ge.f32.partialorder %v1837, 0.0
    %vm1966 = vcmp.ge.f32.partialorder %v1838, 0.0
    %vm1967 = vcmp.ge.f32.partialorder %v1839, 0.0
    %vm1968 = vcmp.ge.f32.partialorder %v1840, 0.0
    %vm1969 = vcmp.ge.f32.partialorder %v1841, 0.0
    %vm1970 = vcmp.ge.f32.partialorder %v1842, 0.0
    %vm1971 = vcmp.ge.f32.partialorder %v1843, 0.0
    %vm1972 = vcmp.ge.f32.partialorder %v1844, 0.0
    %vm1973 = vcmp.ge.f32.partialorder %v1845, 0.0
    %vm1974 = vcmp.ge.f32.partialorder %v1846, 0.0
    %vm1975 = vcmp.ge.f32.partialorder %v1847, 0.0
    %vm1976 = vcmp.ge.f32.partialorder %v1848, 0.0
    %vm1977 = vcmp.ge.f32.partialorder %v1849, 0.0
    %vm1978 = vcmp.ge.f32.partialorder %v1850, 0.0
    %vm1979 = vcmp.ge.f32.partialorder %v1851, 0.0
    %vm1980 = vcmp.ge.f32.partialorder %v1852, 0.0
    %vm1981 = vcmp.ge.f32.partialorder %v1853, 0.0
    %vm1982 = vcmp.ge.f32.partialorder %v1854, 0.0
    %vm1983 = vcmp.ge.f32.partialorder %v1855, 0.0
    %vm1984 = vcmp.ge.f32.partialorder %v1856, 0.0
    %vm1985 = vcmp.ge.f32.partialorder %v1857, 0.0
    %vm1986 = vcmp.ge.f32.partialorder %v1858, 0.0
    %vm1987 = vcmp.ge.f32.partialorder %v1859, 0.0
    %vm1988 = vcmp.ge.f32.partialorder %v1860, 0.0
    %vm1989 = vcmp.ge.f32.partialorder %v1861, 0.0
    %vm1990 = vcmp.ge.f32.partialorder %v1862, 0.0
    %vm1991 = vcmp.ge.f32.partialorder %v1863, 0.0
    %vm1992 = vcmp.ge.f32.partialorder %v1864, 0.0
    %vm1993 = vcmp.ge.f32.partialorder %v1865, 0.0
    %vm1994 = vcmp.ge.f32.partialorder %v1866, 0.0
    %vm1995 = vcmp.ge.f32.partialorder %v1867, 0.0
    %vm1996 = vcmp.ge.f32.partialorder %v1868, 0.0
    %vm1997 = vcmp.ge.f32.partialorder %v1869, 0.0
    %vm1998 = vcmp.ge.f32.partialorder %v1870, 0.0
    %vm1999 = vcmp.ge.f32.partialorder %v1871, 0.0
    %vm2000 = vcmp.ge.f32.partialorder %v1872, 0.0
    %vm2001 = vcmp.ge.f32.partialorder %v1873, 0.0
    %vm2002 = vcmp.ge.f32.partialorder %v1874, 0.0
    %vm2003 = vcmp.ge.f32.partialorder %v1875, 0.0
    %vm2004 = vcmp.ge.f32.partialorder %v1876, 0.0
    %vm2005 = vcmp.ge.f32.partialorder %v1877, 0.0
    %vm2006 = vcmp.ge.f32.partialorder %v1878, 0.0
    %vm2007 = vcmp.ge.f32.partialorder %v1879, 0.0
    %vm2008 = vcmp.ge.f32.partialorder %v1880, 0.0
    %vm2009 = vcmp.ge.f32.partialorder %v1881, 0.0
    %vm2010 = vcmp.ge.f32.partialorder %v1882, 0.0
    %vm2011 = vcmp.ge.f32.partialorder %v1883, 0.0
    %vm2012 = vcmp.ge.f32.partialorder %v1884, 0.0
    %vm2013 = vcmp.ge.f32.partialorder %v1885, 0.0
    %vm2014 = vcmp.ge.f32.partialorder %v1886, 0.0
    %vm2015 = vcmp.ge.f32.partialorder %v1887, 0.0
    %vm2016 = vcmp.ge.f32.partialorder %v1888, 0.0
    %vm2017 = vcmp.ge.f32.partialorder %v1889, 0.0
    %vm2018 = vcmp.ge.f32.partialorder %v1890, 0.0
    %vm2019 = vcmp.ge.f32.partialorder %v1891, 0.0
    %vm2020 = vcmp.ge.f32.partialorder %v1892, 0.0
    %vm2021 = vcmp.ge.f32.partialorder %v1893, 0.0
    %vm2022 = vcmp.ge.f32.partialorder %v1894, 0.0
    %vm2023 = vcmp.ge.f32.partialorder %v1895, 0.0
    %vm2024 = vcmp.ge.f32.partialorder %v1896, 0.0
    %vm2025 = vcmp.ge.f32.partialorder %v1897, 0.0
    %vm2026 = vcmp.ge.f32.partialorder %v1898, 0.0
    %vm2027 = vcmp.ge.f32.partialorder %v1899, 0.0
    %vm2028 = vcmp.ge.f32.partialorder %v1900, 0.0
    %vm2029 = vcmp.ge.f32.partialorder %v1901, 0.0
    %vm2030 = vcmp.ge.f32.partialorder %v1902, 0.0
    %vm2031 = vcmp.ge.f32.partialorder %v1903, 0.0
    %vm2032 = vcmp.ge.f32.partialorder %v1904, 0.0
    %vm2033 = vcmp.ge.f32.partialorder %v1905, 0.0
    %vm2034 = vcmp.ge.f32.partialorder %v1906, 0.0
    %vm2035 = vcmp.ge.f32.partialorder %v1907, 0.0
    %vm2036 = vcmp.ge.f32.partialorder %v1908, 0.0
    %vm2037 = vcmp.ge.f32.partialorder %v1909, 0.0
    %vm2038 = vcmp.ge.f32.partialorder %v1910, 0.0
    %vm2039 = vcmp.ge.f32.partialorder %v1911, 0.0
    %vm2040 = vcmp.ge.f32.partialorder %v1912, 0.0
    %vm2041 = vcmp.ge.f32.partialorder %v1913, 0.0
    %vm2042 = vcmp.ge.f32.partialorder %v1914, 0.0
    %vm2043 = vcmp.ge.f32.partialorder %v1915, 0.0
    %vm2044 = vcmp.ge.f32.partialorder %v1916, 0.0
    %vm2045 = vcmp.ge.f32.partialorder %v1917, 0.0
    %vm2046 = vcmp.ge.f32.partialorder %v1918, 0.0
    %vm2047 = vcmp.ge.f32.partialorder %v1919, 0.0
    %vm2048 = vcmp.ge.f32.partialorder %v1920, 0.0
    %vm2049 = vcmp.ge.f32.partialorder %v1921, 0.0
    %vm2050 = vcmp.ge.f32.partialorder %v1922, 0.0
    %vm2051 = vcmp.ge.f32.partialorder %v1923, 0.0
    %vm2052 = vcmp.ge.f32.partialorder %v1924, 0.0
    %vm2053 = vcmp.ge.f32.partialorder %v1925, 0.0
    %vm2054 = vcmp.ge.f32.partialorder %v1926, 0.0
    %vm2055 = vcmp.ge.f32.partialorder %v1927, 0.0
    %vm2056 = vcmp.ge.f32.partialorder %v1928, 0.0
    %vm2057 = vcmp.ge.f32.partialorder %v1929, 0.0
    %vm2058 = vcmp.ge.f32.partialorder %v1930, 0.0
    %vm2059 = vcmp.ge.f32.partialorder %v1931, 0.0
    %vm2060 = vcmp.ge.f32.partialorder %v1932, 0.0
    %vm2061 = vcmp.ge.f32.partialorder %v1933, 0.0
    %vm2062 = vcmp.ge.f32.partialorder %v1934, 0.0
    %vm2063 = vcmp.ge.f32.partialorder %v1935, 0.0
    %vm2064 = vcmp.ge.f32.partialorder %v1936, 0.0
    %vm2065 = vcmp.ge.f32.partialorder %v1937, 0.0
    %v2066 = vmul.f32 %v1810, 0.2
    %v2067 = vmul.f32 %v1811, 0.2
    %v2068 = vmul.f32 %v1812, 0.2
    %v2069 = vmul.f32 %v1813, 0.2
    %v2070 = vmul.f32 %v1814, 0.2
    %v2071 = vmul.f32 %v1815, 0.2
    %v2072 = vmul.f32 %v1816, 0.2
    %v2073 = vmul.f32 %v1817, 0.2
    %v2074 = vmul.f32 %v1818, 0.2
    %v2075 = vmul.f32 %v1819, 0.2
    %v2076 = vmul.f32 %v1820, 0.2
    %v2077 = vmul.f32 %v1821, 0.2
    %v2078 = vmul.f32 %v1822, 0.2
    %v2079 = vmul.f32 %v1823, 0.2
    %v2080 = vmul.f32 %v1824, 0.2
    %v2081 = vmul.f32 %v1825, 0.2
    %v2082 = vmul.f32 %v1826, 0.2
    %v2083 = vmul.f32 %v1827, 0.2
    %v2084 = vmul.f32 %v1828, 0.2
    %v2085 = vmul.f32 %v1829, 0.2
    %v2086 = vmul.f32 %v1830, 0.2
    %v2087 = vmul.f32 %v1831, 0.2
    %v2088 = vmul.f32 %v1832, 0.2
    %v2089 = vmul.f32 %v1833, 0.2
    %v2090 = vmul.f32 %v1834, 0.2
    %v2091 = vmul.f32 %v1835, 0.2
    %v2092 = vmul.f32 %v1836, 0.2
    %v2093 = vmul.f32 %v1837, 0.2
    %v2094 = vmul.f32 %v1838, 0.2
    %v2095 = vmul.f32 %v1839, 0.2
    %v2096 = vmul.f32 %v1840, 0.2
    %v2097 = vmul.f32 %v1841, 0.2
    %v2098 = vmul.f32 %v1842, 0.2
    %v2099 = vmul.f32 %v1843, 0.2
    %v2100 = vmul.f32 %v1844, 0.2
    %v2101 = vmul.f32 %v1845, 0.2
    %v2102 = vmul.f32 %v1846, 0.2
    %v2103 = vmul.f32 %v1847, 0.2
    %v2104 = vmul.f32 %v1848, 0.2
    %v2105 = vmul.f32 %v1849, 0.2
    %v2106 = vmul.f32 %v1850, 0.2
    %v2107 = vmul.f32 %v1851, 0.2
    %v2108 = vmul.f32 %v1852, 0.2
    %v2109 = vmul.f32 %v1853, 0.2
    %v2110 = vmul.f32 %v1854, 0.2
    %v2111 = vmul.f32 %v1855, 0.2
    %v2112 = vmul.f32 %v1856, 0.2
    %v2113 = vmul.f32 %v1857, 0.2
    %v2114 = vmul.f32 %v1858, 0.2
    %v2115 = vmul.f32 %v1859, 0.2
    %v2116 = vmul.f32 %v1860, 0.2
    %v2117 = vmul.f32 %v1861, 0.2
    %v2118 = vmul.f32 %v1862, 0.2
    %v2119 = vmul.f32 %v1863, 0.2
    %v2120 = vmul.f32 %v1864, 0.2
    %v2121 = vmul.f32 %v1865, 0.2
    %v2122 = vmul.f32 %v1866, 0.2
    %v2123 = vmul.f32 %v1867, 0.2
    %v2124 = vmul.f32 %v1868, 0.2
    %v2125 = vmul.f32 %v1869, 0.2
    %v2126 = vmul.f32 %v1870, 0.2
    %v2127 = vmul.f32 %v1871, 0.2
    %v2128 = vmul.f32 %v1872, 0.2
    %v2129 = vmul.f32 %v1873, 0.2
    %v2130 = vmul.f32 %v1874, 0.2
    %v2131 = vmul.f32 %v1875, 0.2
    %v2132 = vmul.f32 %v1876, 0.2
    %v2133 = vmul.f32 %v1877, 0.2
    %v2134 = vmul.f32 %v1878, 0.2
    %v2135 = vmul.f32 %v1879, 0.2
    %v2136 = vmul.f32 %v1880, 0.2
    %v2137 = vmul.f32 %v1881, 0.2
    %v2138 = vmul.f32 %v1882, 0.2
    %v2139 = vmul.f32 %v1883, 0.2
    %v2140 = vmul.f32 %v1884, 0.2
    %v2141 = vmul.f32 %v1885, 0.2
    %v2142 = vmul.f32 %v1886, 0.2
    %v2143 = vmul.f32 %v1887, 0.2
    %v2144 = vmul.f32 %v1888, 0.2
    %v2145 = vmul.f32 %v1889, 0.2
    %v2146 = vmul.f32 %v1890, 0.2
    %v2147 = vmul.f32 %v1891, 0.2
    %v2148 = vmul.f32 %v1892, 0.2
    %v2149 = vmul.f32 %v1893, 0.2
    %v2150 = vmul.f32 %v1894, 0.2
    %v2151 = vmul.f32 %v1895, 0.2
    %v2152 = vmul.f32 %v1896, 0.2
    %v2153 = vmul.f32 %v1897, 0.2
    %v2154 = vmul.f32 %v1898, 0.2
    %v2155 = vmul.f32 %v1899, 0.2
    %v2156 = vmul.f32 %v1900, 0.2
    %v2157 = vmul.f32 %v1901, 0.2
    %v2158 = vmul.f32 %v1902, 0.2
    %v2159 = vmul.f32 %v1903, 0.2
    %v2160 = vmul.f32 %v1904, 0.2
    %v2161 = vmul.f32 %v1905, 0.2
    %v2162 = vmul.f32 %v1906, 0.2
    %v2163 = vmul.f32 %v1907, 0.2
    %v2164 = vmul.f32 %v1908, 0.2
    %v2165 = vmul.f32 %v1909, 0.2
    %v2166 = vmul.f32 %v1910, 0.2
    %v2167 = vmul.f32 %v1911, 0.2
    %v2168 = vmul.f32 %v1912, 0.2
    %v2169 = vmul.f32 %v1913, 0.2
    %v2170 = vmul.f32 %v1914, 0.2
    %v2171 = vmul.f32 %v1915, 0.2
    %v2172 = vmul.f32 %v1916, 0.2
    %v2173 = vmul.f32 %v1917, 0.2
    %v2174 = vmul.f32 %v1918, 0.2
    %v2175 = vmul.f32 %v1919, 0.2
    %v2176 = vmul.f32 %v1920, 0.2
    %v2177 = vmul.f32 %v1921, 0.2
    %v2178 = vmul.f32 %v1922, 0.2
    %v2179 = vmul.f32 %v1923, 0.2
    %v2180 = vmul.f32 %v1924, 0.2
    %v2181 = vmul.f32 %v1925, 0.2
    %v2182 = vmul.f32 %v1926, 0.2
    %v2183 = vmul.f32 %v1927, 0.2
    %v2184 = vmul.f32 %v1928, 0.2
    %v2185 = vmul.f32 %v1929, 0.2
    %v2186 = vmul.f32 %v1930, 0.2
    %v2187 = vmul.f32 %v1931, 0.2
    %v2188 = vmul.f32 %v1932, 0.2
    %v2189 = vmul.f32 %v1933, 0.2
    %v2190 = vmul.f32 %v1934, 0.2
    %v2191 = vmul.f32 %v1935, 0.2
    %v2192 = vmul.f32 %v1936, 0.2
    %v2193 = vmul.f32 %v1937, 0.2
    %v2194 = vsel %vm1938, %v1810, %v2066
    %v2195 = vsel %vm1939, %v1811, %v2067
    %v2196 = vsel %vm1940, %v1812, %v2068
    %v2197 = vsel %vm1941, %v1813, %v2069
    %v2198 = vsel %vm1942, %v1814, %v2070
    %v2199 = vsel %vm1943, %v1815, %v2071
    %v2200 = vsel %vm1944, %v1816, %v2072
    %v2201 = vsel %vm1945, %v1817, %v2073
    %v2202 = vsel %vm1946, %v1818, %v2074
    %v2203 = vsel %vm1947, %v1819, %v2075
    %v2204 = vsel %vm1948, %v1820, %v2076
    %v2205 = vsel %vm1949, %v1821, %v2077
    %v2206 = vsel %vm1950, %v1822, %v2078
    %v2207 = vsel %vm1951, %v1823, %v2079
    %v2208 = vsel %vm1952, %v1824, %v2080
    %v2209 = vsel %vm1953, %v1825, %v2081
    %v2210 = vsel %vm1954, %v1826, %v2082
    %v2211 = vsel %vm1955, %v1827, %v2083
    %v2212 = vsel %vm1956, %v1828, %v2084
    %v2213 = vsel %vm1957, %v1829, %v2085
    %v2214 = vsel %vm1958, %v1830, %v2086
    %v2215 = vsel %vm1959, %v1831, %v2087
    %v2216 = vsel %vm1960, %v1832, %v2088
    %v2217 = vsel %vm1961, %v1833, %v2089
    %v2218 = vsel %vm1962, %v1834, %v2090
    %v2219 = vsel %vm1963, %v1835, %v2091
    %v2220 = vsel %vm1964, %v1836, %v2092
    %v2221 = vsel %vm1965, %v1837, %v2093
    %v2222 = vsel %vm1966, %v1838, %v2094
    %v2223 = vsel %vm1967, %v1839, %v2095
    %v2224 = vsel %vm1968, %v1840, %v2096
    %v2225 = vsel %vm1969, %v1841, %v2097
    %v2226 = vsel %vm1970, %v1842, %v2098
    %v2227 = vsel %vm1971, %v1843, %v2099
    %v2228 = vsel %vm1972, %v1844, %v2100
    %v2229 = vsel %vm1973, %v1845, %v2101
    %v2230 = vsel %vm1974, %v1846, %v2102
    %v2231 = vsel %vm1975, %v1847, %v2103
    %v2232 = vsel %vm1976, %v1848, %v2104
    %v2233 = vsel %vm1977, %v1849, %v2105
    %v2234 = vsel %vm1978, %v1850, %v2106
    %v2235 = vsel %vm1979, %v1851, %v2107
    %v2236 = vsel %vm1980, %v1852, %v2108
    %v2237 = vsel %vm1981, %v1853, %v2109
    %v2238 = vsel %vm1982, %v1854, %v2110
    %v2239 = vsel %vm1983, %v1855, %v2111
    %v2240 = vsel %vm1984, %v1856, %v2112
    %v2241 = vsel %vm1985, %v1857, %v2113
    %v2242 = vsel %vm1986, %v1858, %v2114
    %v2243 = vsel %vm1987, %v1859, %v2115
    %v2244 = vsel %vm1988, %v1860, %v2116
    %v2245 = vsel %vm1989, %v1861, %v2117
    %v2246 = vsel %vm1990, %v1862, %v2118
    %v2247 = vsel %vm1991, %v1863, %v2119
    %v2248 = vsel %vm1992, %v1864, %v2120
    %v2249 = vsel %vm1993, %v1865, %v2121
    %v2250 = vsel %vm1994, %v1866, %v2122
    %v2251 = vsel %vm1995, %v1867, %v2123
    %v2252 = vsel %vm1996, %v1868, %v2124
    %v2253 = vsel %vm1997, %v1869, %v2125
    %v2254 = vsel %vm1998, %v1870, %v2126
    %v2255 = vsel %vm1999, %v1871, %v2127
    %v2256 = vsel %vm2000, %v1872, %v2128
    %v2257 = vsel %vm2001, %v1873, %v2129
    %v2258 = vsel %vm2002, %v1874, %v2130
    %v2259 = vsel %vm2003, %v1875, %v2131
    %v2260 = vsel %vm2004, %v1876, %v2132
    %v2261 = vsel %vm2005, %v1877, %v2133
    %v2262 = vsel %vm2006, %v1878, %v2134
    %v2263 = vsel %vm2007, %v1879, %v2135
    %v2264 = vsel %vm2008, %v1880, %v2136
    %v2265 = vsel %vm2009, %v1881, %v2137
    %v2266 = vsel %vm2010, %v1882, %v2138
    %v2267 = vsel %vm2011, %v1883, %v2139
    %v2268 = vsel %vm2012, %v1884, %v2140
    %v2269 = vsel %vm2013, %v1885, %v2141
    %v2270 = vsel %vm2014, %v1886, %v2142
    %v2271 = vsel %vm2015, %v1887, %v2143
    %v2272 = vsel %vm2016, %v1888, %v2144
    %v2273 = vsel %vm2017, %v1889, %v2145
    %v2274 = vsel %vm2018, %v1890, %v2146
    %v2275 = vsel %vm2019, %v1891, %v2147
    %v2276 = vsel %vm2020, %v1892, %v2148
    %v2277 = vsel %vm2021, %v1893, %v2149
    %v2278 = vsel %vm2022, %v1894, %v2150
    %v2279 = vsel %vm2023, %v1895, %v2151
    %v2280 = vsel %vm2024, %v1896, %v2152
    %v2281 = vsel %vm2025, %v1897, %v2153
    %v2282 = vsel %vm2026, %v1898, %v2154
    %v2283 = vsel %vm2027, %v1899, %v2155
    %v2284 = vsel %vm2028, %v1900, %v2156
    %v2285 = vsel %vm2029, %v1901, %v2157
    %v2286 = vsel %vm2030, %v1902, %v2158
    %v2287 = vsel %vm2031, %v1903, %v2159
    %v2288 = vsel %vm2032, %v1904, %v2160
    %v2289 = vsel %vm2033, %v1905, %v2161
    %v2290 = vsel %vm2034, %v1906, %v2162
    %v2291 = vsel %vm2035, %v1907, %v2163
    %v2292 = vsel %vm2036, %v1908, %v2164
    %v2293 = vsel %vm2037, %v1909, %v2165
    %v2294 = vsel %vm2038, %v1910, %v2166
    %v2295 = vsel %vm2039, %v1911, %v2167
    %v2296 = vsel %vm2040, %v1912, %v2168
    %v2297 = vsel %vm2041, %v1913, %v2169
    %v2298 = vsel %vm2042, %v1914, %v2170
    %v2299 = vsel %vm2043, %v1915, %v2171
    %v2300 = vsel %vm2044, %v1916, %v2172
    %v2301 = vsel %vm2045, %v1917, %v2173
    %v2302 = vsel %vm2046, %v1918, %v2174
    %v2303 = vsel %vm2047, %v1919, %v2175
    %v2304 = vsel %vm2048, %v1920, %v2176
    %v2305 = vsel %vm2049, %v1921, %v2177
    %v2306 = vsel %vm2050, %v1922, %v2178
    %v2307 = vsel %vm2051, %v1923, %v2179
    %v2308 = vsel %vm2052, %v1924, %v2180
    %v2309 = vsel %vm2053, %v1925, %v2181
    %v2310 = vsel %vm2054, %v1926, %v2182
    %v2311 = vsel %vm2055, %v1927, %v2183
    %v2312 = vsel %vm2056, %v1928, %v2184
    %v2313 = vsel %vm2057, %v1929, %v2185
    %v2314 = vsel %vm2058, %v1930, %v2186
    %v2315 = vsel %vm2059, %v1931, %v2187
    %v2316 = vsel %vm2060, %v1932, %v2188
    %v2317 = vsel %vm2061, %v1933, %v2189
    %v2318 = vsel %vm2062, %v1934, %v2190
    %v2319 = vsel %vm2063, %v1935, %v2191
    %v2320 = vsel %vm2064, %v1936, %v2192
    %v2321 = vsel %vm2065, %v1937, %v2193
    %v2322 = vld [vmem:[%s0] sm:$0xff]
    %v2324 = vperm.slane %v2322, 0
    %v2325 = vperm.slane %v2322, 1
    %v2326 = vperm.slane %v2322, 2
    %v2327 = vperm.slane %v2322, 3
    %v2328 = vperm.slane %v2322, 4
    %v2329 = vperm.slane %v2322, 5
    %v2330 = vperm.slane %v2322, 6
    %v2331 = vperm.slane %v2322, 7
    %2340 = vmatpush.msra.mxu0 %v2209
    %2341 = vmatpush.msra.mxu0 %v2208
    %2342 = vmatpush.msra.mxu0 %v2207
    %2343 = vmatpush.msra.mxu0 %v2206
    %2344 = vmatpush.msra.mxu0 %v2205
    %2345 = vmatpush.msra.mxu0 %v2204
    %2346 = vmatpush.msra.mxu0 %v2203
    %2347 = vmatpush.msra.mxu0 %v2202
    %2348 = vmatpush.msra.mxu0 %v2201
    %2349 = vmatpush.msra.mxu0 %v2200
    %2350 = vmatpush.msra.mxu0 %v2199
    %2351 = vmatpush.msra.mxu0 %v2198
    %2352 = vmatpush.msra.mxu0 %v2197
    %2353 = vmatpush.msra.mxu0 %v2196
    %2354 = vmatpush.msra.mxu0 %v2195
    %2355 = vmatpush.msra.mxu0 %v2194
    %2356 = vmatmul.f32.gmra.mxu0 %v2324
    %v2357 = vpop.f32.mrf.mxu0
    %v2358 = vadd.f32 0.0, %v2357
    %2359 = vdwg.mxu0
    %2360 = vmatpush.msra.mxu0 %v2225
    %2361 = vmatpush.msra.mxu0 %v2224
    %2362 = vmatpush.msra.mxu0 %v2223
    %2363 = vmatpush.msra.mxu0 %v2222
    %2364 = vmatpush.msra.mxu0 %v2221
    %2365 = vmatpush.msra.mxu0 %v2220
    %2366 = vmatpush.msra.mxu0 %v2219
    %2367 = vmatpush.msra.mxu0 %v2218
    %2368 = vmatpush.msra.mxu0 %v2217
    %2369 = vmatpush.msra.mxu0 %v2216
    %2370 = vmatpush.msra.mxu0 %v2215
    %2371 = vmatpush.msra.mxu0 %v2214
    %2372 = vmatpush.msra.mxu0 %v2213
    %2373 = vmatpush.msra.mxu0 %v2212
    %2374 = vmatpush.msra.mxu0 %v2211
    %2375 = vmatpush.msra.mxu0 %v2210
    %2376 = vmatmul.f32.gmra.mxu0 %v2325
    %v2377 = vpop.f32.mrf.mxu0
    %v2378 = vadd.f32 %v2358, %v2377
    %2379 = vdwg.mxu0
    %2380 = vmatpush.msra.mxu0 %v2241
    %2381 = vmatpush.msra.mxu0 %v2240
    %2382 = vmatpush.msra.mxu0 %v2239
    %2383 = vmatpush.msra.mxu0 %v2238
    %2384 = vmatpush.msra.mxu0 %v2237
    %2385 = vmatpush.msra.mxu0 %v2236
    %2386 = vmatpush.msra.mxu0 %v2235
    %2387 = vmatpush.msra.mxu0 %v2234
    %2388 = vmatpush.msra.mxu0 %v2233
    %2389 = vmatpush.msra.mxu0 %v2232
    %2390 = vmatpush.msra.mxu0 %v2231
    %2391 = vmatpush.msra.mxu0 %v2230
    %2392 = vmatpush.msra.mxu0 %v2229
    %2393 = vmatpush.msra.mxu0 %v2228
    %2394 = vmatpush.msra.mxu0 %v2227
    %2395 = vmatpush.msra.mxu0 %v2226
    %2396 = vmatmul.f32.gmra.mxu0 %v2326
    %v2397 = vpop.f32.mrf.mxu0
    %v2398 = vadd.f32 %v2378, %v2397
    %2399 = vdwg.mxu0
    %2400 = vmatpush.msra.mxu0 %v2257
    %2401 = vmatpush.msra.mxu0 %v2256
    %2402 = vmatpush.msra.mxu0 %v2255
    %2403 = vmatpush.msra.mxu0 %v2254
    %2404 = vmatpush.msra.mxu0 %v2253
    %2405 = vmatpush.msra.mxu0 %v2252
    %2406 = vmatpush.msra.mxu0 %v2251
    %2407 = vmatpush.msra.mxu0 %v2250
    %2408 = vmatpush.msra.mxu0 %v2249
    %2409 = vmatpush.msra.mxu0 %v2248
    %2410 = vmatpush.msra.mxu0 %v2247
    %2411 = vmatpush.msra.mxu0 %v2246
    %2412 = vmatpush.msra.mxu0 %v2245
    %2413 = vmatpush.msra.mxu0 %v2244
    %2414 = vmatpush.msra.mxu0 %v2243
    %2415 = vmatpush.msra.mxu0 %v2242
    %2416 = vmatmul.f32.gmra.mxu0 %v2327
    %v2417 = vpop.f32.mrf.mxu0
    %v2418 = vadd.f32 %v2398, %v2417
    %2419 = vdwg.mxu0
    %2420 = vmatpush.msra.mxu0 %v2273
    %2421 = vmatpush.msra.mxu0 %v2272
    %2422 = vmatpush.msra.mxu0 %v2271
    %2423 = vmatpush.msra.mxu0 %v2270
    %2424 = vmatpush.msra.mxu0 %v2269
    %2425 = vmatpush.msra.mxu0 %v2268
    %2426 = vmatpush.msra.mxu0 %v2267
    %2427 = vmatpush.msra.mxu0 %v2266
    %2428 = vmatpush.msra.mxu0 %v2265
    %2429 = vmatpush.msra.mxu0 %v2264
    %2430 = vmatpush.msra.mxu0 %v2263
    %2431 = vmatpush.msra.mxu0 %v2262
    %2432 = vmatpush.msra.mxu0 %v2261
    %2433 = vmatpush.msra.mxu0 %v2260
    %2434 = vmatpush.msra.mxu0 %v2259
    %2435 = vmatpush.msra.mxu0 %v2258
    %2436 = vmatmul.f32.gmra.mxu0 %v2328
    %v2437 = vpop.f32.mrf.mxu0
    %v2438 = vadd.f32 %v2418, %v2437
    %2439 = vdwg.mxu0
    %2440 = vmatpush.msra.mxu0 %v2289
    %2441 = vmatpush.msra.mxu0 %v2288
    %2442 = vmatpush.msra.mxu0 %v2287
    %2443 = vmatpush.msra.mxu0 %v2286
    %2444 = vmatpush.msra.mxu0 %v2285
    %2445 = vmatpush.msra.mxu0 %v2284
    %2446 = vmatpush.msra.mxu0 %v2283
    %2447 = vmatpush.msra.mxu0 %v2282
    %2448 = vmatpush.msra.mxu0 %v2281
    %2449 = vmatpush.msra.mxu0 %v2280
    %2450 = vmatpush.msra.mxu0 %v2279
    %2451 = vmatpush.msra.mxu0 %v2278
    %2452 = vmatpush.msra.mxu0 %v2277
    %2453 = vmatpush.msra.mxu0 %v2276
    %2454 = vmatpush.msra.mxu0 %v2275
    %2455 = vmatpush.msra.mxu0 %v2274
    %2456 = vmatmul.f32.gmra.mxu0 %v2329
    %v2457 = vpop.f32.mrf.mxu0
    %v2458 = vadd.f32 %v2438, %v2457
    %2459 = vdwg.mxu0
    %2460 = vmatpush.msra.mxu0 %v2305
    %2461 = vmatpush.msra.mxu0 %v2304
    %2462 = vmatpush.msra.mxu0 %v2303
    %2463 = vmatpush.msra.mxu0 %v2302
    %2464 = vmatpush.msra.mxu0 %v2301
    %2465 = vmatpush.msra.mxu0 %v2300
    %2466 = vmatpush.msra.mxu0 %v2299
    %2467 = vmatpush.msra.mxu0 %v2298
    %2468 = vmatpush.msra.mxu0 %v2297
    %2469 = vmatpush.msra.mxu0 %v2296
    %2470 = vmatpush.msra.mxu0 %v2295
    %2471 = vmatpush.msra.mxu0 %v2294
    %2472 = vmatpush.msra.mxu0 %v2293
    %2473 = vmatpush.msra.mxu0 %v2292
    %2474 = vmatpush.msra.mxu0 %v2291
    %2475 = vmatpush.msra.mxu0 %v2290
    %2476 = vmatmul.f32.gmra.mxu0 %v2330
    %v2477 = vpop.f32.mrf.mxu0
    %v2478 = vadd.f32 %v2458, %v2477
    %2479 = vdwg.mxu0
    %2480 = vmatpush.msra.mxu0 %v2321
    %2481 = vmatpush.msra.mxu0 %v2320
    %2482 = vmatpush.msra.mxu0 %v2319
    %2483 = vmatpush.msra.mxu0 %v2318
    %2484 = vmatpush.msra.mxu0 %v2317
    %2485 = vmatpush.msra.mxu0 %v2316
    %2486 = vmatpush.msra.mxu0 %v2315
    %2487 = vmatpush.msra.mxu0 %v2314
    %2488 = vmatpush.msra.mxu0 %v2313
    %2489 = vmatpush.msra.mxu0 %v2312
    %2490 = vmatpush.msra.mxu0 %v2311
    %2491 = vmatpush.msra.mxu0 %v2310
    %2492 = vmatpush.msra.mxu0 %v2309
    %2493 = vmatpush.msra.mxu0 %v2308
    %2494 = vmatpush.msra.mxu0 %v2307
    %2495 = vmatpush.msra.mxu0 %v2306
    %2496 = vmatmul.f32.gmra.mxu0 %v2331
    %v2497 = vpop.f32.mrf.mxu0
    %v2498 = vadd.f32 %v2478, %v2497
    %2499 = vdwg.mxu0
    %v2500 = vand.u32 2147483647, %v2498
    %v2501 = vsub.f32 0.0, %v2500
    %v2502 = vmul.f32 %v2501, 1.442695
    %v2503 = vpow.pop %v2502
    %vm2504 = vcmp.ge.f32.partialorder %v2498, 0.0
    %v2505 = vsel %vm2504, 1.0, %v2503
    %v2506 = vadd.f32 %v2503, 1.0
    %v2507 = vrcp.pop %v2506
    %v2508 = vmul.f32 %v2505, %v2507
    %vm2509 = vcmask 8192
    %2510 = vst.msk [vmem:[#allocation2] sm:$0x1] %vm2509, %v2508
    // Predicated region
    $region18: #{discriminator_forward.9} parent=1 // pred_check
      _
    $region19: #{discriminator_forward.9} parent=1 // pred_check_branch
      %2512 = sbr.rel (0) target = $region21
    $region20: #{discriminator_forward.9} parent=1 // pred_region
      %2514 = vsyncadd [#allocation3], 0
      %s2516 = sshll.u32 [#allocation2], 4
      %s2517 = int_to_ptr.vmem [resolvable:$true] %s2516
      %s2518 = sshll.u32 %s4, 4
      %s2519 = int_to_ptr.hbm [resolvable:$true] %s2518
      %2521 = dma.vmem_to_hbm [thread:$0]  %s2517, 16, %s2519, [#allocation3]
    $region21: #{discriminator_forward.9} parent=1 // pred_fallthru
      _
    // Predicated region
    $region22: #{discriminator_forward.9} parent=1 // pred_check
      _
    $region23: #{discriminator_forward.9} parent=1 // pred_check_branch
      %2523 = sbr.rel (0) target = $region25
    $region24: #{discriminator_forward.9} parent=1 // pred_region
      %2525 = dma.done [#allocation3], 16
    $region25: #{discriminator_forward.9} parent=1 // pred_fallthru
      _
    %2526 = vsyncpa [#allocation3], 1

</llo_original>
